<compile_context>
chip_gen: v5e
topology: v5e:2x2
jax: 0.10.0
libtpu: 0.0.40
codegen_flags: <defaults>
</compile_context>

<pallas_src>
import functools

import jax
import jax.numpy as jnp
from jax.experimental import pallas as pl
from jax.experimental.pallas import tpu as pltpu

# ----------------------------- config (small) --------------------------------
CONV_DIMS = (32, 32, 32)
CONV_KERNELS = (10, 3, 3)
CONV_STRIDES = (5, 2, 2)
HIDDEN = 32
NUM_HEADS = 4
INTERMEDIATE = 64
NUM_LAYERS = 2
NUM_LABELS = 5
LN_EPS = 1e-5

# Row offsets of the packed global-matrix slab (all 8-sublane aligned).
_W0A, _W0B = 0, 8                 # conv0 taps (5 rows each, padded to 8)
_W1, _W2 = 16, 112                # conv1 / conv2: 3 x (32, 32)
_FPW = 208                        # feature-projection Linear (32, 32)
_POSW = 240                       # positional conv: 3 x (32, 32)
_CLSW = 336                       # classifier (32, 32; lanes >= NUM_LABELS are 0)
_GMAT_ROWS = 368


def _gelu(x):
    # tanh-approx GELU (HF 'gelu' is erf-based; numerics differ negligibly).
    c = 0.7978845608028654
    return 0.5 * x * (1.0 + jnp.tanh(c * (x + 0.044715 * x * x * x)))


def _ln(x, g, b):
    mu = jnp.mean(x, axis=-1, keepdims=True)
    var = jnp.mean((x - mu) ** 2, axis=-1, keepdims=True)
    return (x - mu) * jax.lax.rsqrt(var + LN_EPS) * g + b


# ----------------------------- the fused kernel -------------------------------
def _fused_kernel(x_ref, gmat_ref, gvec_ref, wqkv_ref, wo_ref, wff1_ref,
                  wff2_ref, lvec_ref, o_ref, ctx_ref, *, t0, t1, t2):
    f32 = jnp.float32
    H = HIDDEN
    I = INTERMEDIATE
    d = H // NUM_HEADS
    gm = gmat_ref

    # ---- conv0 (K=10, stride=5): 2 contiguous-row taps of the (T0+1, 5) audio ----
    x5 = x_ref[0]                                               # (t0+1, 5)
    y0 = jnp.dot(x5[0:t0], gm[_W0A:_W0A + 5], preferred_element_type=f32)
    y0 = y0 + jnp.dot(x5[1:t0 + 1], gm[_W0B:_W0B + 5], preferred_element_type=f32)

    # GroupNorm(num_groups=C): per-channel stats over time, affine, then GELU.
    mu = jnp.mean(y0, axis=0, keepdims=True)
    var = jnp.mean((y0 - mu) ** 2, axis=0, keepdims=True)
    h0 = _gelu((y0 - mu) * jax.lax.rsqrt(var + LN_EPS)
               * gvec_ref[0:1] + gvec_ref[1:2])                 # (t0, H)

    # ---- conv1 / conv2 (K=3, stride=2): in-kernel im2col via 0/1 selection
    #      matmuls (rows 2t+k of the input), all data stays in VMEM/vregs ----
    def strided_conv(h_in, t_in, t_out, w_row0):
        r = jax.lax.broadcasted_iota(jnp.int32, (t_out, t_in), 0)
        c = jax.lax.broadcasted_iota(jnp.int32, (t_out, t_in), 1)
        diff = c - 2 * r
        y = jnp.zeros((t_out, H), f32)
        for k in range(3):
            sel = (diff == k).astype(f32)                       # (t_out, t_in)
            tap = jnp.dot(sel, h_in, preferred_element_type=f32)
            y = y + jnp.dot(tap, gm[w_row0 + k * H: w_row0 + (k + 1) * H],
                            preferred_element_type=f32)
        return y

    h1 = _gelu(strided_conv(h0, t0, t1, _W1))                   # (t1, H)
    h2 = _gelu(strided_conv(h1, t1, t2, _W2))                   # (t2, H)

    # ---- feature projection: LayerNorm + Linear ----
    h = _ln(h2, gvec_ref[2:3], gvec_ref[3:4])
    h = jnp.dot(h, gm[_FPW:_FPW + H], preferred_element_type=f32) + gvec_ref[4:5]

    # ---- positional conv embedding (K=3, same-pad) + GELU + residual + LN ----
    r = jax.lax.broadcasted_iota(jnp.int32, (t2, t2), 0)
    c = jax.lax.broadcasted_iota(jnp.int32, (t2, t2), 1)
    pos = jnp.dot(h, gm[_POSW + H:_POSW + 2 * H], preferred_element_type=f32)
    for k in (0, 2):                                            # off-center taps
        sel = (c == r + (k - 1)).astype(f32)                    # (t2, t2) shift
        shifted = jnp.dot(sel, h, preferred_element_type=f32)
        pos = pos + jnp.dot(shifted, gm[_POSW + k * H:_POSW + (k + 1) * H],
                            preferred_element_type=f32)
    h = _ln(h + _gelu(pos + gvec_ref[5:6]), gvec_ref[6:7], gvec_ref[7:8])

    # ---- transformer encoder layers (post-norm), head-major fused QKV ----
    for l in range(NUM_LAYERS):
        lv = lvec_ref[l]                                        # (8, 3H)
        qkv = jnp.dot(h, wqkv_ref[l], preferred_element_type=f32) + lv[0:1]
        for hd in range(NUM_HEADS):
            base = hd * 3 * d
            qh = qkv[:, base:base + d]                          # pre-scaled q
            kh = qkv[:, base + d:base + 2 * d]
            vh = qkv[:, base + 2 * d:base + 3 * d]
            s = jax.lax.dot_general(qh, kh, (((1,), (1,)), ((), ())),
                                    preferred_element_type=f32)  # (t2, t2)
            s = s - jnp.max(s, axis=-1, keepdims=True)
            p = jnp.exp(s)
            p = p * pl.reciprocal(jnp.sum(p, axis=-1, keepdims=True), approx=True)
            ctx_ref[:, hd * d:(hd + 1) * d] = jnp.dot(p, vh,
                                                      preferred_element_type=f32)
        attn = (jnp.dot(ctx_ref[...], wo_ref[l], preferred_element_type=f32)
                + lv[1:2, :H])
        h = _ln(h + attn, lv[2:3, :H], lv[3:4, :H])
        ff = _gelu(jnp.dot(h, wff1_ref[l], preferred_element_type=f32)
                   + lv[4:5, :I])
        ff = jnp.dot(ff, wff2_ref[l], preferred_element_type=f32) + lv[5:6, :H]
        h = _ln(h + ff, lv[6:7, :H], lv[7:8, :H])

    # ---- mean pool over time + classifier ----
    pooled = jnp.mean(h, axis=0, keepdims=True)                 # (1, H)
    logits = (jnp.dot(pooled, gm[_CLSW:_CLSW + H], preferred_element_type=f32)
              + gvec_ref[8:9])
    o_ref[0] = logits[:, :NUM_LABELS].astype(o_ref.dtype)


# ----------------------------- wrapper ----------------------------------------
def hubert_classify(pp, x):
    # x: (B, S) raw audio float32; pp: packed params (see pack_params).
    B, S = x.shape
    s0 = CONV_STRIDES[0]
    assert S % s0 == 0
    t0 = (S - CONV_KERNELS[0]) // s0 + 1
    t1 = (t0 - CONV_KERNELS[1]) // CONV_STRIDES[1] + 1
    t2 = (t1 - CONV_KERNELS[2]) // CONV_STRIDES[2] + 1
    assert t0 == S // s0 - 1

    x5 = x.reshape(B, S // s0, s0).astype(jnp.float32)   # free reshape of raw input

    H, I, L, NL = HIDDEN, INTERMEDIATE, NUM_LAYERS, NUM_LABELS

    def fixed(shape):
        zeros = (0,) * len(shape)
        return pl.BlockSpec(shape, lambda b, zeros=zeros: zeros)

    kernel = functools.partial(_fused_kernel, t0=t0, t1=t1, t2=t2)
    out = pl.pallas_call(
        kernel,
        out_shape=jax.ShapeDtypeStruct((B, 1, NL), jnp.float32),
        grid=(B,),
        in_specs=[pl.BlockSpec((1, S // s0, s0), lambda b: (b, 0, 0)),
                  fixed((_GMAT_ROWS, H)),
                  fixed((9, H)),
                  fixed((L, H, 3 * H)),
                  fixed((L, H, H)),
                  fixed((L, H, I)),
                  fixed((L, I, H)),
                  fixed((L, 8, 3 * H))],
        out_specs=pl.BlockSpec((1, 1, NL), lambda b: (b, 0, 0)),
        scratch_shapes=[pltpu.VMEM((t2, H), jnp.float32)],
        compiler_params=pltpu.CompilerParams(dimension_semantics=("parallel",)),
    )(x5, pp["gmat"], pp["gvec"], pp["wqkv"], pp["wo"],
      pp["wff1"], pp["wff2"], pp["lvec"])
    return out.reshape(B, NL)


# ------------------------------ params ----------------------------------------
def init_params(key):
    state = {"key": key}

    def nxt():
        state["key"], sub = jax.random.split(state["key"])
        return sub

    def dense(din, dout):
        return (jax.random.normal(nxt(), (din, dout), jnp.float32) * 0.02,
                jnp.zeros((dout,), jnp.float32))

    params = {}
    conv_layers = []
    c_in = 1
    for i, (c_out, K) in enumerate(zip(CONV_DIMS, CONV_KERNELS)):
        w = jax.random.normal(nxt(), (K, c_in, c_out), jnp.float32) * 0.02
        layer = {"w": w.reshape(K * c_in, c_out)}
        if i == 0:
            layer["gn_g"] = jnp.ones((c_out,), jnp.float32)
            layer["gn_b"] = jnp.zeros((c_out,), jnp.float32)
        conv_layers.append(layer)
        c_in = c_out
    params["conv_layers"] = conv_layers

    params["fp_ln_g"] = jnp.ones((CONV_DIMS[-1],), jnp.float32)
    params["fp_ln_b"] = jnp.zeros((CONV_DIMS[-1],), jnp.float32)
    params["fp_w"], params["fp_b"] = dense(CONV_DIMS[-1], HIDDEN)

    pw = jax.random.normal(nxt(), (3, HIDDEN, HIDDEN), jnp.float32) * 0.02
    params["pos_w"] = pw.reshape(3 * HIDDEN, HIDDEN)
    params["pos_b"] = jnp.zeros((HIDDEN,), jnp.float32)
    params["enc_ln_g"] = jnp.ones((HIDDEN,), jnp.float32)
    params["enc_ln_b"] = jnp.zeros((HIDDEN,), jnp.float32)

    layers = []
    for _ in range(NUM_LAYERS):
        p = {}
        p["wq"], p["bq"] = dense(HIDDEN, HIDDEN)
        p["wk"], p["bk"] = dense(HIDDEN, HIDDEN)
        p["wv"], p["bv"] = dense(HIDDEN, HIDDEN)
        p["wo"], p["bo"] = dense(HIDDEN, HIDDEN)
        p["ln1_g"] = jnp.ones((HIDDEN,), jnp.float32)
        p["ln1_b"] = jnp.zeros((HIDDEN,), jnp.float32)
        p["w_ff1"], p["b_ff1"] = dense(HIDDEN, INTERMEDIATE)
        p["w_ff2"], p["b_ff2"] = dense(INTERMEDIATE, HIDDEN)
        p["ln2_g"] = jnp.ones((HIDDEN,), jnp.float32)
        p["ln2_b"] = jnp.zeros((HIDDEN,), jnp.float32)
        layers.append(p)
    params["layers"] = layers

    params["cls_w"], params["cls_b"] = dense(HIDDEN, NUM_LABELS)
    return params


def pack_params(p):
    """Pack weights into the fused-kernel layout.

    * One (368, 32) global matrix slab: conv0 taps (8-row aligned), conv1/conv2 tap
      weights, feature-projection Linear, positional-conv taps, classifier (lane-
      padded to 32).
    * One (9, 32) global vector slab: gn gamma/beta, fp LN gamma/beta, fp bias,
      pos bias, encoder LN gamma/beta, classifier bias (lane-padded).
    * Per-layer: head-major fused QKV (scale folded into q), wo, ffn weights, and
      one (L, 8, 3H) vector slab holding all per-layer biases / LN params.
    """
    H = HIDDEN
    nh = NUM_HEADS
    d = H // nh
    scale = d ** -0.5
    f32 = jnp.float32

    conv0_w = p["conv_layers"][0]["w"]                      # (10, 32)
    conv1_w = p["conv_layers"][1]["w"].reshape(3, H, H)     # (K, c_in, c_out)
    conv2_w = p["conv_layers"][2]["w"].reshape(3, H, H)
    pos_w = p["pos_w"].reshape(3, H, H)
    pad3 = jnp.zeros((3, H), f32)
    cls_w_pad = jnp.pad(p["cls_w"], ((0, 0), (0, H - NUM_LABELS)))

    gmat = jnp.concatenate([
        conv0_w[0:5], pad3,                                  # rows   0.. 16
        conv0_w[5:10], pad3,
        conv1_w[0], conv1_w[1], conv1_w[2],                  # rows  16..112
        conv2_w[0], conv2_w[1], conv2_w[2],                  # rows 112..208
        p["fp_w"],                                           # rows 208..240
        pos_w[0], pos_w[1], pos_w[2],                        # rows 240..336
        cls_w_pad,                                           # rows 336..368
    ], axis=0)
    assert gmat.shape == (_GMAT_ROWS, H)

    gvec = jnp.stack([
        p["conv_layers"][0]["gn_g"], p["conv_layers"][0]["gn_b"],
        p["fp_ln_g"], p["fp_ln_b"], p["fp_b"],
        p["pos_b"], p["enc_ln_g"], p["enc_ln_b"],
        jnp.pad(p["cls_b"], (0, H - NUM_LABELS)),
    ], axis=0)                                               # (9, 32)

    wqkv_l, wo_l, wff1_l, wff2_l, lvec_l = [], [], [], [], []
    for lp in p["layers"]:
        wq, wk, wv = lp["wq"] * scale, lp["wk"], lp["wv"]
        bq, bk, bv = lp["bq"] * scale, lp["bk"], lp["bv"]
        cols, bcols = [], []
        for hd in range(nh):                                 # head-major packing
            sl = slice(hd * d, (hd + 1) * d)
            cols += [wq[:, sl], wk[:, sl], wv[:, sl]]
            bcols += [bq[sl], bk[sl], bv[sl]]
        wqkv_l.append(jnp.concatenate(cols, axis=1))         # (H, 3H)
        bqkv = jnp.concatenate(bcols)                        # (3H,)

        wo_l.append(lp["wo"])
        wff1_l.append(lp["w_ff1"])
        wff2_l.append(lp["w_ff2"])

        def padw(v):
            return jnp.pad(v, (0, 3 * H - v.shape[0]))
        lvec_l.append(jnp.stack([
            bqkv, padw(lp["bo"]), padw(lp["ln1_g"]), padw(lp["ln1_b"]),
            padw(lp["b_ff1"]), padw(lp["b_ff2"]),
            padw(lp["ln2_g"]), padw(lp["ln2_b"])], axis=0))  # (8, 3H)

    return {
        "gmat": gmat, "gvec": gvec,
        "wqkv": jnp.stack(wqkv_l), "wo": jnp.stack(wo_l),
        "wff1": jnp.stack(wff1_l), "wff2": jnp.stack(wff2_l),
        "lvec": jnp.stack(lvec_l),
    }


if __name__ == "__main__":
    key = jax.random.PRNGKey(0)
    pkey, xkey = jax.random.split(key)
    params = init_params(pkey)
    packed = pack_params(params)
    x = jax.random.normal(xkey, (2, 400), jnp.float32)   # (B, S) raw audio waveform
    logits = jax.jit(hubert_classify)(packed, x)
    jax.block_until_ready(logits)
    assert logits.shape == (2, NUM_LABELS)
    assert bool(jnp.all(jnp.isfinite(logits)))
    print("KERNEL_OK")
</pallas_src>

<mosaic_0001>
module attributes {stable_mosaic.version = 11 : i64} {
  func.func @_fused_kernel(%arg0: i32, %arg1: memref<1x80x5xf32, #tpu.memory_space<vmem>>, %arg2: memref<368x32xf32, #tpu.memory_space<vmem>>, %arg3: memref<9x32xf32, #tpu.memory_space<vmem>>, %arg4: memref<2x32x96xf32, #tpu.memory_space<vmem>>, %arg5: memref<2x32x32xf32, #tpu.memory_space<vmem>>, %arg6: memref<2x32x64xf32, #tpu.memory_space<vmem>>, %arg7: memref<2x64x32xf32, #tpu.memory_space<vmem>>, %arg8: memref<2x8x96xf32, #tpu.memory_space<vmem>>, %arg9: memref<1x1x5xf32, #tpu.memory_space<vmem>>, %arg10: memref<19x32xf32, #tpu.memory_space<vmem>>) attributes {dimension_semantics = [#tpu.dimension_semantics<parallel>], iteration_bounds = array<i64: 2>, scalar_prefetch = 0 : i64, scratch_operands = 1 : i64, tpu.core_type = #tpu.core_type<tc>, window_params = [{transform_indices = @transform_0, window_bounds = array<i64: 1, 80, 5>}, {pipeline_mode = #tpu.pipeline_mode<synchronous>, transform_indices = @transform_1, window_bounds = array<i64: 368, 32>}, {pipeline_mode = #tpu.pipeline_mode<synchronous>, transform_indices = @transform_2, window_bounds = array<i64: 9, 32>}, {pipeline_mode = #tpu.pipeline_mode<synchronous>, transform_indices = @transform_3, window_bounds = array<i64: 2, 32, 96>}, {pipeline_mode = #tpu.pipeline_mode<synchronous>, transform_indices = @transform_4, window_bounds = array<i64: 2, 32, 32>}, {pipeline_mode = #tpu.pipeline_mode<synchronous>, transform_indices = @transform_5, window_bounds = array<i64: 2, 32, 64>}, {pipeline_mode = #tpu.pipeline_mode<synchronous>, transform_indices = @transform_6, window_bounds = array<i64: 2, 64, 32>}, {pipeline_mode = #tpu.pipeline_mode<synchronous>, transform_indices = @transform_7, window_bounds = array<i64: 2, 8, 96>}, {transform_indices = @transform_8, window_bounds = array<i64: 1, 1, 5>}]} {
    %c0 = arith.constant 0 : index
    %c0_0 = arith.constant 0 : index
    %c0_1 = arith.constant 0 : index
    %0 = vector.load %arg1[%c0, %c0_0, %c0_1] : memref<1x80x5xf32, #tpu.memory_space<vmem>>, vector<1x80x5xf32>
    %1 = vector.shape_cast %0 : vector<1x80x5xf32> to vector<80x5xf32>
    %2 = vector.extract_strided_slice %1 {offsets = [0, 0], sizes = [79, 5], strides = [1, 1]} : vector<80x5xf32> to vector<79x5xf32>
    %c0_2 = arith.constant 0 : index
    %c0_3 = arith.constant 0 : index
    %3 = vector.load %arg2[%c0_2, %c0_3] : memref<368x32xf32, #tpu.memory_space<vmem>>, vector<5x32xf32>
    %cst = arith.constant dense<0.000000e+00> : vector<79x32xf32>
    %4 = tpu.matmul %2, %3, %cst {dimension_numbers = #tpu.dot_dimension_numbers<[1], [0], [0], [1], [0, 0, 1, 1], [], []>} : vector<79x5xf32>, vector<5x32xf32>, vector<79x32xf32> -> vector<79x32xf32>
    %5 = vector.extract_strided_slice %1 {offsets = [1, 0], sizes = [79, 5], strides = [1, 1]} : vector<80x5xf32> to vector<79x5xf32>
    %c8 = arith.constant 8 : index
    %c0_4 = arith.constant 0 : index
    %6 = vector.load %arg2[%c8, %c0_4] : memref<368x32xf32, #tpu.memory_space<vmem>>, vector<5x32xf32>
    %cst_5 = arith.constant dense<0.000000e+00> : vector<79x32xf32>
    %7 = tpu.matmul %5, %6, %cst_5 {dimension_numbers = #tpu.dot_dimension_numbers<[1], [0], [0], [1], [0, 0, 1, 1], [], []>} : vector<79x5xf32>, vector<5x32xf32>, vector<79x32xf32> -> vector<79x32xf32>
    %8 = arith.addf %4, %7 : vector<79x32xf32>
    %cst_6 = arith.constant dense<0.000000e+00> : vector<32xf32>
    %9 = vector.multi_reduction <add>, %8, %cst_6 [0] : vector<79x32xf32> to vector<32xf32>
    %10 = vector.shape_cast %9 : vector<32xf32> to vector<1x32xf32>
    %cst_7 = arith.constant 7.900000e+01 : f32
    %11 = vector.broadcast %cst_7 : f32 to vector<1x32xf32>
    %12 = arith.divf %10, %11 : vector<1x32xf32>
    %13 = vector.broadcast %12 : vector<1x32xf32> to vector<79x32xf32>
    %14 = arith.subf %8, %13 : vector<79x32xf32>
    %15 = arith.mulf %14, %14 : vector<79x32xf32>
    %cst_8 = arith.constant dense<0.000000e+00> : vector<32xf32>
    %16 = vector.multi_reduction <add>, %15, %cst_8 [0] : vector<79x32xf32> to vector<32xf32>
    %17 = vector.shape_cast %16 : vector<32xf32> to vector<1x32xf32>
    %cst_9 = arith.constant 7.900000e+01 : f32
    %18 = vector.broadcast %cst_9 : f32 to vector<1x32xf32>
    %19 = arith.divf %17, %18 : vector<1x32xf32>
    %20 = vector.broadcast %12 : vector<1x32xf32> to vector<79x32xf32>
    %21 = arith.subf %8, %20 : vector<79x32xf32>
    %cst_10 = arith.constant 9.99999974E-6 : f32
    %22 = vector.broadcast %cst_10 : f32 to vector<1x32xf32>
    %23 = arith.addf %19, %22 : vector<1x32xf32>
    %24 = math.rsqrt %23 : vector<1x32xf32>
    %25 = vector.broadcast %24 : vector<1x32xf32> to vector<79x32xf32>
    %26 = arith.mulf %21, %25 : vector<79x32xf32>
    %c0_11 = arith.constant 0 : index
    %c0_12 = arith.constant 0 : index
    %27 = vector.load %arg3[%c0_11, %c0_12] : memref<9x32xf32, #tpu.memory_space<vmem>>, vector<1x32xf32>
    %28 = vector.broadcast %27 : vector<1x32xf32> to vector<79x32xf32>
    %29 = arith.mulf %26, %28 : vector<79x32xf32>
    %c1 = arith.constant 1 : index
    %c0_13 = arith.constant 0 : index
    %30 = vector.load %arg3[%c1, %c0_13] : memref<9x32xf32, #tpu.memory_space<vmem>>, vector<1x32xf32>
    %31 = vector.broadcast %30 : vector<1x32xf32> to vector<79x32xf32>
    %32 = arith.addf %29, %31 : vector<79x32xf32>
    %cst_14 = arith.constant 5.000000e-01 : f32
    %33 = vector.broadcast %cst_14 : f32 to vector<79x32xf32>
    %34 = arith.mulf %33, %32 : vector<79x32xf32>
    %cst_15 = arith.constant 4.471500e-02 : f32
    %35 = vector.broadcast %cst_15 : f32 to vector<79x32xf32>
    %36 = arith.mulf %35, %32 : vector<79x32xf32>
    %37 = arith.mulf %36, %32 : vector<79x32xf32>
    %38 = arith.mulf %37, %32 : vector<79x32xf32>
    %39 = arith.addf %32, %38 : vector<79x32xf32>
    %cst_16 = arith.constant 0.797884583 : f32
    %40 = vector.broadcast %cst_16 : f32 to vector<79x32xf32>
    %41 = arith.mulf %40, %39 : vector<79x32xf32>
    %42 = math.tanh %41 : vector<79x32xf32>
    %cst_17 = arith.constant 1.000000e+00 : f32
    %43 = vector.broadcast %cst_17 : f32 to vector<79x32xf32>
    %44 = arith.addf %43, %42 : vector<79x32xf32>
    %45 = arith.mulf %34, %44 : vector<79x32xf32>
    %46 = tpu.iota {dimensions = array<i32: 0>} : vector<39x79xi32>
    %47 = tpu.iota {dimensions = array<i32: 1>} : vector<39x79xi32>
    %c2_i32 = arith.constant 2 : i32
    %48 = vector.broadcast %c2_i32 : i32 to vector<39x79xi32>
    %49 = arith.muli %48, %46 : vector<39x79xi32>
    %50 = arith.subi %47, %49 : vector<39x79xi32>
    %cst_18 = arith.constant 0.000000e+00 : f32
    %51 = vector.broadcast %cst_18 : f32 to vector<39x32xf32>
    %c0_i32 = arith.constant 0 : i32
    %52 = vector.broadcast %c0_i32 : i32 to vector<39x79xi32>
    %53 = arith.cmpi eq, %50, %52 : vector<39x79xi32>
    %54 = arith.extui %53 : vector<39x79xi1> to vector<39x79xi32>
    %55 = arith.sitofp %54 : vector<39x79xi32> to vector<39x79xf32>
    %cst_19 = arith.constant dense<0.000000e+00> : vector<39x32xf32>
    %56 = tpu.matmul %55, %45, %cst_19 {dimension_numbers = #tpu.dot_dimension_numbers<[1], [0], [0], [1], [0, 0, 1, 1], [], []>} : vector<39x79xf32>, vector<79x32xf32>, vector<39x32xf32> -> vector<39x32xf32>
    %c16 = arith.constant 16 : index
    %c0_20 = arith.constant 0 : index
    %57 = vector.load %arg2[%c16, %c0_20] : memref<368x32xf32, #tpu.memory_space<vmem>>, vector<32x32xf32>
    %cst_21 = arith.constant dense<0.000000e+00> : vector<39x32xf32>
    %58 = tpu.matmul %56, %57, %cst_21 {dimension_numbers = #tpu.dot_dimension_numbers<[1], [0], [0], [1], [0, 0, 1, 1], [], []>} : vector<39x32xf32>, vector<32x32xf32>, vector<39x32xf32> -> vector<39x32xf32>
    %59 = arith.addf %51, %58 : vector<39x32xf32>
    %c1_i32 = arith.constant 1 : i32
    %60 = vector.broadcast %c1_i32 : i32 to vector<39x79xi32>
    %61 = arith.cmpi eq, %50, %60 : vector<39x79xi32>
    %62 = arith.extui %61 : vector<39x79xi1> to vector<39x79xi32>
    %63 = arith.sitofp %62 : vector<39x79xi32> to vector<39x79xf32>
    %cst_22 = arith.constant dense<0.000000e+00> : vector<39x32xf32>
    %64 = tpu.matmul %63, %45, %cst_22 {dimension_numbers = #tpu.dot_dimension_numbers<[1], [0], [0], [1], [0, 0, 1, 1], [], []>} : vector<39x79xf32>, vector<79x32xf32>, vector<39x32xf32> -> vector<39x32xf32>
    %c48 = arith.constant 48 : index
    %c0_23 = arith.constant 0 : index
    %65 = vector.load %arg2[%c48, %c0_23] : memref<368x32xf32, #tpu.memory_space<vmem>>, vector<32x32xf32>
    %cst_24 = arith.constant dense<0.000000e+00> : vector<39x32xf32>
    %66 = tpu.matmul %64, %65, %cst_24 {dimension_numbers = #tpu.dot_dimension_numbers<[1], [0], [0], [1], [0, 0, 1, 1], [], []>} : vector<39x32xf32>, vector<32x32xf32>, vector<39x32xf32> -> vector<39x32xf32>
    %67 = arith.addf %59, %66 : vector<39x32xf32>
    %c2_i32_25 = arith.constant 2 : i32
    %68 = vector.broadcast %c2_i32_25 : i32 to vector<39x79xi32>
    %69 = arith.cmpi eq, %50, %68 : vector<39x79xi32>
    %70 = arith.extui %69 : vector<39x79xi1> to vector<39x79xi32>
    %71 = arith.sitofp %70 : vector<39x79xi32> to vector<39x79xf32>
    %cst_26 = arith.constant dense<0.000000e+00> : vector<39x32xf32>
    %72 = tpu.matmul %71, %45, %cst_26 {dimension_numbers = #tpu.dot_dimension_numbers<[1], [0], [0], [1], [0, 0, 1, 1], [], []>} : vector<39x79xf32>, vector<79x32xf32>, vector<39x32xf32> -> vector<39x32xf32>
    %c80 = arith.constant 80 : index
    %c0_27 = arith.constant 0 : index
    %73 = vector.load %arg2[%c80, %c0_27] : memref<368x32xf32, #tpu.memory_space<vmem>>, vector<32x32xf32>
    %cst_28 = arith.constant dense<0.000000e+00> : vector<39x32xf32>
    %74 = tpu.matmul %72, %73, %cst_28 {dimension_numbers = #tpu.dot_dimension_numbers<[1], [0], [0], [1], [0, 0, 1, 1], [], []>} : vector<39x32xf32>, vector<32x32xf32>, vector<39x32xf32> -> vector<39x32xf32>
    %75 = arith.addf %67, %74 : vector<39x32xf32>
    %cst_29 = arith.constant 5.000000e-01 : f32
    %76 = vector.broadcast %cst_29 : f32 to vector<39x32xf32>
    %77 = arith.mulf %76, %75 : vector<39x32xf32>
    %cst_30 = arith.constant 4.471500e-02 : f32
    %78 = vector.broadcast %cst_30 : f32 to vector<39x32xf32>
    %79 = arith.mulf %78, %75 : vector<39x32xf32>
    %80 = arith.mulf %79, %75 : vector<39x32xf32>
    %81 = arith.mulf %80, %75 : vector<39x32xf32>
    %82 = arith.addf %75, %81 : vector<39x32xf32>
    %cst_31 = arith.constant 0.797884583 : f32
    %83 = vector.broadcast %cst_31 : f32 to vector<39x32xf32>
    %84 = arith.mulf %83, %82 : vector<39x32xf32>
    %85 = math.tanh %84 : vector<39x32xf32>
    %cst_32 = arith.constant 1.000000e+00 : f32
    %86 = vector.broadcast %cst_32 : f32 to vector<39x32xf32>
    %87 = arith.addf %86, %85 : vector<39x32xf32>
    %88 = arith.mulf %77, %87 : vector<39x32xf32>
    %89 = tpu.iota {dimensions = array<i32: 0>} : vector<19x39xi32>
    %90 = tpu.iota {dimensions = array<i32: 1>} : vector<19x39xi32>
    %c2_i32_33 = arith.constant 2 : i32
    %91 = vector.broadcast %c2_i32_33 : i32 to vector<19x39xi32>
    %92 = arith.muli %91, %89 : vector<19x39xi32>
    %93 = arith.subi %90, %92 : vector<19x39xi32>
    %cst_34 = arith.constant 0.000000e+00 : f32
    %94 = vector.broadcast %cst_34 : f32 to vector<19x32xf32>
    %c0_i32_35 = arith.constant 0 : i32
    %95 = vector.broadcast %c0_i32_35 : i32 to vector<19x39xi32>
    %96 = arith.cmpi eq, %93, %95 : vector<19x39xi32>
    %97 = arith.extui %96 : vector<19x39xi1> to vector<19x39xi32>
    %98 = arith.sitofp %97 : vector<19x39xi32> to vector<19x39xf32>
    %cst_36 = arith.constant dense<0.000000e+00> : vector<19x32xf32>
    %99 = tpu.matmul %98, %88, %cst_36 {dimension_numbers = #tpu.dot_dimension_numbers<[1], [0], [0], [1], [0, 0, 1, 1], [], []>} : vector<19x39xf32>, vector<39x32xf32>, vector<19x32xf32> -> vector<19x32xf32>
    %c112 = arith.constant 112 : index
    %c0_37 = arith.constant 0 : index
    %100 = vector.load %arg2[%c112, %c0_37] : memref<368x32xf32, #tpu.memory_space<vmem>>, vector<32x32xf32>
    %cst_38 = arith.constant dense<0.000000e+00> : vector<19x32xf32>
    %101 = tpu.matmul %99, %100, %cst_38 {dimension_numbers = #tpu.dot_dimension_numbers<[1], [0], [0], [1], [0, 0, 1, 1], [], []>} : vector<19x32xf32>, vector<32x32xf32>, vector<19x32xf32> -> vector<19x32xf32>
    %102 = arith.addf %94, %101 : vector<19x32xf32>
    %c1_i32_39 = arith.constant 1 : i32
    %103 = vector.broadcast %c1_i32_39 : i32 to vector<19x39xi32>
    %104 = arith.cmpi eq, %93, %103 : vector<19x39xi32>
    %105 = arith.extui %104 : vector<19x39xi1> to vector<19x39xi32>
    %106 = arith.sitofp %105 : vector<19x39xi32> to vector<19x39xf32>
    %cst_40 = arith.constant dense<0.000000e+00> : vector<19x32xf32>
    %107 = tpu.matmul %106, %88, %cst_40 {dimension_numbers = #tpu.dot_dimension_numbers<[1], [0], [0], [1], [0, 0, 1, 1], [], []>} : vector<19x39xf32>, vector<39x32xf32>, vector<19x32xf32> -> vector<19x32xf32>
    %c144 = arith.constant 144 : index
    %c0_41 = arith.constant 0 : index
    %108 = vector.load %arg2[%c144, %c0_41] : memref<368x32xf32, #tpu.memory_space<vmem>>, vector<32x32xf32>
    %cst_42 = arith.constant dense<0.000000e+00> : vector<19x32xf32>
    %109 = tpu.matmul %107, %108, %cst_42 {dimension_numbers = #tpu.dot_dimension_numbers<[1], [0], [0], [1], [0, 0, 1, 1], [], []>} : vector<19x32xf32>, vector<32x32xf32>, vector<19x32xf32> -> vector<19x32xf32>
    %110 = arith.addf %102, %109 : vector<19x32xf32>
    %c2_i32_43 = arith.constant 2 : i32
    %111 = vector.broadcast %c2_i32_43 : i32 to vector<19x39xi32>
    %112 = arith.cmpi eq, %93, %111 : vector<19x39xi32>
    %113 = arith.extui %112 : vector<19x39xi1> to vector<19x39xi32>
    %114 = arith.sitofp %113 : vector<19x39xi32> to vector<19x39xf32>
    %cst_44 = arith.constant dense<0.000000e+00> : vector<19x32xf32>
    %115 = tpu.matmul %114, %88, %cst_44 {dimension_numbers = #tpu.dot_dimension_numbers<[1], [0], [0], [1], [0, 0, 1, 1], [], []>} : vector<19x39xf32>, vector<39x32xf32>, vector<19x32xf32> -> vector<19x32xf32>
    %c176 = arith.constant 176 : index
    %c0_45 = arith.constant 0 : index
    %116 = vector.load %arg2[%c176, %c0_45] : memref<368x32xf32, #tpu.memory_space<vmem>>, vector<32x32xf32>
    %cst_46 = arith.constant dense<0.000000e+00> : vector<19x32xf32>
    %117 = tpu.matmul %115, %116, %cst_46 {dimension_numbers = #tpu.dot_dimension_numbers<[1], [0], [0], [1], [0, 0, 1, 1], [], []>} : vector<19x32xf32>, vector<32x32xf32>, vector<19x32xf32> -> vector<19x32xf32>
    %118 = arith.addf %110, %117 : vector<19x32xf32>
    %cst_47 = arith.constant 5.000000e-01 : f32
    %119 = vector.broadcast %cst_47 : f32 to vector<19x32xf32>
    %120 = arith.mulf %119, %118 : vector<19x32xf32>
    %cst_48 = arith.constant 4.471500e-02 : f32
    %121 = vector.broadcast %cst_48 : f32 to vector<19x32xf32>
    %122 = arith.mulf %121, %118 : vector<19x32xf32>
    %123 = arith.mulf %122, %118 : vector<19x32xf32>
    %124 = arith.mulf %123, %118 : vector<19x32xf32>
    %125 = arith.addf %118, %124 : vector<19x32xf32>
    %cst_49 = arith.constant 0.797884583 : f32
    %126 = vector.broadcast %cst_49 : f32 to vector<19x32xf32>
    %127 = arith.mulf %126, %125 : vector<19x32xf32>
    %128 = math.tanh %127 : vector<19x32xf32>
    %cst_50 = arith.constant 1.000000e+00 : f32
    %129 = vector.broadcast %cst_50 : f32 to vector<19x32xf32>
    %130 = arith.addf %129, %128 : vector<19x32xf32>
    %131 = arith.mulf %120, %130 : vector<19x32xf32>
    %c2 = arith.constant 2 : index
    %c0_51 = arith.constant 0 : index
    %132 = vector.load %arg3[%c2, %c0_51] : memref<9x32xf32, #tpu.memory_space<vmem>>, vector<1x32xf32>
    %c3 = arith.constant 3 : index
    %c0_52 = arith.constant 0 : index
    %133 = vector.load %arg3[%c3, %c0_52] : memref<9x32xf32, #tpu.memory_space<vmem>>, vector<1x32xf32>
    %cst_53 = arith.constant dense<0.000000e+00> : vector<19xf32>
    %134 = vector.multi_reduction <add>, %131, %cst_53 [1] : vector<19x32xf32> to vector<19xf32>
    %135 = vector.shape_cast %134 : vector<19xf32> to vector<19x1xf32>
    %cst_54 = arith.constant 3.200000e+01 : f32
    %136 = vector.broadcast %cst_54 : f32 to vector<19x1xf32>
    %137 = arith.divf %135, %136 : vector<19x1xf32>
    %138 = vector.broadcast %137 : vector<19x1xf32> to vector<19x32xf32>
    %139 = arith.subf %131, %138 : vector<19x32xf32>
    %140 = arith.mulf %139, %139 : vector<19x32xf32>
    %cst_55 = arith.constant dense<0.000000e+00> : vector<19xf32>
    %141 = vector.multi_reduction <add>, %140, %cst_55 [1] : vector<19x32xf32> to vector<19xf32>
    %142 = vector.shape_cast %141 : vector<19xf32> to vector<19x1xf32>
    %cst_56 = arith.constant 3.200000e+01 : f32
    %143 = vector.broadcast %cst_56 : f32 to vector<19x1xf32>
    %144 = arith.divf %142, %143 : vector<19x1xf32>
    %145 = vector.broadcast %137 : vector<19x1xf32> to vector<19x32xf32>
    %146 = arith.subf %131, %145 : vector<19x32xf32>
    %cst_57 = arith.constant 9.99999974E-6 : f32
    %147 = vector.broadcast %cst_57 : f32 to vector<19x1xf32>
    %148 = arith.addf %144, %147 : vector<19x1xf32>
    %149 = math.rsqrt %148 : vector<19x1xf32>
    %150 = vector.broadcast %149 : vector<19x1xf32> to vector<19x32xf32>
    %151 = arith.mulf %146, %150 : vector<19x32xf32>
    %152 = vector.broadcast %132 : vector<1x32xf32> to vector<19x32xf32>
    %153 = arith.mulf %151, %152 : vector<19x32xf32>
    %154 = vector.broadcast %133 : vector<1x32xf32> to vector<19x32xf32>
    %155 = arith.addf %153, %154 : vector<19x32xf32>
    %c208 = arith.constant 208 : index
    %c0_58 = arith.constant 0 : index
    %156 = vector.load %arg2[%c208, %c0_58] : memref<368x32xf32, #tpu.memory_space<vmem>>, vector<32x32xf32>
    %cst_59 = arith.constant dense<0.000000e+00> : vector<19x32xf32>
    %157 = tpu.matmul %155, %156, %cst_59 {dimension_numbers = #tpu.dot_dimension_numbers<[1], [0], [0], [1], [0, 0, 1, 1], [], []>} : vector<19x32xf32>, vector<32x32xf32>, vector<19x32xf32> -> vector<19x32xf32>
    %c4 = arith.constant 4 : index
    %c0_60 = arith.constant 0 : index
    %158 = vector.load %arg3[%c4, %c0_60] : memref<9x32xf32, #tpu.memory_space<vmem>>, vector<1x32xf32>
    %159 = vector.broadcast %158 : vector<1x32xf32> to vector<19x32xf32>
    %160 = arith.addf %157, %159 : vector<19x32xf32>
    %161 = tpu.iota {dimensions = array<i32: 0>} : vector<19x19xi32>
    %162 = tpu.iota {dimensions = array<i32: 1>} : vector<19x19xi32>
    %c272 = arith.constant 272 : index
    %c0_61 = arith.constant 0 : index
    %163 = vector.load %arg2[%c272, %c0_61] : memref<368x32xf32, #tpu.memory_space<vmem>>, vector<32x32xf32>
    %cst_62 = arith.constant dense<0.000000e+00> : vector<19x32xf32>
    %164 = tpu.matmul %160, %163, %cst_62 {dimension_numbers = #tpu.dot_dimension_numbers<[1], [0], [0], [1], [0, 0, 1, 1], [], []>} : vector<19x32xf32>, vector<32x32xf32>, vector<19x32xf32> -> vector<19x32xf32>
    %c-1_i32 = arith.constant -1 : i32
    %165 = vector.broadcast %c-1_i32 : i32 to vector<19x19xi32>
    %166 = arith.addi %161, %165 : vector<19x19xi32>
    %167 = arith.cmpi eq, %162, %166 : vector<19x19xi32>
    %168 = arith.extui %167 : vector<19x19xi1> to vector<19x19xi32>
    %169 = arith.sitofp %168 : vector<19x19xi32> to vector<19x19xf32>
    %cst_63 = arith.constant dense<0.000000e+00> : vector<19x32xf32>
    %170 = tpu.matmul %169, %160, %cst_63 {dimension_numbers = #tpu.dot_dimension_numbers<[1], [0], [0], [1], [0, 0, 1, 1], [], []>} : vector<19x19xf32>, vector<19x32xf32>, vector<19x32xf32> -> vector<19x32xf32>
    %c240 = arith.constant 240 : index
    %c0_64 = arith.constant 0 : index
    %171 = vector.load %arg2[%c240, %c0_64] : memref<368x32xf32, #tpu.memory_space<vmem>>, vector<32x32xf32>
    %cst_65 = arith.constant dense<0.000000e+00> : vector<19x32xf32>
    %172 = tpu.matmul %170, %171, %cst_65 {dimension_numbers = #tpu.dot_dimension_numbers<[1], [0], [0], [1], [0, 0, 1, 1], [], []>} : vector<19x32xf32>, vector<32x32xf32>, vector<19x32xf32> -> vector<19x32xf32>
    %173 = arith.addf %164, %172 : vector<19x32xf32>
    %c1_i32_66 = arith.constant 1 : i32
    %174 = vector.broadcast %c1_i32_66 : i32 to vector<19x19xi32>
    %175 = arith.addi %161, %174 : vector<19x19xi32>
    %176 = arith.cmpi eq, %162, %175 : vector<19x19xi32>
    %177 = arith.extui %176 : vector<19x19xi1> to vector<19x19xi32>
    %178 = arith.sitofp %177 : vector<19x19xi32> to vector<19x19xf32>
    %cst_67 = arith.constant dense<0.000000e+00> : vector<19x32xf32>
    %179 = tpu.matmul %178, %160, %cst_67 {dimension_numbers = #tpu.dot_dimension_numbers<[1], [0], [0], [1], [0, 0, 1, 1], [], []>} : vector<19x19xf32>, vector<19x32xf32>, vector<19x32xf32> -> vector<19x32xf32>
    %c304 = arith.constant 304 : index
    %c0_68 = arith.constant 0 : index
    %180 = vector.load %arg2[%c304, %c0_68] : memref<368x32xf32, #tpu.memory_space<vmem>>, vector<32x32xf32>
    %cst_69 = arith.constant dense<0.000000e+00> : vector<19x32xf32>
    %181 = tpu.matmul %179, %180, %cst_69 {dimension_numbers = #tpu.dot_dimension_numbers<[1], [0], [0], [1], [0, 0, 1, 1], [], []>} : vector<19x32xf32>, vector<32x32xf32>, vector<19x32xf32> -> vector<19x32xf32>
    %182 = arith.addf %173, %181 : vector<19x32xf32>
    %c5 = arith.constant 5 : index
    %c0_70 = arith.constant 0 : index
    %183 = vector.load %arg3[%c5, %c0_70] : memref<9x32xf32, #tpu.memory_space<vmem>>, vector<1x32xf32>
    %184 = vector.broadcast %183 : vector<1x32xf32> to vector<19x32xf32>
    %185 = arith.addf %182, %184 : vector<19x32xf32>
    %cst_71 = arith.constant 5.000000e-01 : f32
    %186 = vector.broadcast %cst_71 : f32 to vector<19x32xf32>
    %187 = arith.mulf %186, %185 : vector<19x32xf32>
    %cst_72 = arith.constant 4.471500e-02 : f32
    %188 = vector.broadcast %cst_72 : f32 to vector<19x32xf32>
    %189 = arith.mulf %188, %185 : vector<19x32xf32>
    %190 = arith.mulf %189, %185 : vector<19x32xf32>
    %191 = arith.mulf %190, %185 : vector<19x32xf32>
    %192 = arith.addf %185, %191 : vector<19x32xf32>
    %cst_73 = arith.constant 0.797884583 : f32
    %193 = vector.broadcast %cst_73 : f32 to vector<19x32xf32>
    %194 = arith.mulf %193, %192 : vector<19x32xf32>
    %195 = math.tanh %194 : vector<19x32xf32>
    %cst_74 = arith.constant 1.000000e+00 : f32
    %196 = vector.broadcast %cst_74 : f32 to vector<19x32xf32>
    %197 = arith.addf %196, %195 : vector<19x32xf32>
    %198 = arith.mulf %187, %197 : vector<19x32xf32>
    %199 = arith.addf %160, %198 : vector<19x32xf32>
    %c6 = arith.constant 6 : index
    %c0_75 = arith.constant 0 : index
    %200 = vector.load %arg3[%c6, %c0_75] : memref<9x32xf32, #tpu.memory_space<vmem>>, vector<1x32xf32>
    %c7 = arith.constant 7 : index
    %c0_76 = arith.constant 0 : index
    %201 = vector.load %arg3[%c7, %c0_76] : memref<9x32xf32, #tpu.memory_space<vmem>>, vector<1x32xf32>
    %cst_77 = arith.constant dense<0.000000e+00> : vector<19xf32>
    %202 = vector.multi_reduction <add>, %199, %cst_77 [1] : vector<19x32xf32> to vector<19xf32>
    %203 = vector.shape_cast %202 : vector<19xf32> to vector<19x1xf32>
    %cst_78 = arith.constant 3.200000e+01 : f32
    %204 = vector.broadcast %cst_78 : f32 to vector<19x1xf32>
    %205 = arith.divf %203, %204 : vector<19x1xf32>
    %206 = vector.broadcast %205 : vector<19x1xf32> to vector<19x32xf32>
    %207 = arith.subf %199, %206 : vector<19x32xf32>
    %208 = arith.mulf %207, %207 : vector<19x32xf32>
    %cst_79 = arith.constant dense<0.000000e+00> : vector<19xf32>
    %209 = vector.multi_reduction <add>, %208, %cst_79 [1] : vector<19x32xf32> to vector<19xf32>
    %210 = vector.shape_cast %209 : vector<19xf32> to vector<19x1xf32>
    %cst_80 = arith.constant 3.200000e+01 : f32
    %211 = vector.broadcast %cst_80 : f32 to vector<19x1xf32>
    %212 = arith.divf %210, %211 : vector<19x1xf32>
    %213 = vector.broadcast %205 : vector<19x1xf32> to vector<19x32xf32>
    %214 = arith.subf %199, %213 : vector<19x32xf32>
    %cst_81 = arith.constant 9.99999974E-6 : f32
    %215 = vector.broadcast %cst_81 : f32 to vector<19x1xf32>
    %216 = arith.addf %212, %215 : vector<19x1xf32>
    %217 = math.rsqrt %216 : vector<19x1xf32>
    %218 = vector.broadcast %217 : vector<19x1xf32> to vector<19x32xf32>
    %219 = arith.mulf %214, %218 : vector<19x32xf32>
    %220 = vector.broadcast %200 : vector<1x32xf32> to vector<19x32xf32>
    %221 = arith.mulf %219, %220 : vector<19x32xf32>
    %222 = vector.broadcast %201 : vector<1x32xf32> to vector<19x32xf32>
    %223 = arith.addf %221, %222 : vector<19x32xf32>
    %c0_82 = arith.constant 0 : index
    %c0_83 = arith.constant 0 : index
    %c0_84 = arith.constant 0 : index
    %224 = vector.load %arg8[%c0_82, %c0_83, %c0_84] : memref<2x8x96xf32, #tpu.memory_space<vmem>>, vector<1x8x96xf32>
    %225 = vector.shape_cast %224 : vector<1x8x96xf32> to vector<8x96xf32>
    %c0_85 = arith.constant 0 : index
    %c0_86 = arith.constant 0 : index
    %c0_87 = arith.constant 0 : index
    %226 = vector.load %arg4[%c0_85, %c0_86, %c0_87] : memref<2x32x96xf32, #tpu.memory_space<vmem>>, vector<1x32x96xf32>
    %227 = vector.shape_cast %226 : vector<1x32x96xf32> to vector<32x96xf32>
    %cst_88 = arith.constant dense<0.000000e+00> : vector<19x96xf32>
    %228 = tpu.matmul %223, %227, %cst_88 {dimension_numbers = #tpu.dot_dimension_numbers<[1], [0], [0], [1], [0, 0, 1, 1], [], []>} : vector<19x32xf32>, vector<32x96xf32>, vector<19x96xf32> -> vector<19x96xf32>
    %229 = vector.extract_strided_slice %225 {offsets = [0, 0], sizes = [1, 96], strides = [1, 1]} : vector<8x96xf32> to vector<1x96xf32>
    %230 = vector.broadcast %229 : vector<1x96xf32> to vector<19x96xf32>
    %231 = arith.addf %228, %230 : vector<19x96xf32>
    %232 = vector.extract_strided_slice %231 {offsets = [0, 0], sizes = [19, 8], strides = [1, 1]} : vector<19x96xf32> to vector<19x8xf32>
    %233 = vector.extract_strided_slice %231 {offsets = [0, 8], sizes = [19, 8], strides = [1, 1]} : vector<19x96xf32> to vector<19x8xf32>
    %234 = vector.extract_strided_slice %231 {offsets = [0, 16], sizes = [19, 8], strides = [1, 1]} : vector<19x96xf32> to vector<19x8xf32>
    %cst_89 = arith.constant dense<0.000000e+00> : vector<19x19xf32>
    %235 = tpu.matmul %232, %233, %cst_89 {dimension_numbers = #tpu.dot_dimension_numbers<[1], [1], [0], [0], [0, 0, 1, 0], [], []>} : vector<19x8xf32>, vector<19x8xf32>, vector<19x19xf32> -> vector<19x19xf32>
    %cst_90 = arith.constant dense<0xFF800000> : vector<19xf32>
    %236 = vector.multi_reduction <maximumf>, %235, %cst_90 [1] : vector<19x19xf32> to vector<19xf32>
    %237 = vector.shape_cast %236 : vector<19xf32> to vector<19x1xf32>
    %238 = vector.broadcast %237 : vector<19x1xf32> to vector<19x19xf32>
    %239 = arith.subf %235, %238 : vector<19x19xf32>
    %240 = math.exp %239 : vector<19x19xf32>
    %cst_91 = arith.constant dense<0.000000e+00> : vector<19xf32>
    %241 = vector.multi_reduction <add>, %240, %cst_91 [1] : vector<19x19xf32> to vector<19xf32>
    %242 = vector.shape_cast %241 : vector<19xf32> to vector<19x1xf32>
    %243 = tpu.reciprocal %242 {approx = true} : vector<19x1xf32> -> vector<19x1xf32>
    %244 = vector.broadcast %243 : vector<19x1xf32> to vector<19x19xf32>
    %245 = arith.mulf %240, %244 : vector<19x19xf32>
    %cst_92 = arith.constant dense<0.000000e+00> : vector<19x8xf32>
    %246 = tpu.matmul %245, %234, %cst_92 {dimension_numbers = #tpu.dot_dimension_numbers<[1], [0], [0], [1], [0, 0, 1, 1], [], []>} : vector<19x19xf32>, vector<19x8xf32>, vector<19x8xf32> -> vector<19x8xf32>
    %c0_93 = arith.constant 0 : index
    %c0_94 = arith.constant 0 : index
    %247 = vector.load %arg10[%c0_93, %c0_94] : memref<19x32xf32, #tpu.memory_space<vmem>>, vector<19x8xf32>
    tpu.vector_store %arg10[%c0_93, %c0_94], %246 {strides = array<i32>} : memref<19x32xf32, #tpu.memory_space<vmem>>, vector<19x8xf32>,
    %248 = vector.extract_strided_slice %231 {offsets = [0, 24], sizes = [19, 8], strides = [1, 1]} : vector<19x96xf32> to vector<19x8xf32>
    %249 = vector.extract_strided_slice %231 {offsets = [0, 32], sizes = [19, 8], strides = [1, 1]} : vector<19x96xf32> to vector<19x8xf32>
    %250 = vector.extract_strided_slice %231 {offsets = [0, 40], sizes = [19, 8], strides = [1, 1]} : vector<19x96xf32> to vector<19x8xf32>
    %cst_95 = arith.constant dense<0.000000e+00> : vector<19x19xf32>
    %251 = tpu.matmul %248, %249, %cst_95 {dimension_numbers = #tpu.dot_dimension_numbers<[1], [1], [0], [0], [0, 0, 1, 0], [], []>} : vector<19x8xf32>, vector<19x8xf32>, vector<19x19xf32> -> vector<19x19xf32>
    %cst_96 = arith.constant dense<0xFF800000> : vector<19xf32>
    %252 = vector.multi_reduction <maximumf>, %251, %cst_96 [1] : vector<19x19xf32> to vector<19xf32>
    %253 = vector.shape_cast %252 : vector<19xf32> to vector<19x1xf32>
    %254 = vector.broadcast %253 : vector<19x1xf32> to vector<19x19xf32>
    %255 = arith.subf %251, %254 : vector<19x19xf32>
    %256 = math.exp %255 : vector<19x19xf32>
    %cst_97 = arith.constant dense<0.000000e+00> : vector<19xf32>
    %257 = vector.multi_reduction <add>, %256, %cst_97 [1] : vector<19x19xf32> to vector<19xf32>
    %258 = vector.shape_cast %257 : vector<19xf32> to vector<19x1xf32>
    %259 = tpu.reciprocal %258 {approx = true} : vector<19x1xf32> -> vector<19x1xf32>
    %260 = vector.broadcast %259 : vector<19x1xf32> to vector<19x19xf32>
    %261 = arith.mulf %256, %260 : vector<19x19xf32>
    %cst_98 = arith.constant dense<0.000000e+00> : vector<19x8xf32>
    %262 = tpu.matmul %261, %250, %cst_98 {dimension_numbers = #tpu.dot_dimension_numbers<[1], [0], [0], [1], [0, 0, 1, 1], [], []>} : vector<19x19xf32>, vector<19x8xf32>, vector<19x8xf32> -> vector<19x8xf32>
    %c0_99 = arith.constant 0 : index
    %c8_100 = arith.constant 8 : index
    %263 = vector.load %arg10[%c0_99, %c8_100] : memref<19x32xf32, #tpu.memory_space<vmem>>, vector<19x8xf32>
    tpu.vector_store %arg10[%c0_99, %c8_100], %262 {strides = array<i32>} : memref<19x32xf32, #tpu.memory_space<vmem>>, vector<19x8xf32>,
    %264 = vector.extract_strided_slice %231 {offsets = [0, 48], sizes = [19, 8], strides = [1, 1]} : vector<19x96xf32> to vector<19x8xf32>
    %265 = vector.extract_strided_slice %231 {offsets = [0, 56], sizes = [19, 8], strides = [1, 1]} : vector<19x96xf32> to vector<19x8xf32>
    %266 = vector.extract_strided_slice %231 {offsets = [0, 64], sizes = [19, 8], strides = [1, 1]} : vector<19x96xf32> to vector<19x8xf32>
    %cst_101 = arith.constant dense<0.000000e+00> : vector<19x19xf32>
    %267 = tpu.matmul %264, %265, %cst_101 {dimension_numbers = #tpu.dot_dimension_numbers<[1], [1], [0], [0], [0, 0, 1, 0], [], []>} : vector<19x8xf32>, vector<19x8xf32>, vector<19x19xf32> -> vector<19x19xf32>
    %cst_102 = arith.constant dense<0xFF800000> : vector<19xf32>
    %268 = vector.multi_reduction <maximumf>, %267, %cst_102 [1] : vector<19x19xf32> to vector<19xf32>
    %269 = vector.shape_cast %268 : vector<19xf32> to vector<19x1xf32>
    %270 = vector.broadcast %269 : vector<19x1xf32> to vector<19x19xf32>
    %271 = arith.subf %267, %270 : vector<19x19xf32>
    %272 = math.exp %271 : vector<19x19xf32>
    %cst_103 = arith.constant dense<0.000000e+00> : vector<19xf32>
    %273 = vector.multi_reduction <add>, %272, %cst_103 [1] : vector<19x19xf32> to vector<19xf32>
    %274 = vector.shape_cast %273 : vector<19xf32> to vector<19x1xf32>
    %275 = tpu.reciprocal %274 {approx = true} : vector<19x1xf32> -> vector<19x1xf32>
    %276 = vector.broadcast %275 : vector<19x1xf32> to vector<19x19xf32>
    %277 = arith.mulf %272, %276 : vector<19x19xf32>
    %cst_104 = arith.constant dense<0.000000e+00> : vector<19x8xf32>
    %278 = tpu.matmul %277, %266, %cst_104 {dimension_numbers = #tpu.dot_dimension_numbers<[1], [0], [0], [1], [0, 0, 1, 1], [], []>} : vector<19x19xf32>, vector<19x8xf32>, vector<19x8xf32> -> vector<19x8xf32>
    %c0_105 = arith.constant 0 : index
    %c16_106 = arith.constant 16 : index
    %279 = vector.load %arg10[%c0_105, %c16_106] : memref<19x32xf32, #tpu.memory_space<vmem>>, vector<19x8xf32>
    tpu.vector_store %arg10[%c0_105, %c16_106], %278 {strides = array<i32>} : memref<19x32xf32, #tpu.memory_space<vmem>>, vector<19x8xf32>,
    %280 = vector.extract_strided_slice %231 {offsets = [0, 72], sizes = [19, 8], strides = [1, 1]} : vector<19x96xf32> to vector<19x8xf32>
    %281 = vector.extract_strided_slice %231 {offsets = [0, 80], sizes = [19, 8], strides = [1, 1]} : vector<19x96xf32> to vector<19x8xf32>
    %282 = vector.extract_strided_slice %231 {offsets = [0, 88], sizes = [19, 8], strides = [1, 1]} : vector<19x96xf32> to vector<19x8xf32>
    %cst_107 = arith.constant dense<0.000000e+00> : vector<19x19xf32>
    %283 = tpu.matmul %280, %281, %cst_107 {dimension_numbers = #tpu.dot_dimension_numbers<[1], [1], [0], [0], [0, 0, 1, 0], [], []>} : vector<19x8xf32>, vector<19x8xf32>, vector<19x19xf32> -> vector<19x19xf32>
    %cst_108 = arith.constant dense<0xFF800000> : vector<19xf32>
    %284 = vector.multi_reduction <maximumf>, %283, %cst_108 [1] : vector<19x19xf32> to vector<19xf32>
    %285 = vector.shape_cast %284 : vector<19xf32> to vector<19x1xf32>
    %286 = vector.broadcast %285 : vector<19x1xf32> to vector<19x19xf32>
    %287 = arith.subf %283, %286 : vector<19x19xf32>
    %288 = math.exp %287 : vector<19x19xf32>
    %cst_109 = arith.constant dense<0.000000e+00> : vector<19xf32>
    %289 = vector.multi_reduction <add>, %288, %cst_109 [1] : vector<19x19xf32> to vector<19xf32>
    %290 = vector.shape_cast %289 : vector<19xf32> to vector<19x1xf32>
    %291 = tpu.reciprocal %290 {approx = true} : vector<19x1xf32> -> vector<19x1xf32>
    %292 = vector.broadcast %291 : vector<19x1xf32> to vector<19x19xf32>
    %293 = arith.mulf %288, %292 : vector<19x19xf32>
    %cst_110 = arith.constant dense<0.000000e+00> : vector<19x8xf32>
    %294 = tpu.matmul %293, %282, %cst_110 {dimension_numbers = #tpu.dot_dimension_numbers<[1], [0], [0], [1], [0, 0, 1, 1], [], []>} : vector<19x19xf32>, vector<19x8xf32>, vector<19x8xf32> -> vector<19x8xf32>
    %c0_111 = arith.constant 0 : index
    %c24 = arith.constant 24 : index
    %295 = vector.load %arg10[%c0_111, %c24] : memref<19x32xf32, #tpu.memory_space<vmem>>, vector<19x8xf32>
    tpu.vector_store %arg10[%c0_111, %c24], %294 {strides = array<i32>} : memref<19x32xf32, #tpu.memory_space<vmem>>, vector<19x8xf32>,
    %c0_112 = arith.constant 0 : index
    %c0_113 = arith.constant 0 : index
    %296 = vector.load %arg10[%c0_112, %c0_113] : memref<19x32xf32, #tpu.memory_space<vmem>>, vector<19x32xf32>
    %c0_114 = arith.constant 0 : index
    %c0_115 = arith.constant 0 : index
    %c0_116 = arith.constant 0 : index
    %297 = vector.load %arg5[%c0_114, %c0_115, %c0_116] : memref<2x32x32xf32, #tpu.memory_space<vmem>>, vector<1x32x32xf32>
    %298 = vector.shape_cast %297 : vector<1x32x32xf32> to vector<32x32xf32>
    %cst_117 = arith.constant dense<0.000000e+00> : vector<19x32xf32>
    %299 = tpu.matmul %296, %298, %cst_117 {dimension_numbers = #tpu.dot_dimension_numbers<[1], [0], [0], [1], [0, 0, 1, 1], [], []>} : vector<19x32xf32>, vector<32x32xf32>, vector<19x32xf32> -> vector<19x32xf32>
    %300 = vector.extract_strided_slice %225 {offsets = [1, 0], sizes = [1, 32], strides = [1, 1]} : vector<8x96xf32> to vector<1x32xf32>
    %301 = vector.broadcast %300 : vector<1x32xf32> to vector<19x32xf32>
    %302 = arith.addf %299, %301 : vector<19x32xf32>
    %303 = arith.addf %223, %302 : vector<19x32xf32>
    %304 = vector.extract_strided_slice %225 {offsets = [2, 0], sizes = [1, 32], strides = [1, 1]} : vector<8x96xf32> to vector<1x32xf32>
    %305 = vector.extract_strided_slice %225 {offsets = [3, 0], sizes = [1, 32], strides = [1, 1]} : vector<8x96xf32> to vector<1x32xf32>
    %cst_118 = arith.constant dense<0.000000e+00> : vector<19xf32>
    %306 = vector.multi_reduction <add>, %303, %cst_118 [1] : vector<19x32xf32> to vector<19xf32>
    %307 = vector.shape_cast %306 : vector<19xf32> to vector<19x1xf32>
    %cst_119 = arith.constant 3.200000e+01 : f32
    %308 = vector.broadcast %cst_119 : f32 to vector<19x1xf32>
    %309 = arith.divf %307, %308 : vector<19x1xf32>
    %310 = vector.broadcast %309 : vector<19x1xf32> to vector<19x32xf32>
    %311 = arith.subf %303, %310 : vector<19x32xf32>
    %312 = arith.mulf %311, %311 : vector<19x32xf32>
    %cst_120 = arith.constant dense<0.000000e+00> : vector<19xf32>
    %313 = vector.multi_reduction <add>, %312, %cst_120 [1] : vector<19x32xf32> to vector<19xf32>
    %314 = vector.shape_cast %313 : vector<19xf32> to vector<19x1xf32>
    %cst_121 = arith.constant 3.200000e+01 : f32
    %315 = vector.broadcast %cst_121 : f32 to vector<19x1xf32>
    %316 = arith.divf %314, %315 : vector<19x1xf32>
    %317 = vector.broadcast %309 : vector<19x1xf32> to vector<19x32xf32>
    %318 = arith.subf %303, %317 : vector<19x32xf32>
    %cst_122 = arith.constant 9.99999974E-6 : f32
    %319 = vector.broadcast %cst_122 : f32 to vector<19x1xf32>
    %320 = arith.addf %316, %319 : vector<19x1xf32>
    %321 = math.rsqrt %320 : vector<19x1xf32>
    %322 = vector.broadcast %321 : vector<19x1xf32> to vector<19x32xf32>
    %323 = arith.mulf %318, %322 : vector<19x32xf32>
    %324 = vector.broadcast %304 : vector<1x32xf32> to vector<19x32xf32>
    %325 = arith.mulf %323, %324 : vector<19x32xf32>
    %326 = vector.broadcast %305 : vector<1x32xf32> to vector<19x32xf32>
    %327 = arith.addf %325, %326 : vector<19x32xf32>
    %c0_123 = arith.constant 0 : index
    %c0_124 = arith.constant 0 : index
    %c0_125 = arith.constant 0 : index
    %328 = vector.load %arg6[%c0_123, %c0_124, %c0_125] : memref<2x32x64xf32, #tpu.memory_space<vmem>>, vector<1x32x64xf32>
    %329 = vector.shape_cast %328 : vector<1x32x64xf32> to vector<32x64xf32>
    %cst_126 = arith.constant dense<0.000000e+00> : vector<19x64xf32>
    %330 = tpu.matmul %327, %329, %cst_126 {dimension_numbers = #tpu.dot_dimension_numbers<[1], [0], [0], [1], [0, 0, 1, 1], [], []>} : vector<19x32xf32>, vector<32x64xf32>, vector<19x64xf32> -> vector<19x64xf32>
    %331 = vector.extract_strided_slice %225 {offsets = [4, 0], sizes = [1, 64], strides = [1, 1]} : vector<8x96xf32> to vector<1x64xf32>
    %332 = vector.broadcast %331 : vector<1x64xf32> to vector<19x64xf32>
    %333 = arith.addf %330, %332 : vector<19x64xf32>
    %cst_127 = arith.constant 5.000000e-01 : f32
    %334 = vector.broadcast %cst_127 : f32 to vector<19x64xf32>
    %335 = arith.mulf %334, %333 : vector<19x64xf32>
    %cst_128 = arith.constant 4.471500e-02 : f32
    %336 = vector.broadcast %cst_128 : f32 to vector<19x64xf32>
    %337 = arith.mulf %336, %333 : vector<19x64xf32>
    %338 = arith.mulf %337, %333 : vector<19x64xf32>
    %339 = arith.mulf %338, %333 : vector<19x64xf32>
    %340 = arith.addf %333, %339 : vector<19x64xf32>
    %cst_129 = arith.constant 0.797884583 : f32
    %341 = vector.broadcast %cst_129 : f32 to vector<19x64xf32>
    %342 = arith.mulf %341, %340 : vector<19x64xf32>
    %343 = math.tanh %342 : vector<19x64xf32>
    %cst_130 = arith.constant 1.000000e+00 : f32
    %344 = vector.broadcast %cst_130 : f32 to vector<19x64xf32>
    %345 = arith.addf %344, %343 : vector<19x64xf32>
    %346 = arith.mulf %335, %345 : vector<19x64xf32>
    %c0_131 = arith.constant 0 : index
    %c0_132 = arith.constant 0 : index
    %c0_133 = arith.constant 0 : index
    %347 = vector.load %arg7[%c0_131, %c0_132, %c0_133] : memref<2x64x32xf32, #tpu.memory_space<vmem>>, vector<1x64x32xf32>
    %348 = vector.shape_cast %347 : vector<1x64x32xf32> to vector<64x32xf32>
    %cst_134 = arith.constant dense<0.000000e+00> : vector<19x32xf32>
    %349 = tpu.matmul %346, %348, %cst_134 {dimension_numbers = #tpu.dot_dimension_numbers<[1], [0], [0], [1], [0, 0, 1, 1], [], []>} : vector<19x64xf32>, vector<64x32xf32>, vector<19x32xf32> -> vector<19x32xf32>
    %350 = vector.extract_strided_slice %225 {offsets = [5, 0], sizes = [1, 32], strides = [1, 1]} : vector<8x96xf32> to vector<1x32xf32>
    %351 = vector.broadcast %350 : vector<1x32xf32> to vector<19x32xf32>
    %352 = arith.addf %349, %351 : vector<19x32xf32>
    %353 = arith.addf %327, %352 : vector<19x32xf32>
    %354 = vector.extract_strided_slice %225 {offsets = [6, 0], sizes = [1, 32], strides = [1, 1]} : vector<8x96xf32> to vector<1x32xf32>
    %355 = vector.extract_strided_slice %225 {offsets = [7, 0], sizes = [1, 32], strides = [1, 1]} : vector<8x96xf32> to vector<1x32xf32>
    %cst_135 = arith.constant dense<0.000000e+00> : vector<19xf32>
    %356 = vector.multi_reduction <add>, %353, %cst_135 [1] : vector<19x32xf32> to vector<19xf32>
    %357 = vector.shape_cast %356 : vector<19xf32> to vector<19x1xf32>
    %cst_136 = arith.constant 3.200000e+01 : f32
    %358 = vector.broadcast %cst_136 : f32 to vector<19x1xf32>
    %359 = arith.divf %357, %358 : vector<19x1xf32>
    %360 = vector.broadcast %359 : vector<19x1xf32> to vector<19x32xf32>
    %361 = arith.subf %353, %360 : vector<19x32xf32>
    %362 = arith.mulf %361, %361 : vector<19x32xf32>
    %cst_137 = arith.constant dense<0.000000e+00> : vector<19xf32>
    %363 = vector.multi_reduction <add>, %362, %cst_137 [1] : vector<19x32xf32> to vector<19xf32>
    %364 = vector.shape_cast %363 : vector<19xf32> to vector<19x1xf32>
    %cst_138 = arith.constant 3.200000e+01 : f32
    %365 = vector.broadcast %cst_138 : f32 to vector<19x1xf32>
    %366 = arith.divf %364, %365 : vector<19x1xf32>
    %367 = vector.broadcast %359 : vector<19x1xf32> to vector<19x32xf32>
    %368 = arith.subf %353, %367 : vector<19x32xf32>
    %cst_139 = arith.constant 9.99999974E-6 : f32
    %369 = vector.broadcast %cst_139 : f32 to vector<19x1xf32>
    %370 = arith.addf %366, %369 : vector<19x1xf32>
    %371 = math.rsqrt %370 : vector<19x1xf32>
    %372 = vector.broadcast %371 : vector<19x1xf32> to vector<19x32xf32>
    %373 = arith.mulf %368, %372 : vector<19x32xf32>
    %374 = vector.broadcast %354 : vector<1x32xf32> to vector<19x32xf32>
    %375 = arith.mulf %373, %374 : vector<19x32xf32>
    %376 = vector.broadcast %355 : vector<1x32xf32> to vector<19x32xf32>
    %377 = arith.addf %375, %376 : vector<19x32xf32>
    %c1_140 = arith.constant 1 : index
    %c0_141 = arith.constant 0 : index
    %c0_142 = arith.constant 0 : index
    %378 = vector.load %arg8[%c1_140, %c0_141, %c0_142] : memref<2x8x96xf32, #tpu.memory_space<vmem>>, vector<1x8x96xf32>
    %379 = vector.shape_cast %378 : vector<1x8x96xf32> to vector<8x96xf32>
    %c1_143 = arith.constant 1 : index
    %c0_144 = arith.constant 0 : index
    %c0_145 = arith.constant 0 : index
    %380 = vector.load %arg4[%c1_143, %c0_144, %c0_145] : memref<2x32x96xf32, #tpu.memory_space<vmem>>, vector<1x32x96xf32>
    %381 = vector.shape_cast %380 : vector<1x32x96xf32> to vector<32x96xf32>
    %cst_146 = arith.constant dense<0.000000e+00> : vector<19x96xf32>
    %382 = tpu.matmul %377, %381, %cst_146 {dimension_numbers = #tpu.dot_dimension_numbers<[1], [0], [0], [1], [0, 0, 1, 1], [], []>} : vector<19x32xf32>, vector<32x96xf32>, vector<19x96xf32> -> vector<19x96xf32>
    %383 = vector.extract_strided_slice %379 {offsets = [0, 0], sizes = [1, 96], strides = [1, 1]} : vector<8x96xf32> to vector<1x96xf32>
    %384 = vector.broadcast %383 : vector<1x96xf32> to vector<19x96xf32>
    %385 = arith.addf %382, %384 : vector<19x96xf32>
    %386 = vector.extract_strided_slice %385 {offsets = [0, 0], sizes = [19, 8], strides = [1, 1]} : vector<19x96xf32> to vector<19x8xf32>
    %387 = vector.extract_strided_slice %385 {offsets = [0, 8], sizes = [19, 8], strides = [1, 1]} : vector<19x96xf32> to vector<19x8xf32>
    %388 = vector.extract_strided_slice %385 {offsets = [0, 16], sizes = [19, 8], strides = [1, 1]} : vector<19x96xf32> to vector<19x8xf32>
    %cst_147 = arith.constant dense<0.000000e+00> : vector<19x19xf32>
    %389 = tpu.matmul %386, %387, %cst_147 {dimension_numbers = #tpu.dot_dimension_numbers<[1], [1], [0], [0], [0, 0, 1, 0], [], []>} : vector<19x8xf32>, vector<19x8xf32>, vector<19x19xf32> -> vector<19x19xf32>
    %cst_148 = arith.constant dense<0xFF800000> : vector<19xf32>
    %390 = vector.multi_reduction <maximumf>, %389, %cst_148 [1] : vector<19x19xf32> to vector<19xf32>
    %391 = vector.shape_cast %390 : vector<19xf32> to vector<19x1xf32>
    %392 = vector.broadcast %391 : vector<19x1xf32> to vector<19x19xf32>
    %393 = arith.subf %389, %392 : vector<19x19xf32>
    %394 = math.exp %393 : vector<19x19xf32>
    %cst_149 = arith.constant dense<0.000000e+00> : vector<19xf32>
    %395 = vector.multi_reduction <add>, %394, %cst_149 [1] : vector<19x19xf32> to vector<19xf32>
    %396 = vector.shape_cast %395 : vector<19xf32> to vector<19x1xf32>
    %397 = tpu.reciprocal %396 {approx = true} : vector<19x1xf32> -> vector<19x1xf32>
    %398 = vector.broadcast %397 : vector<19x1xf32> to vector<19x19xf32>
    %399 = arith.mulf %394, %398 : vector<19x19xf32>
    %cst_150 = arith.constant dense<0.000000e+00> : vector<19x8xf32>
    %400 = tpu.matmul %399, %388, %cst_150 {dimension_numbers = #tpu.dot_dimension_numbers<[1], [0], [0], [1], [0, 0, 1, 1], [], []>} : vector<19x19xf32>, vector<19x8xf32>, vector<19x8xf32> -> vector<19x8xf32>
    %c0_151 = arith.constant 0 : index
    %c0_152 = arith.constant 0 : index
    %401 = vector.load %arg10[%c0_151, %c0_152] : memref<19x32xf32, #tpu.memory_space<vmem>>, vector<19x8xf32>
    tpu.vector_store %arg10[%c0_151, %c0_152], %400 {strides = array<i32>} : memref<19x32xf32, #tpu.memory_space<vmem>>, vector<19x8xf32>,
    %402 = vector.extract_strided_slice %385 {offsets = [0, 24], sizes = [19, 8], strides = [1, 1]} : vector<19x96xf32> to vector<19x8xf32>
    %403 = vector.extract_strided_slice %385 {offsets = [0, 32], sizes = [19, 8], strides = [1, 1]} : vector<19x96xf32> to vector<19x8xf32>
    %404 = vector.extract_strided_slice %385 {offsets = [0, 40], sizes = [19, 8], strides = [1, 1]} : vector<19x96xf32> to vector<19x8xf32>
    %cst_153 = arith.constant dense<0.000000e+00> : vector<19x19xf32>
    %405 = tpu.matmul %402, %403, %cst_153 {dimension_numbers = #tpu.dot_dimension_numbers<[1], [1], [0], [0], [0, 0, 1, 0], [], []>} : vector<19x8xf32>, vector<19x8xf32>, vector<19x19xf32> -> vector<19x19xf32>
    %cst_154 = arith.constant dense<0xFF800000> : vector<19xf32>
    %406 = vector.multi_reduction <maximumf>, %405, %cst_154 [1] : vector<19x19xf32> to vector<19xf32>
    %407 = vector.shape_cast %406 : vector<19xf32> to vector<19x1xf32>
    %408 = vector.broadcast %407 : vector<19x1xf32> to vector<19x19xf32>
    %409 = arith.subf %405, %408 : vector<19x19xf32>
    %410 = math.exp %409 : vector<19x19xf32>
    %cst_155 = arith.constant dense<0.000000e+00> : vector<19xf32>
    %411 = vector.multi_reduction <add>, %410, %cst_155 [1] : vector<19x19xf32> to vector<19xf32>
    %412 = vector.shape_cast %411 : vector<19xf32> to vector<19x1xf32>
    %413 = tpu.reciprocal %412 {approx = true} : vector<19x1xf32> -> vector<19x1xf32>
    %414 = vector.broadcast %413 : vector<19x1xf32> to vector<19x19xf32>
    %415 = arith.mulf %410, %414 : vector<19x19xf32>
    %cst_156 = arith.constant dense<0.000000e+00> : vector<19x8xf32>
    %416 = tpu.matmul %415, %404, %cst_156 {dimension_numbers = #tpu.dot_dimension_numbers<[1], [0], [0], [1], [0, 0, 1, 1], [], []>} : vector<19x19xf32>, vector<19x8xf32>, vector<19x8xf32> -> vector<19x8xf32>
    %c0_157 = arith.constant 0 : index
    %c8_158 = arith.constant 8 : index
    %417 = vector.load %arg10[%c0_157, %c8_158] : memref<19x32xf32, #tpu.memory_space<vmem>>, vector<19x8xf32>
    tpu.vector_store %arg10[%c0_157, %c8_158], %416 {strides = array<i32>} : memref<19x32xf32, #tpu.memory_space<vmem>>, vector<19x8xf32>,
    %418 = vector.extract_strided_slice %385 {offsets = [0, 48], sizes = [19, 8], strides = [1, 1]} : vector<19x96xf32> to vector<19x8xf32>
    %419 = vector.extract_strided_slice %385 {offsets = [0, 56], sizes = [19, 8], strides = [1, 1]} : vector<19x96xf32> to vector<19x8xf32>
    %420 = vector.extract_strided_slice %385 {offsets = [0, 64], sizes = [19, 8], strides = [1, 1]} : vector<19x96xf32> to vector<19x8xf32>
    %cst_159 = arith.constant dense<0.000000e+00> : vector<19x19xf32>
    %421 = tpu.matmul %418, %419, %cst_159 {dimension_numbers = #tpu.dot_dimension_numbers<[1], [1], [0], [0], [0, 0, 1, 0], [], []>} : vector<19x8xf32>, vector<19x8xf32>, vector<19x19xf32> -> vector<19x19xf32>
    %cst_160 = arith.constant dense<0xFF800000> : vector<19xf32>
    %422 = vector.multi_reduction <maximumf>, %421, %cst_160 [1] : vector<19x19xf32> to vector<19xf32>
    %423 = vector.shape_cast %422 : vector<19xf32> to vector<19x1xf32>
    %424 = vector.broadcast %423 : vector<19x1xf32> to vector<19x19xf32>
    %425 = arith.subf %421, %424 : vector<19x19xf32>
    %426 = math.exp %425 : vector<19x19xf32>
    %cst_161 = arith.constant dense<0.000000e+00> : vector<19xf32>
    %427 = vector.multi_reduction <add>, %426, %cst_161 [1] : vector<19x19xf32> to vector<19xf32>
    %428 = vector.shape_cast %427 : vector<19xf32> to vector<19x1xf32>
    %429 = tpu.reciprocal %428 {approx = true} : vector<19x1xf32> -> vector<19x1xf32>
    %430 = vector.broadcast %429 : vector<19x1xf32> to vector<19x19xf32>
    %431 = arith.mulf %426, %430 : vector<19x19xf32>
    %cst_162 = arith.constant dense<0.000000e+00> : vector<19x8xf32>
    %432 = tpu.matmul %431, %420, %cst_162 {dimension_numbers = #tpu.dot_dimension_numbers<[1], [0], [0], [1], [0, 0, 1, 1], [], []>} : vector<19x19xf32>, vector<19x8xf32>, vector<19x8xf32> -> vector<19x8xf32>
    %c0_163 = arith.constant 0 : index
    %c16_164 = arith.constant 16 : index
    %433 = vector.load %arg10[%c0_163, %c16_164] : memref<19x32xf32, #tpu.memory_space<vmem>>, vector<19x8xf32>
    tpu.vector_store %arg10[%c0_163, %c16_164], %432 {strides = array<i32>} : memref<19x32xf32, #tpu.memory_space<vmem>>, vector<19x8xf32>,
    %434 = vector.extract_strided_slice %385 {offsets = [0, 72], sizes = [19, 8], strides = [1, 1]} : vector<19x96xf32> to vector<19x8xf32>
    %435 = vector.extract_strided_slice %385 {offsets = [0, 80], sizes = [19, 8], strides = [1, 1]} : vector<19x96xf32> to vector<19x8xf32>
    %436 = vector.extract_strided_slice %385 {offsets = [0, 88], sizes = [19, 8], strides = [1, 1]} : vector<19x96xf32> to vector<19x8xf32>
    %cst_165 = arith.constant dense<0.000000e+00> : vector<19x19xf32>
    %437 = tpu.matmul %434, %435, %cst_165 {dimension_numbers = #tpu.dot_dimension_numbers<[1], [1], [0], [0], [0, 0, 1, 0], [], []>} : vector<19x8xf32>, vector<19x8xf32>, vector<19x19xf32> -> vector<19x19xf32>
    %cst_166 = arith.constant dense<0xFF800000> : vector<19xf32>
    %438 = vector.multi_reduction <maximumf>, %437, %cst_166 [1] : vector<19x19xf32> to vector<19xf32>
    %439 = vector.shape_cast %438 : vector<19xf32> to vector<19x1xf32>
    %440 = vector.broadcast %439 : vector<19x1xf32> to vector<19x19xf32>
    %441 = arith.subf %437, %440 : vector<19x19xf32>
    %442 = math.exp %441 : vector<19x19xf32>
    %cst_167 = arith.constant dense<0.000000e+00> : vector<19xf32>
    %443 = vector.multi_reduction <add>, %442, %cst_167 [1] : vector<19x19xf32> to vector<19xf32>
    %444 = vector.shape_cast %443 : vector<19xf32> to vector<19x1xf32>
    %445 = tpu.reciprocal %444 {approx = true} : vector<19x1xf32> -> vector<19x1xf32>
    %446 = vector.broadcast %445 : vector<19x1xf32> to vector<19x19xf32>
    %447 = arith.mulf %442, %446 : vector<19x19xf32>
    %cst_168 = arith.constant dense<0.000000e+00> : vector<19x8xf32>
    %448 = tpu.matmul %447, %436, %cst_168 {dimension_numbers = #tpu.dot_dimension_numbers<[1], [0], [0], [1], [0, 0, 1, 1], [], []>} : vector<19x19xf32>, vector<19x8xf32>, vector<19x8xf32> -> vector<19x8xf32>
    %c0_169 = arith.constant 0 : index
    %c24_170 = arith.constant 24 : index
    %449 = vector.load %arg10[%c0_169, %c24_170] : memref<19x32xf32, #tpu.memory_space<vmem>>, vector<19x8xf32>
    tpu.vector_store %arg10[%c0_169, %c24_170], %448 {strides = array<i32>} : memref<19x32xf32, #tpu.memory_space<vmem>>, vector<19x8xf32>,
    %c0_171 = arith.constant 0 : index
    %c0_172 = arith.constant 0 : index
    %450 = vector.load %arg10[%c0_171, %c0_172] : memref<19x32xf32, #tpu.memory_space<vmem>>, vector<19x32xf32>
    %c1_173 = arith.constant 1 : index
    %c0_174 = arith.constant 0 : index
    %c0_175 = arith.constant 0 : index
    %451 = vector.load %arg5[%c1_173, %c0_174, %c0_175] : memref<2x32x32xf32, #tpu.memory_space<vmem>>, vector<1x32x32xf32>
    %452 = vector.shape_cast %451 : vector<1x32x32xf32> to vector<32x32xf32>
    %cst_176 = arith.constant dense<0.000000e+00> : vector<19x32xf32>
    %453 = tpu.matmul %450, %452, %cst_176 {dimension_numbers = #tpu.dot_dimension_numbers<[1], [0], [0], [1], [0, 0, 1, 1], [], []>} : vector<19x32xf32>, vector<32x32xf32>, vector<19x32xf32> -> vector<19x32xf32>
    %454 = vector.extract_strided_slice %379 {offsets = [1, 0], sizes = [1, 32], strides = [1, 1]} : vector<8x96xf32> to vector<1x32xf32>
    %455 = vector.broadcast %454 : vector<1x32xf32> to vector<19x32xf32>
    %456 = arith.addf %453, %455 : vector<19x32xf32>
    %457 = arith.addf %377, %456 : vector<19x32xf32>
    %458 = vector.extract_strided_slice %379 {offsets = [2, 0], sizes = [1, 32], strides = [1, 1]} : vector<8x96xf32> to vector<1x32xf32>
    %459 = vector.extract_strided_slice %379 {offsets = [3, 0], sizes = [1, 32], strides = [1, 1]} : vector<8x96xf32> to vector<1x32xf32>
    %cst_177 = arith.constant dense<0.000000e+00> : vector<19xf32>
    %460 = vector.multi_reduction <add>, %457, %cst_177 [1] : vector<19x32xf32> to vector<19xf32>
    %461 = vector.shape_cast %460 : vector<19xf32> to vector<19x1xf32>
    %cst_178 = arith.constant 3.200000e+01 : f32
    %462 = vector.broadcast %cst_178 : f32 to vector<19x1xf32>
    %463 = arith.divf %461, %462 : vector<19x1xf32>
    %464 = vector.broadcast %463 : vector<19x1xf32> to vector<19x32xf32>
    %465 = arith.subf %457, %464 : vector<19x32xf32>
    %466 = arith.mulf %465, %465 : vector<19x32xf32>
    %cst_179 = arith.constant dense<0.000000e+00> : vector<19xf32>
    %467 = vector.multi_reduction <add>, %466, %cst_179 [1] : vector<19x32xf32> to vector<19xf32>
    %468 = vector.shape_cast %467 : vector<19xf32> to vector<19x1xf32>
    %cst_180 = arith.constant 3.200000e+01 : f32
    %469 = vector.broadcast %cst_180 : f32 to vector<19x1xf32>
    %470 = arith.divf %468, %469 : vector<19x1xf32>
    %471 = vector.broadcast %463 : vector<19x1xf32> to vector<19x32xf32>
    %472 = arith.subf %457, %471 : vector<19x32xf32>
    %cst_181 = arith.constant 9.99999974E-6 : f32
    %473 = vector.broadcast %cst_181 : f32 to vector<19x1xf32>
    %474 = arith.addf %470, %473 : vector<19x1xf32>
    %475 = math.rsqrt %474 : vector<19x1xf32>
    %476 = vector.broadcast %475 : vector<19x1xf32> to vector<19x32xf32>
    %477 = arith.mulf %472, %476 : vector<19x32xf32>
    %478 = vector.broadcast %458 : vector<1x32xf32> to vector<19x32xf32>
    %479 = arith.mulf %477, %478 : vector<19x32xf32>
    %480 = vector.broadcast %459 : vector<1x32xf32> to vector<19x32xf32>
    %481 = arith.addf %479, %480 : vector<19x32xf32>
    %c1_182 = arith.constant 1 : index
    %c0_183 = arith.constant 0 : index
    %c0_184 = arith.constant 0 : index
    %482 = vector.load %arg6[%c1_182, %c0_183, %c0_184] : memref<2x32x64xf32, #tpu.memory_space<vmem>>, vector<1x32x64xf32>
    %483 = vector.shape_cast %482 : vector<1x32x64xf32> to vector<32x64xf32>
    %cst_185 = arith.constant dense<0.000000e+00> : vector<19x64xf32>
    %484 = tpu.matmul %481, %483, %cst_185 {dimension_numbers = #tpu.dot_dimension_numbers<[1], [0], [0], [1], [0, 0, 1, 1], [], []>} : vector<19x32xf32>, vector<32x64xf32>, vector<19x64xf32> -> vector<19x64xf32>
    %485 = vector.extract_strided_slice %379 {offsets = [4, 0], sizes = [1, 64], strides = [1, 1]} : vector<8x96xf32> to vector<1x64xf32>
    %486 = vector.broadcast %485 : vector<1x64xf32> to vector<19x64xf32>
    %487 = arith.addf %484, %486 : vector<19x64xf32>
    %cst_186 = arith.constant 5.000000e-01 : f32
    %488 = vector.broadcast %cst_186 : f32 to vector<19x64xf32>
    %489 = arith.mulf %488, %487 : vector<19x64xf32>
    %cst_187 = arith.constant 4.471500e-02 : f32
    %490 = vector.broadcast %cst_187 : f32 to vector<19x64xf32>
    %491 = arith.mulf %490, %487 : vector<19x64xf32>
    %492 = arith.mulf %491, %487 : vector<19x64xf32>
    %493 = arith.mulf %492, %487 : vector<19x64xf32>
    %494 = arith.addf %487, %493 : vector<19x64xf32>
    %cst_188 = arith.constant 0.797884583 : f32
    %495 = vector.broadcast %cst_188 : f32 to vector<19x64xf32>
    %496 = arith.mulf %495, %494 : vector<19x64xf32>
    %497 = math.tanh %496 : vector<19x64xf32>
    %cst_189 = arith.constant 1.000000e+00 : f32
    %498 = vector.broadcast %cst_189 : f32 to vector<19x64xf32>
    %499 = arith.addf %498, %497 : vector<19x64xf32>
    %500 = arith.mulf %489, %499 : vector<19x64xf32>
    %c1_190 = arith.constant 1 : index
    %c0_191 = arith.constant 0 : index
    %c0_192 = arith.constant 0 : index
    %501 = vector.load %arg7[%c1_190, %c0_191, %c0_192] : memref<2x64x32xf32, #tpu.memory_space<vmem>>, vector<1x64x32xf32>
    %502 = vector.shape_cast %501 : vector<1x64x32xf32> to vector<64x32xf32>
    %cst_193 = arith.constant dense<0.000000e+00> : vector<19x32xf32>
    %503 = tpu.matmul %500, %502, %cst_193 {dimension_numbers = #tpu.dot_dimension_numbers<[1], [0], [0], [1], [0, 0, 1, 1], [], []>} : vector<19x64xf32>, vector<64x32xf32>, vector<19x32xf32> -> vector<19x32xf32>
    %504 = vector.extract_strided_slice %379 {offsets = [5, 0], sizes = [1, 32], strides = [1, 1]} : vector<8x96xf32> to vector<1x32xf32>
    %505 = vector.broadcast %504 : vector<1x32xf32> to vector<19x32xf32>
    %506 = arith.addf %503, %505 : vector<19x32xf32>
    %507 = arith.addf %481, %506 : vector<19x32xf32>
    %508 = vector.extract_strided_slice %379 {offsets = [6, 0], sizes = [1, 32], strides = [1, 1]} : vector<8x96xf32> to vector<1x32xf32>
    %509 = vector.extract_strided_slice %379 {offsets = [7, 0], sizes = [1, 32], strides = [1, 1]} : vector<8x96xf32> to vector<1x32xf32>
    %cst_194 = arith.constant dense<0.000000e+00> : vector<19xf32>
    %510 = vector.multi_reduction <add>, %507, %cst_194 [1] : vector<19x32xf32> to vector<19xf32>
    %511 = vector.shape_cast %510 : vector<19xf32> to vector<19x1xf32>
    %cst_195 = arith.constant 3.200000e+01 : f32
    %512 = vector.broadcast %cst_195 : f32 to vector<19x1xf32>
    %513 = arith.divf %511, %512 : vector<19x1xf32>
    %514 = vector.broadcast %513 : vector<19x1xf32> to vector<19x32xf32>
    %515 = arith.subf %507, %514 : vector<19x32xf32>
    %516 = arith.mulf %515, %515 : vector<19x32xf32>
    %cst_196 = arith.constant dense<0.000000e+00> : vector<19xf32>
    %517 = vector.multi_reduction <add>, %516, %cst_196 [1] : vector<19x32xf32> to vector<19xf32>
    %518 = vector.shape_cast %517 : vector<19xf32> to vector<19x1xf32>
    %cst_197 = arith.constant 3.200000e+01 : f32
    %519 = vector.broadcast %cst_197 : f32 to vector<19x1xf32>
    %520 = arith.divf %518, %519 : vector<19x1xf32>
    %521 = vector.broadcast %513 : vector<19x1xf32> to vector<19x32xf32>
    %522 = arith.subf %507, %521 : vector<19x32xf32>
    %cst_198 = arith.constant 9.99999974E-6 : f32
    %523 = vector.broadcast %cst_198 : f32 to vector<19x1xf32>
    %524 = arith.addf %520, %523 : vector<19x1xf32>
    %525 = math.rsqrt %524 : vector<19x1xf32>
    %526 = vector.broadcast %525 : vector<19x1xf32> to vector<19x32xf32>
    %527 = arith.mulf %522, %526 : vector<19x32xf32>
    %528 = vector.broadcast %508 : vector<1x32xf32> to vector<19x32xf32>
    %529 = arith.mulf %527, %528 : vector<19x32xf32>
    %530 = vector.broadcast %509 : vector<1x32xf32> to vector<19x32xf32>
    %531 = arith.addf %529, %530 : vector<19x32xf32>
    %cst_199 = arith.constant dense<0.000000e+00> : vector<32xf32>
    %532 = vector.multi_reduction <add>, %531, %cst_199 [0] : vector<19x32xf32> to vector<32xf32>
    %533 = vector.shape_cast %532 : vector<32xf32> to vector<1x32xf32>
    %cst_200 = arith.constant 1.900000e+01 : f32
    %534 = vector.broadcast %cst_200 : f32 to vector<1x32xf32>
    %535 = arith.divf %533, %534 : vector<1x32xf32>
    %c336 = arith.constant 336 : index
    %c0_201 = arith.constant 0 : index
    %536 = vector.load %arg2[%c336, %c0_201] : memref<368x32xf32, #tpu.memory_space<vmem>>, vector<32x32xf32>
    %cst_202 = arith.constant dense<0.000000e+00> : vector<1x32xf32>
    %537 = tpu.matmul %535, %536, %cst_202 {dimension_numbers = #tpu.dot_dimension_numbers<[1], [0], [0], [1], [0, 0, 1, 1], [], []>} : vector<1x32xf32>, vector<32x32xf32>, vector<1x32xf32> -> vector<1x32xf32>
    %c8_203 = arith.constant 8 : index
    %c0_204 = arith.constant 0 : index
    %538 = vector.load %arg3[%c8_203, %c0_204] : memref<9x32xf32, #tpu.memory_space<vmem>>, vector<1x32xf32>
    %539 = arith.addf %537, %538 : vector<1x32xf32>
    %540 = vector.extract_strided_slice %539 {offsets = [0, 0], sizes = [1, 5], strides = [1, 1]} : vector<1x32xf32> to vector<1x5xf32>
    %c0_205 = arith.constant 0 : index
    %c0_206 = arith.constant 0 : index
    %c0_207 = arith.constant 0 : index
    %541 = vector.load %arg9[%c0_205, %c0_206, %c0_207] : memref<1x1x5xf32, #tpu.memory_space<vmem>>, vector<1x1x5xf32>
    %542 = vector.shape_cast %541 : vector<1x1x5xf32> to vector<1x5xf32>
    %543 = vector.shape_cast %540 : vector<1x5xf32> to vector<1x1x5xf32>
    tpu.vector_store %arg9[%c0_205, %c0_206, %c0_207], %543 {strides = array<i32>} : memref<1x1x5xf32, #tpu.memory_space<vmem>>, vector<1x1x5xf32>,
    return
  }
  func.func @transform_0(%arg0: i32) -> (i32, i32, i32) {
    %c0_i32 = arith.constant 0 : i32
    %c0_i32_0 = arith.constant 0 : i32
    %c0_i32_1 = arith.constant 0 : i32
    return %arg0, %c0_i32, %c0_i32_0 : i32, i32, i32
  }
  func.func @transform_1(%arg0: i32) -> (i32, i32) {
    %c0_i32 = arith.constant 0 : i32
    %c0_i32_0 = arith.constant 0 : i32
    %c0_i32_1 = arith.constant 0 : i32
    return %c0_i32, %c0_i32_0 : i32, i32
  }
  func.func @transform_2(%arg0: i32) -> (i32, i32) {
    %c0_i32 = arith.constant 0 : i32
    %c0_i32_0 = arith.constant 0 : i32
    %c0_i32_1 = arith.constant 0 : i32
    return %c0_i32, %c0_i32_0 : i32, i32
  }
  func.func @transform_3(%arg0: i32) -> (i32, i32, i32) {
    %c0_i32 = arith.constant 0 : i32
    %c0_i32_0 = arith.constant 0 : i32
    %c0_i32_1 = arith.constant 0 : i32
    %c0_i32_2 = arith.constant 0 : i32
    return %c0_i32, %c0_i32_0, %c0_i32_1 : i32, i32, i32
  }
  func.func @transform_4(%arg0: i32) -> (i32, i32, i32) {
    %c0_i32 = arith.constant 0 : i32
    %c0_i32_0 = arith.constant 0 : i32
    %c0_i32_1 = arith.constant 0 : i32
    %c0_i32_2 = arith.constant 0 : i32
    return %c0_i32, %c0_i32_0, %c0_i32_1 : i32, i32, i32
  }
  func.func @transform_5(%arg0: i32) -> (i32, i32, i32) {
    %c0_i32 = arith.constant 0 : i32
    %c0_i32_0 = arith.constant 0 : i32
    %c0_i32_1 = arith.constant 0 : i32
    %c0_i32_2 = arith.constant 0 : i32
    return %c0_i32, %c0_i32_0, %c0_i32_1 : i32, i32, i32
  }
  func.func @transform_6(%arg0: i32) -> (i32, i32, i32) {
    %c0_i32 = arith.constant 0 : i32
    %c0_i32_0 = arith.constant 0 : i32
    %c0_i32_1 = arith.constant 0 : i32
    %c0_i32_2 = arith.constant 0 : i32
    return %c0_i32, %c0_i32_0, %c0_i32_1 : i32, i32, i32
  }
  func.func @transform_7(%arg0: i32) -> (i32, i32, i32) {
    %c0_i32 = arith.constant 0 : i32
    %c0_i32_0 = arith.constant 0 : i32
    %c0_i32_1 = arith.constant 0 : i32
    %c0_i32_2 = arith.constant 0 : i32
    return %c0_i32, %c0_i32_0, %c0_i32_1 : i32, i32, i32
  }
  func.func @transform_8(%arg0: i32) -> (i32, i32, i32) {
    %c0_i32 = arith.constant 0 : i32
    %c0_i32_0 = arith.constant 0 : i32
    %c0_i32_1 = arith.constant 0 : i32
    return %arg0, %c0_i32, %c0_i32_0 : i32, i32, i32
  }
}

</mosaic_0001>

<llo_original>
// kernel: hubert_classify.1
$region0: #{hubert_classify.1}
  #allocation0 [shape = 'u32[]', space=smem, size = 0x4, offset = 0x4, fixed_abs, tag = 'smem constant byte address 0x4 - core index']
  #allocation1 [shape = 'u32[72,128]{1,0:T(1,128)}', space=vmem, size = 0x9000, scoped, tag = 'internal scratch']
  #allocation2 [shape = 'f32[19,32]{1,0:T(8,128)}', space=vmem, size = 0x3000, scoped, tag = 'scratch operand']
  %s0 = inlined_call_operand.vmem [shape: f32[2,80,5], index: 0, kind: input, shape index: {}]
  %s1 = inlined_call_operand.vmem [shape: f32[368,32], index: 1, kind: input, shape index: {}]
  %s2 = inlined_call_operand.vmem [shape: f32[9,32], index: 2, kind: input, shape index: {}]
  %s3 = inlined_call_operand.vmem [shape: f32[2,32,96], index: 3, kind: input, shape index: {}]
  %s4 = inlined_call_operand.vmem [shape: f32[2,32,32], index: 4, kind: input, shape index: {}]
  %s5 = inlined_call_operand.vmem [shape: f32[2,32,64], index: 5, kind: input, shape index: {}]
  %s6 = inlined_call_operand.vmem [shape: f32[2,64,32], index: 6, kind: input, shape index: {}]
  %s7 = inlined_call_operand.vmem [shape: f32[2,8,96], index: 7, kind: input, shape index: {}]
  %s8 = inlined_call_operand.hbm [shape: f32[2,1,5], index: 8, kind: output, shape index: {}]
  %s9 = sld [smem:[#allocation0]]
  $region65: #{hubert_classify.1} parent=0
    _
  %s11 = ssub.s32 1, %s9
  %s12 = scalar_select 0, %s11, %s9
  $region1: #{hubert_classify.1} parent=0
    #allocation3 [shape = 'u8[1024]{0}', space=vmem, size = 0x400, scoped, tag = 'output window, operand 0']
    #allocation4 [shape = 's32[2]{0}', space=sflag, size = 0x8, scoped, tag = 'scoped memory for hubert_classify.1']
    %13 = vsyncpa [#allocation4], 0
    %s14 = scalar_lea.sflag [#allocation4], 1
    %15 = vsyncpa %s14, 0
    loop: start=0, step=1, limit=4
    $region2: #{hubert_classify.1} parent=1 // loop_pre_header
      _
    $region3: #{hubert_classify.1} parent=1 // loop_header
      %s17 = sphi 0, %s21
      %p18 = scmp.ge.s32.totalorder %s17, 4
      %s27 = sphi 0, %s29
      %s30 = sphi 0, %s27
      %s31 = sphi 0, %s30
      %s47 = sphi 0, %s31
      %s51 = sphi 0, %s51
      %s53 = sphi 0, %s51
      %s54 = sphi 0, %s53
      %s68 = sphi 0, %s54
      %s72 = sphi 0, %s72
      %s74 = sphi 0, %s72
      %s75 = sphi 0, %s74
      %s89 = sphi 0, %s75
      %s93 = sphi 0, %s93
      %s95 = sphi 0, %s93
      %s96 = sphi 0, %s95
      %s110 = sphi 0, %s96
      %s114 = sphi 0, %s114
      %s116 = sphi 0, %s114
      %s117 = sphi 0, %s116
      %s131 = sphi 0, %s117
      %s135 = sphi 0, %s135
      %s137 = sphi 0, %s135
      %s138 = sphi 0, %s137
      %s152 = sphi 0, %s138
      %s156 = sphi 0, %s156
      %s158 = sphi 0, %s156
      %s159 = sphi 0, %s158
      %s173 = sphi 0, %s159
      %s177 = sphi 0, %s177
      %s179 = sphi 0, %s177
      %s180 = sphi 0, %s179
      %s194 = sphi 0, %s180
      %s200 = sphi 0, %s202
      %s203 = sphi 0, %s200
      %s204 = sphi 0, %s203
      %s220 = sphi 0, %s204
    $region4: #{hubert_classify.1} parent=1 // loop_header_branch
      %20 = sbr.rel (%p18) target = $region8
    $region5: #{hubert_classify.1} parent=1 // loop_body
      %s22 = ssub.s32 %s17, 1
      %s23 = ssub.s32 %s17, 2
      %s24 = sadd.s32 %s17, 1
      %s25 = ssub.s32 %s17, %s24
      %p26 = scmp.eq.s32.totalorder %s25, 0
      %s28 = sadd.s32 %s27, 1
      %s29 = scalar_select %p26, %s27, %s28
      %p32 = pneg %p26
      %p33 = scmp.eq.s32.totalorder %s17, 1
      %p34 = por %p32, %p33
      %p35 = scmp.ne.s32.totalorder %s27, %s30
      %p36 = scmp.eq.s32.totalorder %s17, 0
      %p37 = por %p35, %p36
      %p38 = scmp.ne.s32.totalorder %s27, %s30
      %p39 = scmp.eq.s32.totalorder %s22, 1
      %p40 = por %p38, %p39
      %p41 = scmp.ne.s32.totalorder %s30, %s31
      %p42 = scmp.eq.s32.totalorder %s22, 0
      %p43 = por %p41, %p42
      %p44 = scmp.ne.s32.totalorder %s30, %s31
      %p45 = scmp.eq.s32.totalorder %s23, 1
      %p46 = por %p44, %p45
      %p48 = scmp.ne.s32.totalorder %s31, %s47
      %p49 = scmp.eq.s32.totalorder %s23, 0
      %p50 = por %p48, %p49
      %s52 = sadd.s32 %s51, 1
      %p55 = scmp.eq.s32.totalorder %s17, 1
      %p56 = scmp.ne.s32.totalorder %s51, %s53
      %p57 = scmp.eq.s32.totalorder %s17, 0
      %p58 = por %p56, %p57
      %p59 = scmp.ne.s32.totalorder %s51, %s53
      %p60 = scmp.eq.s32.totalorder %s22, 1
      %p61 = por %p59, %p60
      %p62 = scmp.ne.s32.totalorder %s53, %s54
      %p63 = scmp.eq.s32.totalorder %s22, 0
      %p64 = por %p62, %p63
      %p65 = scmp.ne.s32.totalorder %s53, %s54
      %p66 = scmp.eq.s32.totalorder %s23, 1
      %p67 = por %p65, %p66
      %p69 = scmp.ne.s32.totalorder %s54, %s68
      %p70 = scmp.eq.s32.totalorder %s23, 0
      %p71 = por %p69, %p70
      %s73 = sadd.s32 %s72, 1
      %p76 = scmp.eq.s32.totalorder %s17, 1
      %p77 = scmp.ne.s32.totalorder %s72, %s74
      %p78 = scmp.eq.s32.totalorder %s17, 0
      %p79 = por %p77, %p78
      %p80 = scmp.ne.s32.totalorder %s72, %s74
      %p81 = scmp.eq.s32.totalorder %s22, 1
      %p82 = por %p80, %p81
      %p83 = scmp.ne.s32.totalorder %s74, %s75
      %p84 = scmp.eq.s32.totalorder %s22, 0
      %p85 = por %p83, %p84
      %p86 = scmp.ne.s32.totalorder %s74, %s75
      %p87 = scmp.eq.s32.totalorder %s23, 1
      %p88 = por %p86, %p87
      %p90 = scmp.ne.s32.totalorder %s75, %s89
      %p91 = scmp.eq.s32.totalorder %s23, 0
      %p92 = por %p90, %p91
      %s94 = sadd.s32 %s93, 1
      %p97 = scmp.eq.s32.totalorder %s17, 1
      %p98 = scmp.ne.s32.totalorder %s93, %s95
      %p99 = scmp.eq.s32.totalorder %s17, 0
      %p100 = por %p98, %p99
      %p101 = scmp.ne.s32.totalorder %s93, %s95
      %p102 = scmp.eq.s32.totalorder %s22, 1
      %p103 = por %p101, %p102
      %p104 = scmp.ne.s32.totalorder %s95, %s96
      %p105 = scmp.eq.s32.totalorder %s22, 0
      %p106 = por %p104, %p105
      %p107 = scmp.ne.s32.totalorder %s95, %s96
      %p108 = scmp.eq.s32.totalorder %s23, 1
      %p109 = por %p107, %p108
      %p111 = scmp.ne.s32.totalorder %s96, %s110
      %p112 = scmp.eq.s32.totalorder %s23, 0
      %p113 = por %p111, %p112
      %s115 = sadd.s32 %s114, 1
      %p118 = scmp.eq.s32.totalorder %s17, 1
      %p119 = scmp.ne.s32.totalorder %s114, %s116
      %p120 = scmp.eq.s32.totalorder %s17, 0
      %p121 = por %p119, %p120
      %p122 = scmp.ne.s32.totalorder %s114, %s116
      %p123 = scmp.eq.s32.totalorder %s22, 1
      %p124 = por %p122, %p123
      %p125 = scmp.ne.s32.totalorder %s116, %s117
      %p126 = scmp.eq.s32.totalorder %s22, 0
      %p127 = por %p125, %p126
      %p128 = scmp.ne.s32.totalorder %s116, %s117
      %p129 = scmp.eq.s32.totalorder %s23, 1
      %p130 = por %p128, %p129
      %p132 = scmp.ne.s32.totalorder %s117, %s131
      %p133 = scmp.eq.s32.totalorder %s23, 0
      %p134 = por %p132, %p133
      %s136 = sadd.s32 %s135, 1
      %p139 = scmp.eq.s32.totalorder %s17, 1
      %p140 = scmp.ne.s32.totalorder %s135, %s137
      %p141 = scmp.eq.s32.totalorder %s17, 0
      %p142 = por %p140, %p141
      %p143 = scmp.ne.s32.totalorder %s135, %s137
      %p144 = scmp.eq.s32.totalorder %s22, 1
      %p145 = por %p143, %p144
      %p146 = scmp.ne.s32.totalorder %s137, %s138
      %p147 = scmp.eq.s32.totalorder %s22, 0
      %p148 = por %p146, %p147
      %p149 = scmp.ne.s32.totalorder %s137, %s138
      %p150 = scmp.eq.s32.totalorder %s23, 1
      %p151 = por %p149, %p150
      %p153 = scmp.ne.s32.totalorder %s138, %s152
      %p154 = scmp.eq.s32.totalorder %s23, 0
      %p155 = por %p153, %p154
      %s157 = sadd.s32 %s156, 1
      %p160 = scmp.eq.s32.totalorder %s17, 1
      %p161 = scmp.ne.s32.totalorder %s156, %s158
      %p162 = scmp.eq.s32.totalorder %s17, 0
      %p163 = por %p161, %p162
      %p164 = scmp.ne.s32.totalorder %s156, %s158
      %p165 = scmp.eq.s32.totalorder %s22, 1
      %p166 = por %p164, %p165
      %p167 = scmp.ne.s32.totalorder %s158, %s159
      %p168 = scmp.eq.s32.totalorder %s22, 0
      %p169 = por %p167, %p168
      %p170 = scmp.ne.s32.totalorder %s158, %s159
      %p171 = scmp.eq.s32.totalorder %s23, 1
      %p172 = por %p170, %p171
      %p174 = scmp.ne.s32.totalorder %s159, %s173
      %p175 = scmp.eq.s32.totalorder %s23, 0
      %p176 = por %p174, %p175
      %s178 = sadd.s32 %s177, 1
      %p181 = scmp.eq.s32.totalorder %s17, 1
      %p182 = scmp.ne.s32.totalorder %s177, %s179
      %p183 = scmp.eq.s32.totalorder %s17, 0
      %p184 = por %p182, %p183
      %p185 = scmp.ne.s32.totalorder %s177, %s179
      %p186 = scmp.eq.s32.totalorder %s22, 1
      %p187 = por %p185, %p186
      %p188 = scmp.ne.s32.totalorder %s179, %s180
      %p189 = scmp.eq.s32.totalorder %s22, 0
      %p190 = por %p188, %p189
      %p191 = scmp.ne.s32.totalorder %s179, %s180
      %p192 = scmp.eq.s32.totalorder %s23, 1
      %p193 = por %p191, %p192
      %p195 = scmp.ne.s32.totalorder %s180, %s194
      %p196 = scmp.eq.s32.totalorder %s23, 0
      %p197 = por %p195, %p196
      %s198 = ssub.s32 %s17, %s24
      %p199 = scmp.eq.s32.totalorder %s198, 0
      %s201 = sadd.s32 %s200, 1
      %s202 = scalar_select %p199, %s200, %s201
      %p205 = pneg %p199
      %p206 = scmp.eq.s32.totalorder %s17, 1
      %p207 = por %p205, %p206
      %p208 = scmp.ne.s32.totalorder %s200, %s203
      %p209 = scmp.eq.s32.totalorder %s17, 0
      %p210 = por %p208, %p209
      %p211 = scmp.ne.s32.totalorder %s200, %s203
      %p212 = scmp.eq.s32.totalorder %s22, 1
      %p213 = por %p211, %p212
      %p214 = scmp.ne.s32.totalorder %s203, %s204
      %p215 = scmp.eq.s32.totalorder %s22, 0
      %p216 = por %p214, %p215
      %p217 = scmp.ne.s32.totalorder %s203, %s204
      %p218 = scmp.eq.s32.totalorder %s23, 1
      %p219 = por %p217, %p218
      %p221 = scmp.ne.s32.totalorder %s204, %s220
      %p222 = scmp.eq.s32.totalorder %s23, 0
      %p223 = por %p221, %p222
      %p224 = scmp.le.s32.totalorder 1, %s17
      %p225 = scmp.lt.s32.totalorder %s17, 3
      %p226 = pnand %p224, %p225
      %p227 = pneg %p226
      // Predicated region
      $region9: #{hubert_classify.1} parent=5 // pred_check
        _
      $region10: #{hubert_classify.1} parent=5 // pred_check_branch
        %229 = sbr.rel (%p226) target = $region12
      $region11: #{hubert_classify.1} parent=5 // pred_region
        %s230 = ssub.s32 %s17, 1
        // Predicated region
        $region13: #{hubert_classify.1} parent=11 // pred_check
          %p231 = pneg %p64
        $region14: #{hubert_classify.1} parent=11 // pred_check_branch
          %233 = sbr.rel (%p231) target = $region16
        $region15: #{hubert_classify.1} parent=11 // pred_region
          _
        $region16: #{hubert_classify.1} parent=11 // pred_fallthru
          _
        // Predicated region
        $region17: #{hubert_classify.1} parent=11 // pred_check
          %p234 = pneg %p85
        $region18: #{hubert_classify.1} parent=11 // pred_check_branch
          %236 = sbr.rel (%p234) target = $region20
        $region19: #{hubert_classify.1} parent=11 // pred_region
          _
        $region20: #{hubert_classify.1} parent=11 // pred_fallthru
          _
        // Predicated region
        $region21: #{hubert_classify.1} parent=11 // pred_check
          %p237 = pneg %p106
        $region22: #{hubert_classify.1} parent=11 // pred_check_branch
          %239 = sbr.rel (%p237) target = $region24
        $region23: #{hubert_classify.1} parent=11 // pred_region
          _
        $region24: #{hubert_classify.1} parent=11 // pred_fallthru
          _
        // Predicated region
        $region25: #{hubert_classify.1} parent=11 // pred_check
          %p240 = pneg %p127
        $region26: #{hubert_classify.1} parent=11 // pred_check_branch
          %242 = sbr.rel (%p240) target = $region28
        $region27: #{hubert_classify.1} parent=11 // pred_region
          _
        $region28: #{hubert_classify.1} parent=11 // pred_fallthru
          _
        // Predicated region
        $region29: #{hubert_classify.1} parent=11 // pred_check
          %p243 = pneg %p148
        $region30: #{hubert_classify.1} parent=11 // pred_check_branch
          %245 = sbr.rel (%p243) target = $region32
        $region31: #{hubert_classify.1} parent=11 // pred_region
          _
        $region32: #{hubert_classify.1} parent=11 // pred_fallthru
          _
        // Predicated region
        $region33: #{hubert_classify.1} parent=11 // pred_check
          %p246 = pneg %p169
        $region34: #{hubert_classify.1} parent=11 // pred_check_branch
          %248 = sbr.rel (%p246) target = $region36
        $region35: #{hubert_classify.1} parent=11 // pred_region
          _
        $region36: #{hubert_classify.1} parent=11 // pred_fallthru
          _
        // Predicated region
        $region37: #{hubert_classify.1} parent=11 // pred_check
          %p249 = pneg %p190
        $region38: #{hubert_classify.1} parent=11 // pred_check_branch
          %251 = sbr.rel (%p249) target = $region40
        $region39: #{hubert_classify.1} parent=11 // pred_region
          _
        $region40: #{hubert_classify.1} parent=11 // pred_fallthru
          _
      $region12: #{hubert_classify.1} parent=5 // pred_fallthru
        _
      %p252 = scmp.lt.s32.totalorder %s17, 2
      // Predicated region
      $region41: #{hubert_classify.1} parent=5 // pred_check
        %p253 = pneg %p252
      $region42: #{hubert_classify.1} parent=5 // pred_check_branch
        %255 = sbr.rel (%p253) target = $region44
      $region43: #{hubert_classify.1} parent=5 // pred_region
        // Predicated region
        $region45: #{hubert_classify.1} parent=43 // pred_check
          %p256 = pneg %p37
        $region46: #{hubert_classify.1} parent=43 // pred_check_branch
          %258 = sbr.rel (%p256) target = $region48
        $region47: #{hubert_classify.1} parent=43 // pred_region
          %p259 = scmp.lt.s32.totalorder %s17, 1
          %s260 = scalar_select %p259, %s17, 1
          %s261 = smul.addr %s260, 10
          %s262 = smul.addr %s261, 8
          %s263 = scalar_lea.vmem %s0, %s262
        $region48: #{hubert_classify.1} parent=43 // pred_fallthru
          _
      $region44: #{hubert_classify.1} parent=5 // pred_fallthru
        _
      %p264 = scmp.le.s32.totalorder 1, %s17
      %p265 = scmp.lt.s32.totalorder %s17, 3
      %p266 = pnand %p264, %p265
      %p267 = pneg %p266
      // Predicated region
      $region49: #{hubert_classify.1} parent=5 // pred_check
        _
      $region50: #{hubert_classify.1} parent=5 // pred_check_branch
        %269 = sbr.rel (%p266) target = $region52
      $region51: #{hubert_classify.1} parent=5 // pred_region
        %s270 = ssub.s32 %s17, 1
        %p271 = scmp.lt.s32.totalorder %s22, 1
        %s272 = scalar_select %p271, %s22, 1
        %s273 = smul.addr %s272, 10
        %s274 = smul.addr %s273, 8
        %s275 = scalar_lea.vmem %s0, %s274
        %p276 = pneg %p43
        %p277 = pneg %p40
        %p278 = pneg %p64
        %p279 = pneg %p61
        %p280 = pneg %p85
        %p281 = pneg %p82
        %p282 = pneg %p106
        %p283 = pneg %p103
        %p284 = pneg %p127
        %p285 = pneg %p124
        %p286 = pneg %p148
        %p287 = pneg %p145
        %p288 = pneg %p169
        %p289 = pneg %p166
        %p290 = pneg %p190
        %p291 = pneg %p187
        %p292 = pneg %p216
        %p293 = pneg %p213
        %s294 = sand.u32 %s203, 1
        %s295 = scalar_lea.sflag [#allocation4], %s294
        %s296 = sand.u32 %s203, 1
        %s297 = scalar_lea.vmem [#allocation3], %s296
        %p298 = scmp.lt.s32.totalorder %s22, 1
        %s299 = scalar_select %p298, %s22, 1
        %s300 = smul.addr %s299, 10
        %s301 = smul.addr %s300, 8
        %s302 = scalar_lea.vmem %s0, %s301
        %v303 = vld [vmem:[%s302] sm:$0xff]
        %v304 = vld [vmem:[%s302 + $0x8] sm:$0xff]
        %v305 = vld [vmem:[%s302 + $0x10] sm:$0xff]
        %v306 = vld [vmem:[%s302 + $0x18] sm:$0xff]
        %v307 = vld [vmem:[%s302 + $0x20] sm:$0xff]
        %v308 = vld [vmem:[%s302 + $0x28] sm:$0xff]
        %v309 = vld [vmem:[%s302 + $0x30] sm:$0xff]
        %v310 = vld [vmem:[%s302 + $0x38] sm:$0xff]
        %v311 = vld [vmem:[%s302 + $0x40] sm:$0xff]
        %v312 = vld [vmem:[%s302 + $0x48] sm:$0xff]
        %v313 = vld [vmem:[%s1] sm:$0x1f]
        %v314 = vld [vmem:[%s1 + $0x8] sm:$0x1f]
        %vm325 = vcmask 1046528
        %v326 = vrot.slane %v303, 1
        %v327 = vrot.slane %v304, 1
        %v328 = vsel %vm325, %v326, %v327
        %v329 = vrot.slane %v305, 1
        %v330 = vsel %vm325, %v327, %v329
        %v331 = vrot.slane %v306, 1
        %v332 = vsel %vm325, %v329, %v331
        %v333 = vrot.slane %v307, 1
        %v334 = vsel %vm325, %v331, %v333
        %v335 = vrot.slane %v308, 1
        %v336 = vsel %vm325, %v333, %v335
        %v337 = vrot.slane %v309, 1
        %v338 = vsel %vm325, %v335, %v337
        %v339 = vrot.slane %v310, 1
        %v340 = vsel %vm325, %v337, %v339
        %v341 = vrot.slane %v311, 1
        %v342 = vsel %vm325, %v339, %v341
        %v343 = vrot.slane %v312, 1
        %v344 = vsel %vm325, %v341, %v343
        %vm345 = vcmask 39936
        %v346 = vsel %vm345, %v328, 0
        %v348 = vsel %vm345, %v330, 0
        %v350 = vsel %vm345, %v332, 0
        %v352 = vsel %vm345, %v334, 0
        %v354 = vsel %vm345, %v336, 0
        %v356 = vsel %vm345, %v338, 0
        %v358 = vsel %vm345, %v340, 0
        %v360 = vsel %vm345, %v342, 0
        %v362 = vsel %vm345, %v344, 0
        %v364 = vsel %vm345, %v343, 0
        %vm366 = vcmask 1044480
        %v368 = vsel %vm366, %v314, 0
        %370 = vmatpush.msra.mxu0 0.0
        %371 = vmatpush.msra.mxu0 0.0
        %372 = vmatpush.msra.mxu0 0.0
        %373 = vmatpush.msra.mxu0 0.0
        %374 = vmatpush.msra.mxu0 0.0
        %375 = vmatpush.msra.mxu0 0.0
        %376 = vmatpush.msra.mxu0 0.0
        %377 = vmatpush.msra.mxu0 0.0
        %378 = vmatpush.msra.mxu0 0.0
        %379 = vmatpush.msra.mxu0 0.0
        %380 = vmatpush.msra.mxu0 0.0
        %381 = vmatpush.msra.mxu0 0.0
        %382 = vmatpush.msra.mxu0 0.0
        %383 = vmatpush.msra.mxu0 0.0
        %384 = vmatpush.msra.mxu0 0.0
        %385 = vmatpush.msra.mxu0 %v368
        %386 = vmatmul.f32.gmra.mxu0 %v346
        %v387 = vpop.f32.mrf.mxu0
        %v388 = vadd.f32 0.0, %v387
        %389 = vmatmul.f32.gmra.mxu0 %v348
        %v390 = vpop.f32.mrf.mxu0
        %v391 = vadd.f32 0.0, %v390
        %392 = vmatmul.f32.gmra.mxu0 %v350
        %v393 = vpop.f32.mrf.mxu0
        %v394 = vadd.f32 0.0, %v393
        %395 = vmatmul.f32.gmra.mxu0 %v352
        %v396 = vpop.f32.mrf.mxu0
        %v397 = vadd.f32 0.0, %v396
        %398 = vmatmul.f32.gmra.mxu0 %v354
        %v399 = vpop.f32.mrf.mxu0
        %v400 = vadd.f32 0.0, %v399
        %401 = vmatmul.f32.gmra.mxu0 %v356
        %v402 = vpop.f32.mrf.mxu0
        %v403 = vadd.f32 0.0, %v402
        %404 = vmatmul.f32.gmra.mxu0 %v358
        %v405 = vpop.f32.mrf.mxu0
        %v406 = vadd.f32 0.0, %v405
        %407 = vmatmul.f32.gmra.mxu0 %v360
        %v408 = vpop.f32.mrf.mxu0
        %v409 = vadd.f32 0.0, %v408
        %410 = vmatmul.f32.gmra.mxu0 %v362
        %v411 = vpop.f32.mrf.mxu0
        %v412 = vadd.f32 0.0, %v411
        %413 = vmatmul.f32.gmra.mxu0 %v364
        %v414 = vpop.f32.mrf.mxu0
        %v415 = vadd.f32 0.0, %v414
        %416 = vdwg.mxu0
        %v417 = vsel %vm345, %v303, 0
        %v419 = vsel %vm345, %v304, 0
        %v421 = vsel %vm345, %v305, 0
        %v423 = vsel %vm345, %v306, 0
        %v425 = vsel %vm345, %v307, 0
        %v427 = vsel %vm345, %v308, 0
        %v429 = vsel %vm345, %v309, 0
        %v431 = vsel %vm345, %v310, 0
        %v433 = vsel %vm345, %v311, 0
        %v435 = vsel %vm345, %v312, 0
        %v438 = vsel %vm366, %v313, 0
        %440 = vmatpush.msra.mxu0 0.0
        %441 = vmatpush.msra.mxu0 0.0
        %442 = vmatpush.msra.mxu0 0.0
        %443 = vmatpush.msra.mxu0 0.0
        %444 = vmatpush.msra.mxu0 0.0
        %445 = vmatpush.msra.mxu0 0.0
        %446 = vmatpush.msra.mxu0 0.0
        %447 = vmatpush.msra.mxu0 0.0
        %448 = vmatpush.msra.mxu0 0.0
        %449 = vmatpush.msra.mxu0 0.0
        %450 = vmatpush.msra.mxu0 0.0
        %451 = vmatpush.msra.mxu0 0.0
        %452 = vmatpush.msra.mxu0 0.0
        %453 = vmatpush.msra.mxu0 0.0
        %454 = vmatpush.msra.mxu0 0.0
        %455 = vmatpush.msra.mxu0 %v438
        %456 = vmatmul.f32.gmra.mxu0 %v417
        %v457 = vpop.f32.mrf.mxu0
        %v458 = vadd.f32 %v388, %v457
        %459 = vmatmul.f32.gmra.mxu0 %v419
        %v460 = vpop.f32.mrf.mxu0
        %v461 = vadd.f32 %v391, %v460
        %462 = vmatmul.f32.gmra.mxu0 %v421
        %v463 = vpop.f32.mrf.mxu0
        %v464 = vadd.f32 %v394, %v463
        %465 = vmatmul.f32.gmra.mxu0 %v423
        %v466 = vpop.f32.mrf.mxu0
        %v467 = vadd.f32 %v397, %v466
        %468 = vmatmul.f32.gmra.mxu0 %v425
        %v469 = vpop.f32.mrf.mxu0
        %v470 = vadd.f32 %v400, %v469
        %471 = vmatmul.f32.gmra.mxu0 %v427
        %v472 = vpop.f32.mrf.mxu0
        %v473 = vadd.f32 %v403, %v472
        %474 = vmatmul.f32.gmra.mxu0 %v429
        %v475 = vpop.f32.mrf.mxu0
        %v476 = vadd.f32 %v406, %v475
        %477 = vmatmul.f32.gmra.mxu0 %v431
        %v478 = vpop.f32.mrf.mxu0
        %v479 = vadd.f32 %v409, %v478
        %480 = vmatmul.f32.gmra.mxu0 %v433
        %v481 = vpop.f32.mrf.mxu0
        %v482 = vadd.f32 %v412, %v481
        %483 = vmatmul.f32.gmra.mxu0 %v435
        %v484 = vpop.f32.mrf.mxu0
        %v485 = vadd.f32 %v415, %v484
        %486 = vdwg.mxu0
        %vm487 = vcmask 261120
        %v488 = vsel %vm487, %v458, 0.0
        %v489 = vsel %vm487, %v461, 0.0
        %v490 = vadd.f32 %v488, %v489
        %v491 = vsel %vm487, %v464, 0.0
        %v492 = vadd.f32 %v490, %v491
        %v493 = vsel %vm487, %v467, 0.0
        %v494 = vadd.f32 %v492, %v493
        %v495 = vsel %vm487, %v470, 0.0
        %v496 = vadd.f32 %v494, %v495
        %v497 = vsel %vm487, %v473, 0.0
        %v498 = vadd.f32 %v496, %v497
        %v499 = vsel %vm487, %v476, 0.0
        %v500 = vadd.f32 %v498, %v499
        %v501 = vsel %vm487, %v479, 0.0
        %v502 = vadd.f32 %v500, %v501
        %v503 = vsel %vm487, %v482, 0.0
        %v504 = vadd.f32 %v502, %v503
        %vm505 = vcmask 260096
        %v506 = vsel %vm505, %v485, 0.0
        %v507 = vadd.f32 %v504, %v506
        %v508 = vrot.slane %v507, 4
        %v509 = vadd.f32 %v507, %v508
        %v510 = vrot.slane %v509, 2
        %v511 = vadd.f32 %v509, %v510
        %v512 = vrot.slane %v511, 1
        %v513 = vadd.f32 %v511, %v512
        %v514 = vrcp.pop 79.0
        %v515 = vmul.f32 79.0, %v514
        %v516 = vsub.f32 1.0, %v515
        %v517 = vmul.f32 %v514, %v516
        %v518 = vadd.f32 %v514, %v517
        %vm519 = vweird.f32 %v514
        %v520 = vsel %vm519, %v514, %v518
        %v521 = vmul.f32 %v513, %v520
        %v522 = vsub.f32 %v458, %v521
        %v523 = vsub.f32 %v461, %v521
        %v524 = vsub.f32 %v464, %v521
        %v525 = vsub.f32 %v467, %v521
        %v526 = vsub.f32 %v470, %v521
        %v527 = vsub.f32 %v473, %v521
        %v528 = vsub.f32 %v476, %v521
        %v529 = vsub.f32 %v479, %v521
        %v530 = vsub.f32 %v482, %v521
        %v531 = vsub.f32 %v485, %v521
        %v532 = vmul.f32 %v522, %v522
        %v533 = vmul.f32 %v523, %v523
        %v534 = vmul.f32 %v524, %v524
        %v535 = vmul.f32 %v525, %v525
        %v536 = vmul.f32 %v526, %v526
        %v537 = vmul.f32 %v527, %v527
        %v538 = vmul.f32 %v528, %v528
        %v539 = vmul.f32 %v529, %v529
        %v540 = vmul.f32 %v530, %v530
        %v541 = vmul.f32 %v531, %v531
        %v542 = vsel %vm487, %v532, 0.0
        %v543 = vsel %vm487, %v533, 0.0
        %v544 = vadd.f32 %v542, %v543
        %v545 = vsel %vm487, %v534, 0.0
        %v546 = vadd.f32 %v544, %v545
        %v547 = vsel %vm487, %v535, 0.0
        %v548 = vadd.f32 %v546, %v547
        %v549 = vsel %vm487, %v536, 0.0
        %v550 = vadd.f32 %v548, %v549
        %v551 = vsel %vm487, %v537, 0.0
        %v552 = vadd.f32 %v550, %v551
        %v553 = vsel %vm487, %v538, 0.0
        %v554 = vadd.f32 %v552, %v553
        %v555 = vsel %vm487, %v539, 0.0
        %v556 = vadd.f32 %v554, %v555
        %v557 = vsel %vm487, %v540, 0.0
        %v558 = vadd.f32 %v556, %v557
        %v559 = vsel %vm505, %v541, 0.0
        %v560 = vadd.f32 %v558, %v559
        %v561 = vrot.slane %v560, 4
        %v562 = vadd.f32 %v560, %v561
        %v563 = vrot.slane %v562, 2
        %v564 = vadd.f32 %v562, %v563
        %v565 = vrot.slane %v564, 1
        %v566 = vadd.f32 %v564, %v565
        %v567 = vmul.f32 %v566, %v520
        %v568 = vadd.f32 %v567, 1e-05
        %v569 = vrsqrt.pop %v568
        %v570 = vmul.f32 %v569, %v568
        %v571 = vmul.f32 %v570, %v569
        %v572 = vmul.f32 0.5, %v571
        %v573 = vsub.f32 1.5, %v572
        %v574 = vmul.f32 %v569, %v573
        %vm575 = vweird.f32 %v568
        %vm576 = vweird.f32 %v569
        %vm577 = vmor %vm575, %vm576
        %v578 = vsel %vm577, %v569, %v574
        %v579 = vmul.f32 %v522, %v578
        %v580 = vmul.f32 %v523, %v578
        %v581 = vmul.f32 %v524, %v578
        %v582 = vmul.f32 %v525, %v578
        %v583 = vmul.f32 %v526, %v578
        %v584 = vmul.f32 %v527, %v578
        %v585 = vmul.f32 %v528, %v578
        %v586 = vmul.f32 %v529, %v578
        %v587 = vmul.f32 %v530, %v578
        %v588 = vmul.f32 %v531, %v578
        %v589 = vld [vmem:[%s2] sm:$0x1]
        %v590 = vperm.slane %v589, 0
        %v591 = vmul.f32 %v579, %v590
        %v592 = vmul.f32 %v580, %v590
        %v593 = vmul.f32 %v581, %v590
        %v594 = vmul.f32 %v582, %v590
        %v595 = vmul.f32 %v583, %v590
        %v596 = vmul.f32 %v584, %v590
        %v597 = vmul.f32 %v585, %v590
        %v598 = vmul.f32 %v586, %v590
        %v599 = vmul.f32 %v587, %v590
        %v600 = vmul.f32 %v588, %v590
        %v601 = vld [vmem:[%s2 + $0x1] sm:$0x1]
        %v602 = vperm.slane %v601, 0
        %v603 = vadd.f32 %v591, %v602
        %v604 = vadd.f32 %v592, %v602
        %v605 = vadd.f32 %v593, %v602
        %v606 = vadd.f32 %v594, %v602
        %v607 = vadd.f32 %v595, %v602
        %v608 = vadd.f32 %v596, %v602
        %v609 = vadd.f32 %v597, %v602
        %v610 = vadd.f32 %v598, %v602
        %v611 = vadd.f32 %v599, %v602
        %v612 = vadd.f32 %v600, %v602
        %v613 = vmul.f32 %v603, 0.5
        %v614 = vmul.f32 %v604, 0.5
        %v615 = vmul.f32 %v605, 0.5
        %v616 = vmul.f32 %v606, 0.5
        %v617 = vmul.f32 %v607, 0.5
        %v618 = vmul.f32 %v608, 0.5
        %v619 = vmul.f32 %v609, 0.5
        %v620 = vmul.f32 %v610, 0.5
        %v621 = vmul.f32 %v611, 0.5
        %v622 = vmul.f32 %v612, 0.5
        %v623 = vmul.f32 %v603, 0.044715
        %v624 = vmul.f32 %v604, 0.044715
        %v625 = vmul.f32 %v605, 0.044715
        %v626 = vmul.f32 %v606, 0.044715
        %v627 = vmul.f32 %v607, 0.044715
        %v628 = vmul.f32 %v608, 0.044715
        %v629 = vmul.f32 %v609, 0.044715
        %v630 = vmul.f32 %v610, 0.044715
        %v631 = vmul.f32 %v611, 0.044715
        %v632 = vmul.f32 %v612, 0.044715
        %v633 = vmul.f32 %v623, %v603
        %v634 = vmul.f32 %v624, %v604
        %v635 = vmul.f32 %v625, %v605
        %v636 = vmul.f32 %v626, %v606
        %v637 = vmul.f32 %v627, %v607
        %v638 = vmul.f32 %v628, %v608
        %v639 = vmul.f32 %v629, %v609
        %v640 = vmul.f32 %v630, %v610
        %v641 = vmul.f32 %v631, %v611
        %v642 = vmul.f32 %v632, %v612
        %v643 = vmul.f32 %v633, %v603
        %v644 = vmul.f32 %v634, %v604
        %v645 = vmul.f32 %v635, %v605
        %v646 = vmul.f32 %v636, %v606
        %v647 = vmul.f32 %v637, %v607
        %v648 = vmul.f32 %v638, %v608
        %v649 = vmul.f32 %v639, %v609
        %v650 = vmul.f32 %v640, %v610
        %v651 = vmul.f32 %v641, %v611
        %v652 = vmul.f32 %v642, %v612
        %v653 = vadd.f32 %v603, %v643
        %v654 = vadd.f32 %v604, %v644
        %v655 = vadd.f32 %v605, %v645
        %v656 = vadd.f32 %v606, %v646
        %v657 = vadd.f32 %v607, %v647
        %v658 = vadd.f32 %v608, %v648
        %v659 = vadd.f32 %v609, %v649
        %v660 = vadd.f32 %v610, %v650
        %v661 = vadd.f32 %v611, %v651
        %v662 = vadd.f32 %v612, %v652
        %v663 = vmul.f32 %v653, 0.7978846
        %v664 = vmul.f32 %v654, 0.7978846
        %v665 = vmul.f32 %v655, 0.7978846
        %v666 = vmul.f32 %v656, 0.7978846
        %v667 = vmul.f32 %v657, 0.7978846
        %v668 = vmul.f32 %v658, 0.7978846
        %v669 = vmul.f32 %v659, 0.7978846
        %v670 = vmul.f32 %v660, 0.7978846
        %v671 = vmul.f32 %v661, 0.7978846
        %v672 = vmul.f32 %v662, 0.7978846
        %v673 = vtanh.pop %v663
        %v674 = vtanh.pop %v664
        %v675 = vtanh.pop %v665
        %v676 = vtanh.pop %v666
        %v677 = vtanh.pop %v667
        %v678 = vtanh.pop %v668
        %v679 = vtanh.pop %v669
        %v680 = vtanh.pop %v670
        %v681 = vtanh.pop %v671
        %v682 = vtanh.pop %v672
        %v683 = vadd.f32 %v673, 1.0
        %v684 = vadd.f32 %v674, 1.0
        %v685 = vadd.f32 %v675, 1.0
        %v686 = vadd.f32 %v676, 1.0
        %v687 = vadd.f32 %v677, 1.0
        %v688 = vadd.f32 %v678, 1.0
        %v689 = vadd.f32 %v679, 1.0
        %v690 = vadd.f32 %v680, 1.0
        %v691 = vadd.f32 %v681, 1.0
        %v692 = vadd.f32 %v682, 1.0
        %v693 = vmul.f32 %v613, %v683
        %v694 = vmul.f32 %v614, %v684
        %v695 = vmul.f32 %v615, %v685
        %v696 = vmul.f32 %v616, %v686
        %v697 = vmul.f32 %v617, %v687
        %v698 = vmul.f32 %v618, %v688
        %v699 = vmul.f32 %v619, %v689
        %v700 = vmul.f32 %v620, %v690
        %v701 = vmul.f32 %v621, %v691
        %v702 = vmul.f32 %v622, %v692
        %v703 = vlaneseq
        %v704 = vshrl.u32 %v703, 7
        %v705 = vadd.s32 %v704, 8
        %v706 = vadd.s32 %v704, 16
        %v707 = vadd.s32 %v704, 24
        %v708 = vadd.s32 %v704, 32
        %v709 = vlaneseq
        %v710 = vand.u32 %v709, 127
        %v711 = vmul.u32 %v704, 2
        %v712 = vmul.u32 %v705, 2
        %v713 = vmul.u32 %v706, 2
        %v714 = vmul.u32 %v707, 2
        %v715 = vmul.u32 %v708, 2
        %v716 = vsub.s32 %v710, %v711
        %v717 = vsub.s32 %v710, %v712
        %v718 = vsub.s32 %v710, %v713
        %v719 = vsub.s32 %v710, %v714
        %v720 = vsub.s32 %v710, %v715
        %vm721 = vcmp.eq.s32.totalorder %v716, 0
        %vm722 = vcmp.eq.s32.totalorder %v717, 0
        %vm723 = vcmp.eq.s32.totalorder %v718, 0
        %vm724 = vcmp.eq.s32.totalorder %v719, 0
        %vm725 = vcmp.eq.s32.totalorder %v720, 0
        %v726 = vsel %vm721, 1, 0
        %v727 = vsel %vm722, 1, 0
        %v728 = vsel %vm723, 1, 0
        %v729 = vsel %vm724, 1, 0
        %v730 = vsel %vm725, 1, 0
        %v731 = vcvt.s32.f32 %v726
        %v732 = vcvt.s32.f32 %v727
        %v733 = vcvt.s32.f32 %v728
        %v734 = vcvt.s32.f32 %v729
        %v735 = vcvt.s32.f32 %v730
        %vm736 = vcmask 646144
        %v738 = vsel %vm736, %v731, 0
        %v741 = vsel %vm736, %v732, 0
        %v744 = vsel %vm736, %v733, 0
        %v747 = vsel %vm736, %v734, 0
        %v750 = vsel %vm736, %v735, 0
        %v753 = vsel %vm325, %v702, 0
        %755 = vmatpush.msra.mxu0 0.0
        %756 = vmatpush.msra.mxu0 0.0
        %757 = vmatpush.msra.mxu0 0.0
        %758 = vmatpush.msra.mxu0 0.0
        %759 = vmatpush.msra.mxu0 0.0
        %760 = vmatpush.msra.mxu0 0.0
        %761 = vmatpush.msra.mxu0 %v753
        %762 = vmatpush.msra.mxu0 %v701
        %763 = vmatpush.msra.mxu0 %v700
        %764 = vmatpush.msra.mxu0 %v699
        %765 = vmatpush.msra.mxu0 %v698
        %766 = vmatpush.msra.mxu0 %v697
        %767 = vmatpush.msra.mxu0 %v696
        %768 = vmatpush.msra.mxu0 %v695
        %769 = vmatpush.msra.mxu0 %v694
        %770 = vmatpush.msra.mxu0 %v693
        %771 = vmatmul.f32.gmra.mxu0 %v738
        %v772 = vpop.f32.mrf.mxu0
        %v773 = vadd.f32 0.0, %v772
        %774 = vmatmul.f32.gmra.mxu0 %v741
        %v775 = vpop.f32.mrf.mxu0
        %v776 = vadd.f32 0.0, %v775
        %777 = vmatmul.f32.gmra.mxu0 %v744
        %v778 = vpop.f32.mrf.mxu0
        %v779 = vadd.f32 0.0, %v778
        %780 = vmatmul.f32.gmra.mxu0 %v747
        %v781 = vpop.f32.mrf.mxu0
        %v782 = vadd.f32 0.0, %v781
        %783 = vmatmul.f32.gmra.mxu0 %v750
        %v784 = vpop.f32.mrf.mxu0
        %v785 = vadd.f32 0.0, %v784
        %786 = vdwg.mxu0
        %v787 = vld [vmem:[%s1 + $0x10] sm:$0xff]
        %v788 = vld [vmem:[%s1 + $0x18] sm:$0xff]
        %v789 = vld [vmem:[%s1 + $0x20] sm:$0xff]
        %v790 = vld [vmem:[%s1 + $0x28] sm:$0xff]
        %vm791 = vcmp.eq.s32.totalorder %v716, 1
        %vm792 = vcmp.eq.s32.totalorder %v717, 1
        %vm793 = vcmp.eq.s32.totalorder %v718, 1
        %vm794 = vcmp.eq.s32.totalorder %v719, 1
        %vm795 = vcmp.eq.s32.totalorder %v720, 1
        %v796 = vsel %vm791, 1, 0
        %v797 = vsel %vm792, 1, 0
        %v798 = vsel %vm793, 1, 0
        %v799 = vsel %vm794, 1, 0
        %v800 = vsel %vm795, 1, 0
        %v801 = vcvt.s32.f32 %v796
        %v802 = vcvt.s32.f32 %v797
        %v803 = vcvt.s32.f32 %v798
        %v804 = vcvt.s32.f32 %v799
        %v805 = vcvt.s32.f32 %v800
        %v807 = vsel %vm736, %v801, 0
        %v810 = vsel %vm736, %v802, 0
        %v813 = vsel %vm736, %v803, 0
        %v816 = vsel %vm736, %v804, 0
        %v819 = vsel %vm736, %v805, 0
        %821 = vmatpush.msra.mxu0 0.0
        %822 = vmatpush.msra.mxu0 0.0
        %823 = vmatpush.msra.mxu0 0.0
        %824 = vmatpush.msra.mxu0 0.0
        %825 = vmatpush.msra.mxu0 0.0
        %826 = vmatpush.msra.mxu0 0.0
        %827 = vmatpush.msra.mxu0 %v753
        %828 = vmatpush.msra.mxu0 %v701
        %829 = vmatpush.msra.mxu0 %v700
        %830 = vmatpush.msra.mxu0 %v699
        %831 = vmatpush.msra.mxu0 %v698
        %832 = vmatpush.msra.mxu0 %v697
        %833 = vmatpush.msra.mxu0 %v696
        %834 = vmatpush.msra.mxu0 %v695
        %835 = vmatpush.msra.mxu0 %v694
        %836 = vmatpush.msra.mxu0 %v693
        %837 = vmatmul.f32.gmra.mxu0 %v807
        %v838 = vpop.f32.mrf.mxu0
        %v839 = vadd.f32 0.0, %v838
        %840 = vmatmul.f32.gmra.mxu0 %v810
        %v841 = vpop.f32.mrf.mxu0
        %v842 = vadd.f32 0.0, %v841
        %843 = vmatmul.f32.gmra.mxu0 %v813
        %v844 = vpop.f32.mrf.mxu0
        %v845 = vadd.f32 0.0, %v844
        %846 = vmatmul.f32.gmra.mxu0 %v816
        %v847 = vpop.f32.mrf.mxu0
        %v848 = vadd.f32 0.0, %v847
        %849 = vmatmul.f32.gmra.mxu0 %v819
        %v850 = vpop.f32.mrf.mxu0
        %v851 = vadd.f32 0.0, %v850
        %852 = vdwg.mxu0
        %v853 = vld [vmem:[%s1 + $0x30] sm:$0xff]
        %v854 = vld [vmem:[%s1 + $0x38] sm:$0xff]
        %v855 = vld [vmem:[%s1 + $0x40] sm:$0xff]
        %v856 = vld [vmem:[%s1 + $0x48] sm:$0xff]
        %v858 = vsel %vm487, %v839, 0
        %v861 = vsel %vm487, %v842, 0
        %v864 = vsel %vm487, %v845, 0
        %v867 = vsel %vm487, %v848, 0
        %v870 = vsel %vm487, %v851, 0
        %872 = vmatpush.msra.mxu0 0.0
        %873 = vmatpush.msra.mxu0 0.0
        %874 = vmatpush.msra.mxu0 0.0
        %875 = vmatpush.msra.mxu0 0.0
        %876 = vmatpush.msra.mxu0 0.0
        %877 = vmatpush.msra.mxu0 0.0
        %878 = vmatpush.msra.mxu0 0.0
        %879 = vmatpush.msra.mxu0 0.0
        %880 = vmatpush.msra.mxu0 0.0
        %881 = vmatpush.msra.mxu0 0.0
        %882 = vmatpush.msra.mxu0 0.0
        %883 = vmatpush.msra.mxu0 0.0
        %884 = vmatpush.msra.mxu0 %v856
        %885 = vmatpush.msra.mxu0 %v855
        %886 = vmatpush.msra.mxu0 %v854
        %887 = vmatpush.msra.mxu0 %v853
        %888 = vmatmul.f32.gmra.mxu0 %v858
        %v889 = vpop.f32.mrf.mxu0
        %v890 = vadd.f32 0.0, %v889
        %891 = vmatmul.f32.gmra.mxu0 %v861
        %v892 = vpop.f32.mrf.mxu0
        %v893 = vadd.f32 0.0, %v892
        %894 = vmatmul.f32.gmra.mxu0 %v864
        %v895 = vpop.f32.mrf.mxu0
        %v896 = vadd.f32 0.0, %v895
        %897 = vmatmul.f32.gmra.mxu0 %v867
        %v898 = vpop.f32.mrf.mxu0
        %v899 = vadd.f32 0.0, %v898
        %900 = vmatmul.f32.gmra.mxu0 %v870
        %v901 = vpop.f32.mrf.mxu0
        %v902 = vadd.f32 0.0, %v901
        %903 = vdwg.mxu0
        %v905 = vsel %vm487, %v773, 0
        %v908 = vsel %vm487, %v776, 0
        %v911 = vsel %vm487, %v779, 0
        %v914 = vsel %vm487, %v782, 0
        %v917 = vsel %vm487, %v785, 0
        %919 = vmatpush.msra.mxu0 0.0
        %920 = vmatpush.msra.mxu0 0.0
        %921 = vmatpush.msra.mxu0 0.0
        %922 = vmatpush.msra.mxu0 0.0
        %923 = vmatpush.msra.mxu0 0.0
        %924 = vmatpush.msra.mxu0 0.0
        %925 = vmatpush.msra.mxu0 0.0
        %926 = vmatpush.msra.mxu0 0.0
        %927 = vmatpush.msra.mxu0 0.0
        %928 = vmatpush.msra.mxu0 0.0
        %929 = vmatpush.msra.mxu0 0.0
        %930 = vmatpush.msra.mxu0 0.0
        %931 = vmatpush.msra.mxu0 %v790
        %932 = vmatpush.msra.mxu0 %v789
        %933 = vmatpush.msra.mxu0 %v788
        %934 = vmatpush.msra.mxu0 %v787
        %935 = vmatmul.f32.gmra.mxu0 %v905
        %v936 = vpop.f32.mrf.mxu0
        %v937 = vadd.f32 %v890, %v936
        %938 = vmatmul.f32.gmra.mxu0 %v908
        %v939 = vpop.f32.mrf.mxu0
        %v940 = vadd.f32 %v893, %v939
        %941 = vmatmul.f32.gmra.mxu0 %v911
        %v942 = vpop.f32.mrf.mxu0
        %v943 = vadd.f32 %v896, %v942
        %944 = vmatmul.f32.gmra.mxu0 %v914
        %v945 = vpop.f32.mrf.mxu0
        %v946 = vadd.f32 %v899, %v945
        %947 = vmatmul.f32.gmra.mxu0 %v917
        %v948 = vpop.f32.mrf.mxu0
        %v949 = vadd.f32 %v902, %v948
        %950 = vdwg.mxu0
        %vm951 = vcmp.eq.s32.totalorder %v716, 2
        %vm952 = vcmp.eq.s32.totalorder %v717, 2
        %vm953 = vcmp.eq.s32.totalorder %v718, 2
        %vm954 = vcmp.eq.s32.totalorder %v719, 2
        %vm955 = vcmp.eq.s32.totalorder %v720, 2
        %v956 = vsel %vm951, 1, 0
        %v957 = vsel %vm952, 1, 0
        %v958 = vsel %vm953, 1, 0
        %v959 = vsel %vm954, 1, 0
        %v960 = vsel %vm955, 1, 0
        %v961 = vcvt.s32.f32 %v956
        %v962 = vcvt.s32.f32 %v957
        %v963 = vcvt.s32.f32 %v958
        %v964 = vcvt.s32.f32 %v959
        %v965 = vcvt.s32.f32 %v960
        %v967 = vsel %vm736, %v961, 0
        %v970 = vsel %vm736, %v962, 0
        %v973 = vsel %vm736, %v963, 0
        %v976 = vsel %vm736, %v964, 0
        %v979 = vsel %vm736, %v965, 0
        %981 = vmatpush.msra.mxu0 0.0
        %982 = vmatpush.msra.mxu0 0.0
        %983 = vmatpush.msra.mxu0 0.0
        %984 = vmatpush.msra.mxu0 0.0
        %985 = vmatpush.msra.mxu0 0.0
        %986 = vmatpush.msra.mxu0 0.0
        %987 = vmatpush.msra.mxu0 %v753
        %988 = vmatpush.msra.mxu0 %v701
        %989 = vmatpush.msra.mxu0 %v700
        %990 = vmatpush.msra.mxu0 %v699
        %991 = vmatpush.msra.mxu0 %v698
        %992 = vmatpush.msra.mxu0 %v697
        %993 = vmatpush.msra.mxu0 %v696
        %994 = vmatpush.msra.mxu0 %v695
        %995 = vmatpush.msra.mxu0 %v694
        %996 = vmatpush.msra.mxu0 %v693
        %997 = vmatmul.f32.gmra.mxu0 %v967
        %v998 = vpop.f32.mrf.mxu0
        %v999 = vadd.f32 0.0, %v998
        %1000 = vmatmul.f32.gmra.mxu0 %v970
        %v1001 = vpop.f32.mrf.mxu0
        %v1002 = vadd.f32 0.0, %v1001
        %1003 = vmatmul.f32.gmra.mxu0 %v973
        %v1004 = vpop.f32.mrf.mxu0
        %v1005 = vadd.f32 0.0, %v1004
        %1006 = vmatmul.f32.gmra.mxu0 %v976
        %v1007 = vpop.f32.mrf.mxu0
        %v1008 = vadd.f32 0.0, %v1007
        %1009 = vmatmul.f32.gmra.mxu0 %v979
        %v1010 = vpop.f32.mrf.mxu0
        %v1011 = vadd.f32 0.0, %v1010
        %1012 = vdwg.mxu0
        %v1013 = vld [vmem:[%s1 + $0x50] sm:$0xff]
        %v1014 = vld [vmem:[%s1 + $0x58] sm:$0xff]
        %v1015 = vld [vmem:[%s1 + $0x60] sm:$0xff]
        %v1016 = vld [vmem:[%s1 + $0x68] sm:$0xff]
        %v1018 = vsel %vm487, %v999, 0
        %v1021 = vsel %vm487, %v1002, 0
        %v1024 = vsel %vm487, %v1005, 0
        %v1027 = vsel %vm487, %v1008, 0
        %v1030 = vsel %vm487, %v1011, 0
        %1032 = vmatpush.msra.mxu0 0.0
        %1033 = vmatpush.msra.mxu0 0.0
        %1034 = vmatpush.msra.mxu0 0.0
        %1035 = vmatpush.msra.mxu0 0.0
        %1036 = vmatpush.msra.mxu0 0.0
        %1037 = vmatpush.msra.mxu0 0.0
        %1038 = vmatpush.msra.mxu0 0.0
        %1039 = vmatpush.msra.mxu0 0.0
        %1040 = vmatpush.msra.mxu0 0.0
        %1041 = vmatpush.msra.mxu0 0.0
        %1042 = vmatpush.msra.mxu0 0.0
        %1043 = vmatpush.msra.mxu0 0.0
        %1044 = vmatpush.msra.mxu0 %v1016
        %1045 = vmatpush.msra.mxu0 %v1015
        %1046 = vmatpush.msra.mxu0 %v1014
        %1047 = vmatpush.msra.mxu0 %v1013
        %1048 = vmatmul.f32.gmra.mxu0 %v1018
        %v1049 = vpop.f32.mrf.mxu0
        %v1050 = vadd.f32 0.0, %v1049
        %1051 = vmatmul.f32.gmra.mxu0 %v1021
        %v1052 = vpop.f32.mrf.mxu0
        %v1053 = vadd.f32 0.0, %v1052
        %1054 = vmatmul.f32.gmra.mxu0 %v1024
        %v1055 = vpop.f32.mrf.mxu0
        %v1056 = vadd.f32 0.0, %v1055
        %1057 = vmatmul.f32.gmra.mxu0 %v1027
        %v1058 = vpop.f32.mrf.mxu0
        %v1059 = vadd.f32 0.0, %v1058
        %1060 = vmatmul.f32.gmra.mxu0 %v1030
        %v1061 = vpop.f32.mrf.mxu0
        %v1062 = vadd.f32 0.0, %v1061
        %1063 = vdwg.mxu0
        %v1064 = vadd.f32 %v937, %v1050
        %v1065 = vadd.f32 %v940, %v1053
        %v1066 = vadd.f32 %v943, %v1056
        %v1067 = vadd.f32 %v946, %v1059
        %v1068 = vadd.f32 %v949, %v1062
        %v1069 = vmul.f32 %v1064, 0.5
        %v1070 = vmul.f32 %v1065, 0.5
        %v1071 = vmul.f32 %v1066, 0.5
        %v1072 = vmul.f32 %v1067, 0.5
        %v1073 = vmul.f32 %v1068, 0.5
        %v1074 = vmul.f32 %v1064, 0.044715
        %v1075 = vmul.f32 %v1065, 0.044715
        %v1076 = vmul.f32 %v1066, 0.044715
        %v1077 = vmul.f32 %v1067, 0.044715
        %v1078 = vmul.f32 %v1068, 0.044715
        %v1079 = vmul.f32 %v1074, %v1064
        %v1080 = vmul.f32 %v1075, %v1065
        %v1081 = vmul.f32 %v1076, %v1066
        %v1082 = vmul.f32 %v1077, %v1067
        %v1083 = vmul.f32 %v1078, %v1068
        %v1084 = vmul.f32 %v1079, %v1064
        %v1085 = vmul.f32 %v1080, %v1065
        %v1086 = vmul.f32 %v1081, %v1066
        %v1087 = vmul.f32 %v1082, %v1067
        %v1088 = vmul.f32 %v1083, %v1068
        %v1089 = vadd.f32 %v1064, %v1084
        %v1090 = vadd.f32 %v1065, %v1085
        %v1091 = vadd.f32 %v1066, %v1086
        %v1092 = vadd.f32 %v1067, %v1087
        %v1093 = vadd.f32 %v1068, %v1088
        %v1094 = vmul.f32 %v1089, 0.7978846
        %v1095 = vmul.f32 %v1090, 0.7978846
        %v1096 = vmul.f32 %v1091, 0.7978846
        %v1097 = vmul.f32 %v1092, 0.7978846
        %v1098 = vmul.f32 %v1093, 0.7978846
        %v1099 = vtanh.pop %v1094
        %v1100 = vtanh.pop %v1095
        %v1101 = vtanh.pop %v1096
        %v1102 = vtanh.pop %v1097
        %v1103 = vtanh.pop %v1098
        %v1104 = vadd.f32 %v1099, 1.0
        %v1105 = vadd.f32 %v1100, 1.0
        %v1106 = vadd.f32 %v1101, 1.0
        %v1107 = vadd.f32 %v1102, 1.0
        %v1108 = vadd.f32 %v1103, 1.0
        %v1109 = vmul.f32 %v1069, %v1104
        %v1110 = vmul.f32 %v1070, %v1105
        %v1111 = vmul.f32 %v1071, %v1106
        %v1112 = vmul.f32 %v1072, %v1107
        %v1113 = vmul.f32 %v1073, %v1108
        %vm1114 = vcmask 318464
        %v1115 = vsel %vm1114, %v731, 0
        %v1117 = vsel %vm1114, %v732, 0
        %v1119 = vsel %vm1114, %v733, 0
        %v1122 = vsel %vm325, %v1113, 0
        %1124 = vmatpush.msra.mxu0 0.0
        %1125 = vmatpush.msra.mxu0 0.0
        %1126 = vmatpush.msra.mxu0 0.0
        %1127 = vmatpush.msra.mxu0 0.0
        %1128 = vmatpush.msra.mxu0 0.0
        %1129 = vmatpush.msra.mxu0 0.0
        %1130 = vmatpush.msra.mxu0 0.0
        %1131 = vmatpush.msra.mxu0 0.0
        %1132 = vmatpush.msra.mxu0 0.0
        %1133 = vmatpush.msra.mxu0 0.0
        %1134 = vmatpush.msra.mxu0 0.0
        %1135 = vmatpush.msra.mxu0 %v1122
        %1136 = vmatpush.msra.mxu0 %v1112
        %1137 = vmatpush.msra.mxu0 %v1111
        %1138 = vmatpush.msra.mxu0 %v1110
        %1139 = vmatpush.msra.mxu0 %v1109
        %1140 = vmatmul.f32.gmra.mxu0 %v1115
        %v1141 = vpop.f32.mrf.mxu0
        %v1142 = vadd.f32 0.0, %v1141
        %1143 = vmatmul.f32.gmra.mxu0 %v1117
        %v1144 = vpop.f32.mrf.mxu0
        %v1145 = vadd.f32 0.0, %v1144
        %1146 = vmatmul.f32.gmra.mxu0 %v1119
        %v1147 = vpop.f32.mrf.mxu0
        %v1148 = vadd.f32 0.0, %v1147
        %1149 = vdwg.mxu0
        %v1150 = vld [vmem:[%s1 + $0x70] sm:$0xff]
        %v1151 = vld [vmem:[%s1 + $0x78] sm:$0xff]
        %v1152 = vld [vmem:[%s1 + $0x80] sm:$0xff]
        %v1153 = vld [vmem:[%s1 + $0x88] sm:$0xff]
        %v1154 = vsel %vm1114, %v801, 0
        %v1156 = vsel %vm1114, %v802, 0
        %v1158 = vsel %vm1114, %v803, 0
        %1160 = vmatpush.msra.mxu0 0.0
        %1161 = vmatpush.msra.mxu0 0.0
        %1162 = vmatpush.msra.mxu0 0.0
        %1163 = vmatpush.msra.mxu0 0.0
        %1164 = vmatpush.msra.mxu0 0.0
        %1165 = vmatpush.msra.mxu0 0.0
        %1166 = vmatpush.msra.mxu0 0.0
        %1167 = vmatpush.msra.mxu0 0.0
        %1168 = vmatpush.msra.mxu0 0.0
        %1169 = vmatpush.msra.mxu0 0.0
        %1170 = vmatpush.msra.mxu0 0.0
        %1171 = vmatpush.msra.mxu0 %v1122
        %1172 = vmatpush.msra.mxu0 %v1112
        %1173 = vmatpush.msra.mxu0 %v1111
        %1174 = vmatpush.msra.mxu0 %v1110
        %1175 = vmatpush.msra.mxu0 %v1109
        %1176 = vmatmul.f32.gmra.mxu0 %v1154
        %v1177 = vpop.f32.mrf.mxu0
        %v1178 = vadd.f32 0.0, %v1177
        %1179 = vmatmul.f32.gmra.mxu0 %v1156
        %v1180 = vpop.f32.mrf.mxu0
        %v1181 = vadd.f32 0.0, %v1180
        %1182 = vmatmul.f32.gmra.mxu0 %v1158
        %v1183 = vpop.f32.mrf.mxu0
        %v1184 = vadd.f32 0.0, %v1183
        %1185 = vdwg.mxu0
        %v1186 = vld [vmem:[%s1 + $0x90] sm:$0xff]
        %v1187 = vld [vmem:[%s1 + $0x98] sm:$0xff]
        %v1188 = vld [vmem:[%s1 + $0xa0] sm:$0xff]
        %v1189 = vld [vmem:[%s1 + $0xa8] sm:$0xff]
        %v1191 = vsel %vm487, %v1178, 0
        %v1194 = vsel %vm487, %v1181, 0
        %v1197 = vsel %vm487, %v1184, 0
        %1199 = vmatpush.msra.mxu0 0.0
        %1200 = vmatpush.msra.mxu0 0.0
        %1201 = vmatpush.msra.mxu0 0.0
        %1202 = vmatpush.msra.mxu0 0.0
        %1203 = vmatpush.msra.mxu0 0.0
        %1204 = vmatpush.msra.mxu0 0.0
        %1205 = vmatpush.msra.mxu0 0.0
        %1206 = vmatpush.msra.mxu0 0.0
        %1207 = vmatpush.msra.mxu0 0.0
        %1208 = vmatpush.msra.mxu0 0.0
        %1209 = vmatpush.msra.mxu0 0.0
        %1210 = vmatpush.msra.mxu0 0.0
        %1211 = vmatpush.msra.mxu0 %v1189
        %1212 = vmatpush.msra.mxu0 %v1188
        %1213 = vmatpush.msra.mxu0 %v1187
        %1214 = vmatpush.msra.mxu0 %v1186
        %1215 = vmatmul.f32.gmra.mxu0 %v1191
        %v1216 = vpop.f32.mrf.mxu0
        %v1217 = vadd.f32 0.0, %v1216
        %1218 = vmatmul.f32.gmra.mxu0 %v1194
        %v1219 = vpop.f32.mrf.mxu0
        %v1220 = vadd.f32 0.0, %v1219
        %1221 = vmatmul.f32.gmra.mxu0 %v1197
        %v1222 = vpop.f32.mrf.mxu0
        %v1223 = vadd.f32 0.0, %v1222
        %1224 = vdwg.mxu0
        %v1226 = vsel %vm487, %v1142, 0
        %v1229 = vsel %vm487, %v1145, 0
        %v1232 = vsel %vm487, %v1148, 0
        %1234 = vmatpush.msra.mxu0 0.0
        %1235 = vmatpush.msra.mxu0 0.0
        %1236 = vmatpush.msra.mxu0 0.0
        %1237 = vmatpush.msra.mxu0 0.0
        %1238 = vmatpush.msra.mxu0 0.0
        %1239 = vmatpush.msra.mxu0 0.0
        %1240 = vmatpush.msra.mxu0 0.0
        %1241 = vmatpush.msra.mxu0 0.0
        %1242 = vmatpush.msra.mxu0 0.0
        %1243 = vmatpush.msra.mxu0 0.0
        %1244 = vmatpush.msra.mxu0 0.0
        %1245 = vmatpush.msra.mxu0 0.0
        %1246 = vmatpush.msra.mxu0 %v1153
        %1247 = vmatpush.msra.mxu0 %v1152
        %1248 = vmatpush.msra.mxu0 %v1151
        %1249 = vmatpush.msra.mxu0 %v1150
        %1250 = vmatmul.f32.gmra.mxu0 %v1226
        %v1251 = vpop.f32.mrf.mxu0
        %v1252 = vadd.f32 %v1217, %v1251
        %1253 = vmatmul.f32.gmra.mxu0 %v1229
        %v1254 = vpop.f32.mrf.mxu0
        %v1255 = vadd.f32 %v1220, %v1254
        %1256 = vmatmul.f32.gmra.mxu0 %v1232
        %v1257 = vpop.f32.mrf.mxu0
        %v1258 = vadd.f32 %v1223, %v1257
        %1259 = vdwg.mxu0
        %v1260 = vsel %vm1114, %v961, 0
        %v1262 = vsel %vm1114, %v962, 0
        %v1264 = vsel %vm1114, %v963, 0
        %1266 = vmatpush.msra.mxu0 0.0
        %1267 = vmatpush.msra.mxu0 0.0
        %1268 = vmatpush.msra.mxu0 0.0
        %1269 = vmatpush.msra.mxu0 0.0
        %1270 = vmatpush.msra.mxu0 0.0
        %1271 = vmatpush.msra.mxu0 0.0
        %1272 = vmatpush.msra.mxu0 0.0
        %1273 = vmatpush.msra.mxu0 0.0
        %1274 = vmatpush.msra.mxu0 0.0
        %1275 = vmatpush.msra.mxu0 0.0
        %1276 = vmatpush.msra.mxu0 0.0
        %1277 = vmatpush.msra.mxu0 %v1122
        %1278 = vmatpush.msra.mxu0 %v1112
        %1279 = vmatpush.msra.mxu0 %v1111
        %1280 = vmatpush.msra.mxu0 %v1110
        %1281 = vmatpush.msra.mxu0 %v1109
        %1282 = vmatmul.f32.gmra.mxu0 %v1260
        %v1283 = vpop.f32.mrf.mxu0
        %v1284 = vadd.f32 0.0, %v1283
        %1285 = vmatmul.f32.gmra.mxu0 %v1262
        %v1286 = vpop.f32.mrf.mxu0
        %v1287 = vadd.f32 0.0, %v1286
        %1288 = vmatmul.f32.gmra.mxu0 %v1264
        %v1289 = vpop.f32.mrf.mxu0
        %v1290 = vadd.f32 0.0, %v1289
        %1291 = vdwg.mxu0
        %v1292 = vld [vmem:[%s1 + $0xb0] sm:$0xff]
        %v1293 = vld [vmem:[%s1 + $0xb8] sm:$0xff]
        %v1294 = vld [vmem:[%s1 + $0xc0] sm:$0xff]
        %v1295 = vld [vmem:[%s1 + $0xc8] sm:$0xff]
        %v1297 = vsel %vm487, %v1284, 0
        %v1300 = vsel %vm487, %v1287, 0
        %v1303 = vsel %vm487, %v1290, 0
        %1305 = vmatpush.msra.mxu0 0.0
        %1306 = vmatpush.msra.mxu0 0.0
        %1307 = vmatpush.msra.mxu0 0.0
        %1308 = vmatpush.msra.mxu0 0.0
        %1309 = vmatpush.msra.mxu0 0.0
        %1310 = vmatpush.msra.mxu0 0.0
        %1311 = vmatpush.msra.mxu0 0.0
        %1312 = vmatpush.msra.mxu0 0.0
        %1313 = vmatpush.msra.mxu0 0.0
        %1314 = vmatpush.msra.mxu0 0.0
        %1315 = vmatpush.msra.mxu0 0.0
        %1316 = vmatpush.msra.mxu0 0.0
        %1317 = vmatpush.msra.mxu0 %v1295
        %1318 = vmatpush.msra.mxu0 %v1294
        %1319 = vmatpush.msra.mxu0 %v1293
        %1320 = vmatpush.msra.mxu0 %v1292
        %1321 = vmatmul.f32.gmra.mxu0 %v1297
        %v1322 = vpop.f32.mrf.mxu0
        %v1323 = vadd.f32 0.0, %v1322
        %1324 = vmatmul.f32.gmra.mxu0 %v1300
        %v1325 = vpop.f32.mrf.mxu0
        %v1326 = vadd.f32 0.0, %v1325
        %1327 = vmatmul.f32.gmra.mxu0 %v1303
        %v1328 = vpop.f32.mrf.mxu0
        %v1329 = vadd.f32 0.0, %v1328
        %1330 = vdwg.mxu0
        %v1331 = vadd.f32 %v1252, %v1323
        %v1332 = vadd.f32 %v1255, %v1326
        %v1333 = vadd.f32 %v1258, %v1329
        %v1334 = vmul.f32 %v1331, 0.5
        %v1335 = vmul.f32 %v1332, 0.5
        %v1336 = vmul.f32 %v1333, 0.5
        %v1337 = vmul.f32 %v1331, 0.044715
        %v1338 = vmul.f32 %v1332, 0.044715
        %v1339 = vmul.f32 %v1333, 0.044715
        %v1340 = vmul.f32 %v1337, %v1331
        %v1341 = vmul.f32 %v1338, %v1332
        %v1342 = vmul.f32 %v1339, %v1333
        %v1343 = vmul.f32 %v1340, %v1331
        %v1344 = vmul.f32 %v1341, %v1332
        %v1345 = vmul.f32 %v1342, %v1333
        %v1346 = vadd.f32 %v1331, %v1343
        %v1347 = vadd.f32 %v1332, %v1344
        %v1348 = vadd.f32 %v1333, %v1345
        %v1349 = vmul.f32 %v1346, 0.7978846
        %v1350 = vmul.f32 %v1347, 0.7978846
        %v1351 = vmul.f32 %v1348, 0.7978846
        %v1352 = vtanh.pop %v1349
        %v1353 = vtanh.pop %v1350
        %v1354 = vtanh.pop %v1351
        %v1355 = vadd.f32 %v1352, 1.0
        %v1356 = vadd.f32 %v1353, 1.0
        %v1357 = vadd.f32 %v1354, 1.0
        %v1358 = vmul.f32 %v1334, %v1355
        %v1359 = vmul.f32 %v1335, %v1356
        %v1360 = vmul.f32 %v1336, %v1357
        %v1361 = vld [vmem:[%s2 + $0x2] sm:$0x1]
        %v1362 = vld [vmem:[%s2 + $0x3] sm:$0x1]
        %v1363 = vsel %vm487, %v1358, 0.0
        %1364 = vadd.xlane.f32.xlu0 %v1363
        %v1365 = vpop.xlane.xlu0 %1364
        %v1366 = vsel %vm487, %v1359, 0.0
        %1367 = vadd.xlane.f32.xlu0 %v1366
        %v1368 = vpop.xlane.xlu0 %1367
        %vm1369 = vcmask 256000
        %v1370 = vsel %vm1369, %v1360, 0.0
        %1371 = vadd.xlane.f32.xlu0 %v1370
        %v1372 = vpop.xlane.xlu0 %1371
        %v1373 = vrcp.pop 32.0
        %v1374 = vmul.f32 32.0, %v1373
        %v1375 = vsub.f32 1.0, %v1374
        %v1376 = vmul.f32 %v1373, %v1375
        %v1377 = vadd.f32 %v1373, %v1376
        %vm1378 = vweird.f32 %v1373
        %v1379 = vsel %vm1378, %v1373, %v1377
        %v1380 = vmul.f32 %v1365, %v1379
        %v1381 = vmul.f32 %v1368, %v1379
        %v1382 = vmul.f32 %v1372, %v1379
        %v1383 = vsub.f32 %v1358, %v1380
        %v1384 = vsub.f32 %v1359, %v1381
        %v1385 = vsub.f32 %v1360, %v1382
        %v1386 = vmul.f32 %v1383, %v1383
        %v1387 = vmul.f32 %v1384, %v1384
        %v1388 = vmul.f32 %v1385, %v1385
        %v1389 = vsel %vm487, %v1386, 0.0
        %1390 = vadd.xlane.f32.xlu0 %v1389
        %v1391 = vpop.xlane.xlu0 %1390
        %v1392 = vsel %vm487, %v1387, 0.0
        %1393 = vadd.xlane.f32.xlu0 %v1392
        %v1394 = vpop.xlane.xlu0 %1393
        %v1395 = vsel %vm1369, %v1388, 0.0
        %1396 = vadd.xlane.f32.xlu0 %v1395
        %v1397 = vpop.xlane.xlu0 %1396
        %v1398 = vmul.f32 %v1391, %v1379
        %v1399 = vmul.f32 %v1394, %v1379
        %v1400 = vmul.f32 %v1397, %v1379
        %v1401 = vadd.f32 %v1398, 1e-05
        %v1402 = vadd.f32 %v1399, 1e-05
        %v1403 = vadd.f32 %v1400, 1e-05
        %v1404 = vrsqrt.pop %v1401
        %v1405 = vmul.f32 %v1404, %v1401
        %v1406 = vmul.f32 %v1405, %v1404
        %v1407 = vmul.f32 0.5, %v1406
        %v1408 = vsub.f32 1.5, %v1407
        %v1409 = vmul.f32 %v1404, %v1408
        %vm1410 = vweird.f32 %v1401
        %vm1411 = vweird.f32 %v1404
        %vm1412 = vmor %vm1410, %vm1411
        %v1413 = vsel %vm1412, %v1404, %v1409
        %v1414 = vrsqrt.pop %v1402
        %v1415 = vmul.f32 %v1414, %v1402
        %v1416 = vmul.f32 %v1415, %v1414
        %v1417 = vmul.f32 0.5, %v1416
        %v1418 = vsub.f32 1.5, %v1417
        %v1419 = vmul.f32 %v1414, %v1418
        %vm1420 = vweird.f32 %v1402
        %vm1421 = vweird.f32 %v1414
        %vm1422 = vmor %vm1420, %vm1421
        %v1423 = vsel %vm1422, %v1414, %v1419
        %v1424 = vrsqrt.pop %v1403
        %v1425 = vmul.f32 %v1424, %v1403
        %v1426 = vmul.f32 %v1425, %v1424
        %v1427 = vmul.f32 0.5, %v1426
        %v1428 = vsub.f32 1.5, %v1427
        %v1429 = vmul.f32 %v1424, %v1428
        %vm1430 = vweird.f32 %v1403
        %vm1431 = vweird.f32 %v1424
        %vm1432 = vmor %vm1430, %vm1431
        %v1433 = vsel %vm1432, %v1424, %v1429
        %v1434 = vmul.f32 %v1383, %v1413
        %v1435 = vmul.f32 %v1384, %v1423
        %v1436 = vmul.f32 %v1385, %v1433
        %v1437 = vperm.slane %v1361, 0
        %v1438 = vmul.f32 %v1434, %v1437
        %v1439 = vmul.f32 %v1435, %v1437
        %v1440 = vmul.f32 %v1436, %v1437
        %v1441 = vperm.slane %v1362, 0
        %v1442 = vadd.f32 %v1438, %v1441
        %v1443 = vadd.f32 %v1439, %v1441
        %v1444 = vadd.f32 %v1440, %v1441
        %v1445 = vld [vmem:[%s1 + $0xd0] sm:$0xff]
        %v1446 = vld [vmem:[%s1 + $0xd8] sm:$0xff]
        %v1447 = vld [vmem:[%s1 + $0xe0] sm:$0xff]
        %v1448 = vld [vmem:[%s1 + $0xe8] sm:$0xff]
        %v1449 = vld [vmem:[%s2 + $0x4] sm:$0x1]
        %v1450 = vperm.slane %v1449, 0
        %v1452 = vsel %vm487, %v1442, 0
        %v1455 = vsel %vm487, %v1443, 0
        %v1458 = vsel %vm487, %v1444, 0
        %1460 = vmatpush.msra.mxu0 0.0
        %1461 = vmatpush.msra.mxu0 0.0
        %1462 = vmatpush.msra.mxu0 0.0
        %1463 = vmatpush.msra.mxu0 0.0
        %1464 = vmatpush.msra.mxu0 0.0
        %1465 = vmatpush.msra.mxu0 0.0
        %1466 = vmatpush.msra.mxu0 0.0
        %1467 = vmatpush.msra.mxu0 0.0
        %1468 = vmatpush.msra.mxu0 0.0
        %1469 = vmatpush.msra.mxu0 0.0
        %1470 = vmatpush.msra.mxu0 0.0
        %1471 = vmatpush.msra.mxu0 0.0
        %1472 = vmatpush.msra.mxu0 %v1448
        %1473 = vmatpush.msra.mxu0 %v1447
        %1474 = vmatpush.msra.mxu0 %v1446
        %1475 = vmatpush.msra.mxu0 %v1445
        %1476 = vmatmul.f32.gmra.mxu0 %v1452
        %v1477 = vpop.f32.mrf.mxu0
        %v1478 = vadd.f32 %v1450, %v1477
        %1479 = vmatmul.f32.gmra.mxu0 %v1455
        %v1480 = vpop.f32.mrf.mxu0
        %v1481 = vadd.f32 %v1450, %v1480
        %1482 = vmatmul.f32.gmra.mxu0 %v1458
        %v1483 = vpop.f32.mrf.mxu0
        %v1484 = vadd.f32 %v1450, %v1483
        %1485 = vdwg.mxu0
        %v1486 = vld [vmem:[%s1 + $0x110] sm:$0xff]
        %v1487 = vld [vmem:[%s1 + $0x118] sm:$0xff]
        %v1488 = vld [vmem:[%s1 + $0x120] sm:$0xff]
        %v1489 = vld [vmem:[%s1 + $0x128] sm:$0xff]
        %v1490 = vadd.s32 %v704, 4294967295
        %v1491 = vadd.s32 %v705, 4294967295
        %v1492 = vadd.s32 %v706, 4294967295
        %vm1493 = vcmp.eq.s32.totalorder %v710, %v1490
        %vm1494 = vcmp.eq.s32.totalorder %v710, %v1491
        %vm1495 = vcmp.eq.s32.totalorder %v710, %v1492
        %v1496 = vsel %vm1493, 1, 0
        %v1497 = vsel %vm1494, 1, 0
        %v1498 = vsel %vm1495, 1, 0
        %v1499 = vcvt.s32.f32 %v1496
        %v1500 = vcvt.s32.f32 %v1497
        %v1501 = vcvt.s32.f32 %v1498
        %vm1502 = vcmask 154624
        %v1504 = vsel %vm1502, %v1499, 0
        %v1507 = vsel %vm1502, %v1500, 0
        %v1510 = vsel %vm1502, %v1501, 0
        %vm1512 = vcmask 1042432
        %v1514 = vsel %vm1512, %v1484, 0
        %1516 = vmatpush.msra.mxu0 0.0
        %1517 = vmatpush.msra.mxu0 0.0
        %1518 = vmatpush.msra.mxu0 0.0
        %1519 = vmatpush.msra.mxu0 0.0
        %1520 = vmatpush.msra.mxu0 0.0
        %1521 = vmatpush.msra.mxu0 0.0
        %1522 = vmatpush.msra.mxu0 0.0
        %1523 = vmatpush.msra.mxu0 0.0
        %1524 = vmatpush.msra.mxu0 0.0
        %1525 = vmatpush.msra.mxu0 0.0
        %1526 = vmatpush.msra.mxu0 0.0
        %1527 = vmatpush.msra.mxu0 0.0
        %1528 = vmatpush.msra.mxu0 0.0
        %1529 = vmatpush.msra.mxu0 %v1514
        %1530 = vmatpush.msra.mxu0 %v1481
        %1531 = vmatpush.msra.mxu0 %v1478
        %1532 = vmatmul.f32.gmra.mxu0 %v1504
        %v1533 = vpop.f32.mrf.mxu0
        %v1534 = vadd.f32 0.0, %v1533
        %1535 = vmatmul.f32.gmra.mxu0 %v1507
        %v1536 = vpop.f32.mrf.mxu0
        %v1537 = vadd.f32 0.0, %v1536
        %1538 = vmatmul.f32.gmra.mxu0 %v1510
        %v1539 = vpop.f32.mrf.mxu0
        %v1540 = vadd.f32 0.0, %v1539
        %1541 = vdwg.mxu0
        %v1542 = vld [vmem:[%s1 + $0xf0] sm:$0xff]
        %v1543 = vld [vmem:[%s1 + $0xf8] sm:$0xff]
        %v1544 = vld [vmem:[%s1 + $0x100] sm:$0xff]
        %v1545 = vld [vmem:[%s1 + $0x108] sm:$0xff]
        %v1547 = vsel %vm487, %v1534, 0
        %v1550 = vsel %vm487, %v1537, 0
        %v1553 = vsel %vm487, %v1540, 0
        %1555 = vmatpush.msra.mxu0 0.0
        %1556 = vmatpush.msra.mxu0 0.0
        %1557 = vmatpush.msra.mxu0 0.0
        %1558 = vmatpush.msra.mxu0 0.0
        %1559 = vmatpush.msra.mxu0 0.0
        %1560 = vmatpush.msra.mxu0 0.0
        %1561 = vmatpush.msra.mxu0 0.0
        %1562 = vmatpush.msra.mxu0 0.0
        %1563 = vmatpush.msra.mxu0 0.0
        %1564 = vmatpush.msra.mxu0 0.0
        %1565 = vmatpush.msra.mxu0 0.0
        %1566 = vmatpush.msra.mxu0 0.0
        %1567 = vmatpush.msra.mxu0 %v1545
        %1568 = vmatpush.msra.mxu0 %v1544
        %1569 = vmatpush.msra.mxu0 %v1543
        %1570 = vmatpush.msra.mxu0 %v1542
        %1571 = vmatmul.f32.gmra.mxu0 %v1547
        %v1572 = vpop.f32.mrf.mxu0
        %v1573 = vadd.f32 0.0, %v1572
        %1574 = vmatmul.f32.gmra.mxu0 %v1550
        %v1575 = vpop.f32.mrf.mxu0
        %v1576 = vadd.f32 0.0, %v1575
        %1577 = vmatmul.f32.gmra.mxu0 %v1553
        %v1578 = vpop.f32.mrf.mxu0
        %v1579 = vadd.f32 0.0, %v1578
        %1580 = vdwg.mxu0
        %v1582 = vsel %vm487, %v1478, 0
        %v1585 = vsel %vm487, %v1481, 0
        %v1587 = vsel %vm487, %v1484, 0
        %1589 = vmatpush.msra.mxu0 0.0
        %1590 = vmatpush.msra.mxu0 0.0
        %1591 = vmatpush.msra.mxu0 0.0
        %1592 = vmatpush.msra.mxu0 0.0
        %1593 = vmatpush.msra.mxu0 0.0
        %1594 = vmatpush.msra.mxu0 0.0
        %1595 = vmatpush.msra.mxu0 0.0
        %1596 = vmatpush.msra.mxu0 0.0
        %1597 = vmatpush.msra.mxu0 0.0
        %1598 = vmatpush.msra.mxu0 0.0
        %1599 = vmatpush.msra.mxu0 0.0
        %1600 = vmatpush.msra.mxu0 0.0
        %1601 = vmatpush.msra.mxu0 %v1489
        %1602 = vmatpush.msra.mxu0 %v1488
        %1603 = vmatpush.msra.mxu0 %v1487
        %1604 = vmatpush.msra.mxu0 %v1486
        %1605 = vmatmul.f32.gmra.mxu0 %v1582
        %v1606 = vpop.f32.mrf.mxu0
        %v1607 = vadd.f32 %v1573, %v1606
        %1608 = vmatmul.f32.gmra.mxu0 %v1585
        %v1609 = vpop.f32.mrf.mxu0
        %v1610 = vadd.f32 %v1576, %v1609
        %1611 = vmatmul.f32.gmra.mxu0 %v1587
        %v1612 = vpop.f32.mrf.mxu0
        %v1613 = vadd.f32 %v1579, %v1612
        %1614 = vdwg.mxu0
        %v1615 = vadd.s32 %v704, 1
        %v1616 = vadd.s32 %v705, 1
        %v1617 = vadd.s32 %v706, 1
        %vm1618 = vcmp.eq.s32.totalorder %v710, %v1615
        %vm1619 = vcmp.eq.s32.totalorder %v710, %v1616
        %vm1620 = vcmp.eq.s32.totalorder %v710, %v1617
        %v1621 = vsel %vm1618, 1, 0
        %v1622 = vsel %vm1619, 1, 0
        %v1623 = vsel %vm1620, 1, 0
        %v1624 = vcvt.s32.f32 %v1621
        %v1625 = vcvt.s32.f32 %v1622
        %v1626 = vcvt.s32.f32 %v1623
        %v1628 = vsel %vm1502, %v1624, 0
        %v1631 = vsel %vm1502, %v1625, 0
        %v1634 = vsel %vm1502, %v1626, 0
        %1636 = vmatpush.msra.mxu0 0.0
        %1637 = vmatpush.msra.mxu0 0.0
        %1638 = vmatpush.msra.mxu0 0.0
        %1639 = vmatpush.msra.mxu0 0.0
        %1640 = vmatpush.msra.mxu0 0.0
        %1641 = vmatpush.msra.mxu0 0.0
        %1642 = vmatpush.msra.mxu0 0.0
        %1643 = vmatpush.msra.mxu0 0.0
        %1644 = vmatpush.msra.mxu0 0.0
        %1645 = vmatpush.msra.mxu0 0.0
        %1646 = vmatpush.msra.mxu0 0.0
        %1647 = vmatpush.msra.mxu0 0.0
        %1648 = vmatpush.msra.mxu0 0.0
        %1649 = vmatpush.msra.mxu0 %v1514
        %1650 = vmatpush.msra.mxu0 %v1481
        %1651 = vmatpush.msra.mxu0 %v1478
        %1652 = vmatmul.f32.gmra.mxu0 %v1628
        %v1653 = vpop.f32.mrf.mxu0
        %v1654 = vadd.f32 0.0, %v1653
        %1655 = vmatmul.f32.gmra.mxu0 %v1631
        %v1656 = vpop.f32.mrf.mxu0
        %v1657 = vadd.f32 0.0, %v1656
        %1658 = vmatmul.f32.gmra.mxu0 %v1634
        %v1659 = vpop.f32.mrf.mxu0
        %v1660 = vadd.f32 0.0, %v1659
        %1661 = vdwg.mxu0
        %v1662 = vld [vmem:[%s1 + $0x130] sm:$0xff]
        %v1663 = vld [vmem:[%s1 + $0x138] sm:$0xff]
        %v1664 = vld [vmem:[%s1 + $0x140] sm:$0xff]
        %v1665 = vld [vmem:[%s1 + $0x148] sm:$0xff]
        %v1667 = vsel %vm487, %v1654, 0
        %v1670 = vsel %vm487, %v1657, 0
        %v1673 = vsel %vm487, %v1660, 0
        %1675 = vmatpush.msra.mxu0 0.0
        %1676 = vmatpush.msra.mxu0 0.0
        %1677 = vmatpush.msra.mxu0 0.0
        %1678 = vmatpush.msra.mxu0 0.0
        %1679 = vmatpush.msra.mxu0 0.0
        %1680 = vmatpush.msra.mxu0 0.0
        %1681 = vmatpush.msra.mxu0 0.0
        %1682 = vmatpush.msra.mxu0 0.0
        %1683 = vmatpush.msra.mxu0 0.0
        %1684 = vmatpush.msra.mxu0 0.0
        %1685 = vmatpush.msra.mxu0 0.0
        %1686 = vmatpush.msra.mxu0 0.0
        %1687 = vmatpush.msra.mxu0 %v1665
        %1688 = vmatpush.msra.mxu0 %v1664
        %1689 = vmatpush.msra.mxu0 %v1663
        %1690 = vmatpush.msra.mxu0 %v1662
        %1691 = vmatmul.f32.gmra.mxu0 %v1667
        %v1692 = vpop.f32.mrf.mxu0
        %v1693 = vadd.f32 0.0, %v1692
        %1694 = vmatmul.f32.gmra.mxu0 %v1670
        %v1695 = vpop.f32.mrf.mxu0
        %v1696 = vadd.f32 0.0, %v1695
        %1697 = vmatmul.f32.gmra.mxu0 %v1673
        %v1698 = vpop.f32.mrf.mxu0
        %v1699 = vadd.f32 0.0, %v1698
        %1700 = vdwg.mxu0
        %v1701 = vadd.f32 %v1607, %v1693
        %v1702 = vadd.f32 %v1610, %v1696
        %v1703 = vadd.f32 %v1613, %v1699
        %v1704 = vld [vmem:[%s2 + $0x5] sm:$0x1]
        %v1705 = vperm.slane %v1704, 0
        %v1706 = vadd.f32 %v1701, %v1705
        %v1707 = vadd.f32 %v1702, %v1705
        %v1708 = vadd.f32 %v1703, %v1705
        %v1709 = vmul.f32 %v1706, 0.5
        %v1710 = vmul.f32 %v1707, 0.5
        %v1711 = vmul.f32 %v1708, 0.5
        %v1712 = vmul.f32 %v1706, 0.044715
        %v1713 = vmul.f32 %v1707, 0.044715
        %v1714 = vmul.f32 %v1708, 0.044715
        %v1715 = vmul.f32 %v1712, %v1706
        %v1716 = vmul.f32 %v1713, %v1707
        %v1717 = vmul.f32 %v1714, %v1708
        %v1718 = vmul.f32 %v1715, %v1706
        %v1719 = vmul.f32 %v1716, %v1707
        %v1720 = vmul.f32 %v1717, %v1708
        %v1721 = vadd.f32 %v1706, %v1718
        %v1722 = vadd.f32 %v1707, %v1719
        %v1723 = vadd.f32 %v1708, %v1720
        %v1724 = vmul.f32 %v1721, 0.7978846
        %v1725 = vmul.f32 %v1722, 0.7978846
        %v1726 = vmul.f32 %v1723, 0.7978846
        %v1727 = vtanh.pop %v1724
        %v1728 = vtanh.pop %v1725
        %v1729 = vtanh.pop %v1726
        %v1730 = vadd.f32 %v1727, 1.0
        %v1731 = vadd.f32 %v1728, 1.0
        %v1732 = vadd.f32 %v1729, 1.0
        %v1733 = vmul.f32 %v1709, %v1730
        %v1734 = vmul.f32 %v1710, %v1731
        %v1735 = vmul.f32 %v1711, %v1732
        %v1736 = vadd.f32 %v1478, %v1733
        %v1737 = vadd.f32 %v1481, %v1734
        %v1738 = vadd.f32 %v1484, %v1735
        %v1739 = vld [vmem:[%s2 + $0x6] sm:$0x1]
        %v1740 = vld [vmem:[%s2 + $0x7] sm:$0x1]
        %v1741 = vsel %vm487, %v1736, 0.0
        %1742 = vadd.xlane.f32.xlu0 %v1741
        %v1743 = vpop.xlane.xlu0 %1742
        %v1744 = vsel %vm487, %v1737, 0.0
        %1745 = vadd.xlane.f32.xlu0 %v1744
        %v1746 = vpop.xlane.xlu0 %1745
        %v1747 = vsel %vm1369, %v1738, 0.0
        %1748 = vadd.xlane.f32.xlu0 %v1747
        %v1749 = vpop.xlane.xlu0 %1748
        %v1750 = vmul.f32 %v1743, %v1379
        %v1751 = vmul.f32 %v1746, %v1379
        %v1752 = vmul.f32 %v1749, %v1379
        %v1753 = vsub.f32 %v1736, %v1750
        %v1754 = vsub.f32 %v1737, %v1751
        %v1755 = vsub.f32 %v1738, %v1752
        %v1756 = vmul.f32 %v1753, %v1753
        %v1757 = vmul.f32 %v1754, %v1754
        %v1758 = vmul.f32 %v1755, %v1755
        %v1759 = vsel %vm487, %v1756, 0.0
        %1760 = vadd.xlane.f32.xlu0 %v1759
        %v1761 = vpop.xlane.xlu0 %1760
        %v1762 = vsel %vm487, %v1757, 0.0
        %1763 = vadd.xlane.f32.xlu0 %v1762
        %v1764 = vpop.xlane.xlu0 %1763
        %v1765 = vsel %vm1369, %v1758, 0.0
        %1766 = vadd.xlane.f32.xlu0 %v1765
        %v1767 = vpop.xlane.xlu0 %1766
        %v1768 = vmul.f32 %v1761, %v1379
        %v1769 = vmul.f32 %v1764, %v1379
        %v1770 = vmul.f32 %v1767, %v1379
        %v1771 = vadd.f32 %v1768, 1e-05
        %v1772 = vadd.f32 %v1769, 1e-05
        %v1773 = vadd.f32 %v1770, 1e-05
        %v1774 = vrsqrt.pop %v1771
        %v1775 = vmul.f32 %v1774, %v1771
        %v1776 = vmul.f32 %v1775, %v1774
        %v1777 = vmul.f32 0.5, %v1776
        %v1778 = vsub.f32 1.5, %v1777
        %v1779 = vmul.f32 %v1774, %v1778
        %vm1780 = vweird.f32 %v1771
        %vm1781 = vweird.f32 %v1774
        %vm1782 = vmor %vm1780, %vm1781
        %v1783 = vsel %vm1782, %v1774, %v1779
        %v1784 = vrsqrt.pop %v1772
        %v1785 = vmul.f32 %v1784, %v1772
        %v1786 = vmul.f32 %v1785, %v1784
        %v1787 = vmul.f32 0.5, %v1786
        %v1788 = vsub.f32 1.5, %v1787
        %v1789 = vmul.f32 %v1784, %v1788
        %vm1790 = vweird.f32 %v1772
        %vm1791 = vweird.f32 %v1784
        %vm1792 = vmor %vm1790, %vm1791
        %v1793 = vsel %vm1792, %v1784, %v1789
        %v1794 = vrsqrt.pop %v1773
        %v1795 = vmul.f32 %v1794, %v1773
        %v1796 = vmul.f32 %v1795, %v1794
        %v1797 = vmul.f32 0.5, %v1796
        %v1798 = vsub.f32 1.5, %v1797
        %v1799 = vmul.f32 %v1794, %v1798
        %vm1800 = vweird.f32 %v1773
        %vm1801 = vweird.f32 %v1794
        %vm1802 = vmor %vm1800, %vm1801
        %v1803 = vsel %vm1802, %v1794, %v1799
        %v1804 = vmul.f32 %v1753, %v1783
        %v1805 = vmul.f32 %v1754, %v1793
        %v1806 = vmul.f32 %v1755, %v1803
        %v1807 = vperm.slane %v1739, 0
        %v1808 = vmul.f32 %v1804, %v1807
        %v1809 = vmul.f32 %v1805, %v1807
        %v1810 = vmul.f32 %v1806, %v1807
        %v1811 = vperm.slane %v1740, 0
        %v1812 = vadd.f32 %v1808, %v1811
        %v1813 = vadd.f32 %v1809, %v1811
        %v1814 = vadd.f32 %v1810, %v1811
        %v1815 = vld [vmem:[%s7] sm:$0xff]
        %v1816 = vld [vmem:[%s3] sm:$0xff]
        %v1817 = vld [vmem:[%s3 + $0x8] sm:$0xff]
        %v1818 = vld [vmem:[%s3 + $0x10] sm:$0xff]
        %v1819 = vld [vmem:[%s3 + $0x18] sm:$0xff]
        %v1820 = vperm.slane %v1815, 0
        %v1822 = vsel %vm487, %v1812, 0
        %v1825 = vsel %vm487, %v1813, 0
        %v1828 = vsel %vm487, %v1814, 0
        %1830 = vmatpush.msra.mxu0 0.0
        %1831 = vmatpush.msra.mxu0 0.0
        %1832 = vmatpush.msra.mxu0 0.0
        %1833 = vmatpush.msra.mxu0 0.0
        %1834 = vmatpush.msra.mxu0 0.0
        %1835 = vmatpush.msra.mxu0 0.0
        %1836 = vmatpush.msra.mxu0 0.0
        %1837 = vmatpush.msra.mxu0 0.0
        %1838 = vmatpush.msra.mxu0 0.0
        %1839 = vmatpush.msra.mxu0 0.0
        %1840 = vmatpush.msra.mxu0 0.0
        %1841 = vmatpush.msra.mxu0 0.0
        %1842 = vmatpush.msra.mxu0 %v1819
        %1843 = vmatpush.msra.mxu0 %v1818
        %1844 = vmatpush.msra.mxu0 %v1817
        %1845 = vmatpush.msra.mxu0 %v1816
        %1846 = vmatmul.f32.gmra.mxu0 %v1822
        %v1847 = vpop.f32.mrf.mxu0
        %v1848 = vadd.f32 %v1820, %v1847
        %1849 = vmatmul.f32.gmra.mxu0 %v1825
        %v1850 = vpop.f32.mrf.mxu0
        %v1851 = vadd.f32 %v1820, %v1850
        %1852 = vmatmul.f32.gmra.mxu0 %v1828
        %v1853 = vpop.f32.mrf.mxu0
        %v1854 = vadd.f32 %v1820, %v1853
        %1855 = vdwg.mxu0
        %1859 = vrot.lane.b32.xlu0 %v1848, 120
        %v1860 = vpop.permute.xlu0 %1859
        %1861 = vrot.lane.b32.xlu0 %v1851, 120
        %v1862 = vpop.permute.xlu0 %1861
        %1863 = vrot.lane.b32.xlu0 %v1854, 120
        %v1864 = vpop.permute.xlu0 %1863
        %vm1865 = vcmask 64512
        %v1866 = vsel %vm1865, %v1848, 0
        %v1868 = vsel %vm1865, %v1851, 0
        %v1870 = vsel %vm1865, %v1854, 0
        %v1872 = vsel %vm1865, %v1860, 0
        %v1874 = vsel %vm1865, %v1862, 0
        %v1876 = vsel %vm1865, %v1864, 0
        %1878 = vmatpush.xpose.msra.mxu0 0.0
        %1879 = vmatpush.xpose.msra.mxu0 0.0
        %1880 = vmatpush.xpose.msra.mxu0 0.0
        %1881 = vmatpush.xpose.msra.mxu0 0.0
        %1882 = vmatpush.xpose.msra.mxu0 0.0
        %1883 = vmatpush.xpose.msra.mxu0 0.0
        %1884 = vmatpush.xpose.msra.mxu0 0.0
        %1885 = vmatpush.xpose.msra.mxu0 0.0
        %1886 = vmatpush.xpose.msra.mxu0 0.0
        %1887 = vmatpush.xpose.msra.mxu0 0.0
        %1888 = vmatpush.xpose.msra.mxu0 0.0
        %1889 = vmatpush.xpose.msra.mxu0 0.0
        %1890 = vmatpush.xpose.msra.mxu0 0.0
        %1891 = vmatpush.xpose.msra.mxu0 %v1876
        %1892 = vmatpush.xpose.msra.mxu0 %v1874
        %1893 = vmatpush.xpose.msra.mxu0 %v1872
        %1894 = vmatmul.f32.gmra.mxu0 %v1866
        %v1895 = vpop.f32.mrf.mxu0
        %v1896 = vadd.f32 0.0, %v1895
        %1897 = vmatmul.f32.gmra.mxu0 %v1868
        %v1898 = vpop.f32.mrf.mxu0
        %v1899 = vadd.f32 0.0, %v1898
        %1900 = vmatmul.f32.gmra.mxu0 %v1870
        %v1901 = vpop.f32.mrf.mxu0
        %v1902 = vadd.f32 0.0, %v1901
        %1903 = vdwg.mxu0
        %v1904 = vsel %vm1502, %v1896, -inf
        %1905 = vmax.xlane.f32.xlu0 %v1904
        %v1906 = vpop.xlane.xlu0 %1905
        %v1907 = vsel %vm1502, %v1899, -inf
        %1908 = vmax.xlane.f32.xlu0 %v1907
        %v1909 = vpop.xlane.xlu0 %1908
        %vm1910 = vcmask 149504
        %v1911 = vsel %vm1910, %v1902, -inf
        %1912 = vmax.xlane.f32.xlu0 %v1911
        %v1913 = vpop.xlane.xlu0 %1912
        %v1914 = vsub.f32 %v1896, %v1906
        %v1915 = vsub.f32 %v1899, %v1909
        %v1916 = vsub.f32 %v1902, %v1913
        %v1917 = vmul.f32 %v1914, 1.442695
        %v1918 = vpow.pop %v1917
        %v1919 = vmul.f32 %v1915, 1.442695
        %v1920 = vpow.pop %v1919
        %v1921 = vmul.f32 %v1916, 1.442695
        %v1922 = vpow.pop %v1921
        %v1923 = vsel %vm1502, %v1918, 0.0
        %1924 = vadd.xlane.f32.xlu0 %v1923
        %v1925 = vpop.xlane.xlu0 %1924
        %v1926 = vsel %vm1502, %v1920, 0.0
        %1927 = vadd.xlane.f32.xlu0 %v1926
        %v1928 = vpop.xlane.xlu0 %1927
        %v1929 = vsel %vm1910, %v1922, 0.0
        %1930 = vadd.xlane.f32.xlu0 %v1929
        %v1931 = vpop.xlane.xlu0 %1930
        %v1932 = vrcp.pop %v1925
        %v1933 = vrcp.pop %v1928
        %v1934 = vrcp.pop %v1931
        %v1935 = vmul.f32 %v1918, %v1932
        %v1936 = vmul.f32 %v1920, %v1933
        %v1937 = vmul.f32 %v1922, %v1934
        %1938 = vrot.lane.b32.xlu0 %v1848, 112
        %v1939 = vpop.permute.xlu0 %1938
        %1940 = vrot.lane.b32.xlu0 %v1851, 112
        %v1941 = vpop.permute.xlu0 %1940
        %1942 = vrot.lane.b32.xlu0 %v1854, 112
        %v1943 = vpop.permute.xlu0 %1942
        %v1947 = vsel %vm1502, %v1935, 0
        %v1950 = vsel %vm1502, %v1936, 0
        %v1953 = vsel %vm1502, %v1937, 0
        %v1955 = vsel %vm1512, %v1943, 0
        %1957 = vmatpush.msra.mxu0 0.0
        %1958 = vmatpush.msra.mxu0 0.0
        %1959 = vmatpush.msra.mxu0 0.0
        %1960 = vmatpush.msra.mxu0 0.0
        %1961 = vmatpush.msra.mxu0 0.0
        %1962 = vmatpush.msra.mxu0 0.0
        %1963 = vmatpush.msra.mxu0 0.0
        %1964 = vmatpush.msra.mxu0 0.0
        %1965 = vmatpush.msra.mxu0 0.0
        %1966 = vmatpush.msra.mxu0 0.0
        %1967 = vmatpush.msra.mxu0 0.0
        %1968 = vmatpush.msra.mxu0 0.0
        %1969 = vmatpush.msra.mxu0 0.0
        %1970 = vmatpush.msra.mxu0 %v1955
        %1971 = vmatpush.msra.mxu0 %v1941
        %1972 = vmatpush.msra.mxu0 %v1939
        %1973 = vmatmul.f32.gmra.mxu0 %v1947
        %v1974 = vpop.f32.mrf.mxu0
        %v1975 = vadd.f32 0.0, %v1974
        %1976 = vmatmul.f32.gmra.mxu0 %v1950
        %v1977 = vpop.f32.mrf.mxu0
        %v1978 = vadd.f32 0.0, %v1977
        %1979 = vmatmul.f32.gmra.mxu0 %v1953
        %v1980 = vpop.f32.mrf.mxu0
        %v1981 = vadd.f32 0.0, %v1980
        %1982 = vdwg.mxu0
        %1983 = vst.msk [vmem:[#allocation2] sm:$0xff] %vm1865, %v1975
        %1984 = vst.msk [vmem:[#allocation2 + $0x8] sm:$0xff] %vm1865, %v1978
        %vm1985 = vcmask 59392
        %1986 = vst.msk [vmem:[#allocation2 + $0x10] sm:$0x7] %vm1985, %v1981
        %1987 = vrot.lane.b32.xlu0 %v1848, 104
        %v1988 = vpop.permute.xlu0 %1987
        %1989 = vrot.lane.b32.xlu0 %v1851, 104
        %v1990 = vpop.permute.xlu0 %1989
        %1991 = vrot.lane.b32.xlu0 %v1854, 104
        %v1992 = vpop.permute.xlu0 %1991
        %1993 = vrot.lane.b32.xlu0 %v1848, 96
        %v1994 = vpop.permute.xlu0 %1993
        %1995 = vrot.lane.b32.xlu0 %v1851, 96
        %v1996 = vpop.permute.xlu0 %1995
        %1997 = vrot.lane.b32.xlu0 %v1854, 96
        %v1998 = vpop.permute.xlu0 %1997
        %v1999 = vsel %vm1865, %v1988, 0
        %v2001 = vsel %vm1865, %v1990, 0
        %v2003 = vsel %vm1865, %v1992, 0
        %v2005 = vsel %vm1865, %v1994, 0
        %v2007 = vsel %vm1865, %v1996, 0
        %v2009 = vsel %vm1865, %v1998, 0
        %2011 = vmatpush.xpose.msra.mxu0 0.0
        %2012 = vmatpush.xpose.msra.mxu0 0.0
        %2013 = vmatpush.xpose.msra.mxu0 0.0
        %2014 = vmatpush.xpose.msra.mxu0 0.0
        %2015 = vmatpush.xpose.msra.mxu0 0.0
        %2016 = vmatpush.xpose.msra.mxu0 0.0
        %2017 = vmatpush.xpose.msra.mxu0 0.0
        %2018 = vmatpush.xpose.msra.mxu0 0.0
        %2019 = vmatpush.xpose.msra.mxu0 0.0
        %2020 = vmatpush.xpose.msra.mxu0 0.0
        %2021 = vmatpush.xpose.msra.mxu0 0.0
        %2022 = vmatpush.xpose.msra.mxu0 0.0
        %2023 = vmatpush.xpose.msra.mxu0 0.0
        %2024 = vmatpush.xpose.msra.mxu0 %v2009
        %2025 = vmatpush.xpose.msra.mxu0 %v2007
        %2026 = vmatpush.xpose.msra.mxu0 %v2005
        %2027 = vmatmul.f32.gmra.mxu0 %v1999
        %v2028 = vpop.f32.mrf.mxu0
        %v2029 = vadd.f32 0.0, %v2028
        %2030 = vmatmul.f32.gmra.mxu0 %v2001
        %v2031 = vpop.f32.mrf.mxu0
        %v2032 = vadd.f32 0.0, %v2031
        %2033 = vmatmul.f32.gmra.mxu0 %v2003
        %v2034 = vpop.f32.mrf.mxu0
        %v2035 = vadd.f32 0.0, %v2034
        %2036 = vdwg.mxu0
        %v2037 = vsel %vm1502, %v2029, -inf
        %2038 = vmax.xlane.f32.xlu0 %v2037
        %v2039 = vpop.xlane.xlu0 %2038
        %v2040 = vsel %vm1502, %v2032, -inf
        %2041 = vmax.xlane.f32.xlu0 %v2040
        %v2042 = vpop.xlane.xlu0 %2041
        %v2043 = vsel %vm1910, %v2035, -inf
        %2044 = vmax.xlane.f32.xlu0 %v2043
        %v2045 = vpop.xlane.xlu0 %2044
        %v2046 = vsub.f32 %v2029, %v2039
        %v2047 = vsub.f32 %v2032, %v2042
        %v2048 = vsub.f32 %v2035, %v2045
        %v2049 = vmul.f32 %v2046, 1.442695
        %v2050 = vpow.pop %v2049
        %v2051 = vmul.f32 %v2047, 1.442695
        %v2052 = vpow.pop %v2051
        %v2053 = vmul.f32 %v2048, 1.442695
        %v2054 = vpow.pop %v2053
        %v2055 = vsel %vm1502, %v2050, 0.0
        %2056 = vadd.xlane.f32.xlu0 %v2055
        %v2057 = vpop.xlane.xlu0 %2056
        %v2058 = vsel %vm1502, %v2052, 0.0
        %2059 = vadd.xlane.f32.xlu0 %v2058
        %v2060 = vpop.xlane.xlu0 %2059
        %v2061 = vsel %vm1910, %v2054, 0.0
        %2062 = vadd.xlane.f32.xlu0 %v2061
        %v2063 = vpop.xlane.xlu0 %2062
        %v2064 = vrcp.pop %v2057
        %v2065 = vrcp.pop %v2060
        %v2066 = vrcp.pop %v2063
        %v2067 = vmul.f32 %v2050, %v2064
        %v2068 = vmul.f32 %v2052, %v2065
        %v2069 = vmul.f32 %v2054, %v2066
        %2070 = vrot.lane.b32.xlu0 %v1848, 88
        %v2071 = vpop.permute.xlu0 %2070
        %2072 = vrot.lane.b32.xlu0 %v1851, 88
        %v2073 = vpop.permute.xlu0 %2072
        %2074 = vrot.lane.b32.xlu0 %v1854, 88
        %v2075 = vpop.permute.xlu0 %2074
        %v2079 = vsel %vm1502, %v2067, 0
        %v2082 = vsel %vm1502, %v2068, 0
        %v2085 = vsel %vm1502, %v2069, 0
        %v2087 = vsel %vm1512, %v2075, 0
        %2089 = vmatpush.msra.mxu0 0.0
        %2090 = vmatpush.msra.mxu0 0.0
        %2091 = vmatpush.msra.mxu0 0.0
        %2092 = vmatpush.msra.mxu0 0.0
        %2093 = vmatpush.msra.mxu0 0.0
        %2094 = vmatpush.msra.mxu0 0.0
        %2095 = vmatpush.msra.mxu0 0.0
        %2096 = vmatpush.msra.mxu0 0.0
        %2097 = vmatpush.msra.mxu0 0.0
        %2098 = vmatpush.msra.mxu0 0.0
        %2099 = vmatpush.msra.mxu0 0.0
        %2100 = vmatpush.msra.mxu0 0.0
        %2101 = vmatpush.msra.mxu0 0.0
        %2102 = vmatpush.msra.mxu0 %v2087
        %2103 = vmatpush.msra.mxu0 %v2073
        %2104 = vmatpush.msra.mxu0 %v2071
        %2105 = vmatmul.f32.gmra.mxu0 %v2079
        %v2106 = vpop.f32.mrf.mxu0
        %v2107 = vadd.f32 0.0, %v2106
        %2108 = vmatmul.f32.gmra.mxu0 %v2082
        %v2109 = vpop.f32.mrf.mxu0
        %v2110 = vadd.f32 0.0, %v2109
        %2111 = vmatmul.f32.gmra.mxu0 %v2085
        %v2112 = vpop.f32.mrf.mxu0
        %v2113 = vadd.f32 0.0, %v2112
        %2114 = vdwg.mxu0
        %2118 = vrot.lane.b32.xlu0 %v2107, 8
        %v2119 = vpop.permute.xlu0 %2118
        %2120 = vrot.lane.b32.xlu0 %v2110, 8
        %v2121 = vpop.permute.xlu0 %2120
        %2122 = vrot.lane.b32.xlu0 %v2113, 8
        %v2123 = vpop.permute.xlu0 %2122
        %vm2127 = vcmask 130112
        %2128 = vst.msk [vmem:[#allocation2] sm:$0xff] %vm2127, %v2119
        %2129 = vst.msk [vmem:[#allocation2 + $0x8] sm:$0xff] %vm2127, %v2121
        %vm2130 = vcmask 124992
        %2131 = vst.msk [vmem:[#allocation2 + $0x10] sm:$0x7] %vm2130, %v2123
        %2132 = vrot.lane.b32.xlu0 %v1848, 80
        %v2133 = vpop.permute.xlu0 %2132
        %2134 = vrot.lane.b32.xlu0 %v1851, 80
        %v2135 = vpop.permute.xlu0 %2134
        %2136 = vrot.lane.b32.xlu0 %v1854, 80
        %v2137 = vpop.permute.xlu0 %2136
        %2138 = vrot.lane.b32.xlu0 %v1848, 72
        %v2139 = vpop.permute.xlu0 %2138
        %2140 = vrot.lane.b32.xlu0 %v1851, 72
        %v2141 = vpop.permute.xlu0 %2140
        %2142 = vrot.lane.b32.xlu0 %v1854, 72
        %v2143 = vpop.permute.xlu0 %2142
        %v2144 = vsel %vm1865, %v2133, 0
        %v2146 = vsel %vm1865, %v2135, 0
        %v2148 = vsel %vm1865, %v2137, 0
        %v2150 = vsel %vm1865, %v2139, 0
        %v2152 = vsel %vm1865, %v2141, 0
        %v2154 = vsel %vm1865, %v2143, 0
        %2156 = vmatpush.xpose.msra.mxu0 0.0
        %2157 = vmatpush.xpose.msra.mxu0 0.0
        %2158 = vmatpush.xpose.msra.mxu0 0.0
        %2159 = vmatpush.xpose.msra.mxu0 0.0
        %2160 = vmatpush.xpose.msra.mxu0 0.0
        %2161 = vmatpush.xpose.msra.mxu0 0.0
        %2162 = vmatpush.xpose.msra.mxu0 0.0
        %2163 = vmatpush.xpose.msra.mxu0 0.0
        %2164 = vmatpush.xpose.msra.mxu0 0.0
        %2165 = vmatpush.xpose.msra.mxu0 0.0
        %2166 = vmatpush.xpose.msra.mxu0 0.0
        %2167 = vmatpush.xpose.msra.mxu0 0.0
        %2168 = vmatpush.xpose.msra.mxu0 0.0
        %2169 = vmatpush.xpose.msra.mxu0 %v2154
        %2170 = vmatpush.xpose.msra.mxu0 %v2152
        %2171 = vmatpush.xpose.msra.mxu0 %v2150
        %2172 = vmatmul.f32.gmra.mxu0 %v2144
        %v2173 = vpop.f32.mrf.mxu0
        %v2174 = vadd.f32 0.0, %v2173
        %2175 = vmatmul.f32.gmra.mxu0 %v2146
        %v2176 = vpop.f32.mrf.mxu0
        %v2177 = vadd.f32 0.0, %v2176
        %2178 = vmatmul.f32.gmra.mxu0 %v2148
        %v2179 = vpop.f32.mrf.mxu0
        %v2180 = vadd.f32 0.0, %v2179
        %2181 = vdwg.mxu0
        %v2182 = vsel %vm1502, %v2174, -inf
        %2183 = vmax.xlane.f32.xlu0 %v2182
        %v2184 = vpop.xlane.xlu0 %2183
        %v2185 = vsel %vm1502, %v2177, -inf
        %2186 = vmax.xlane.f32.xlu0 %v2185
        %v2187 = vpop.xlane.xlu0 %2186
        %v2188 = vsel %vm1910, %v2180, -inf
        %2189 = vmax.xlane.f32.xlu0 %v2188
        %v2190 = vpop.xlane.xlu0 %2189
        %v2191 = vsub.f32 %v2174, %v2184
        %v2192 = vsub.f32 %v2177, %v2187
        %v2193 = vsub.f32 %v2180, %v2190
        %v2194 = vmul.f32 %v2191, 1.442695
        %v2195 = vpow.pop %v2194
        %v2196 = vmul.f32 %v2192, 1.442695
        %v2197 = vpow.pop %v2196
        %v2198 = vmul.f32 %v2193, 1.442695
        %v2199 = vpow.pop %v2198
        %v2200 = vsel %vm1502, %v2195, 0.0
        %2201 = vadd.xlane.f32.xlu0 %v2200
        %v2202 = vpop.xlane.xlu0 %2201
        %v2203 = vsel %vm1502, %v2197, 0.0
        %2204 = vadd.xlane.f32.xlu0 %v2203
        %v2205 = vpop.xlane.xlu0 %2204
        %v2206 = vsel %vm1910, %v2199, 0.0
        %2207 = vadd.xlane.f32.xlu0 %v2206
        %v2208 = vpop.xlane.xlu0 %2207
        %v2209 = vrcp.pop %v2202
        %v2210 = vrcp.pop %v2205
        %v2211 = vrcp.pop %v2208
        %v2212 = vmul.f32 %v2195, %v2209
        %v2213 = vmul.f32 %v2197, %v2210
        %v2214 = vmul.f32 %v2199, %v2211
        %2215 = vrot.lane.b32.xlu0 %v1848, 64
        %v2216 = vpop.permute.xlu0 %2215
        %2217 = vrot.lane.b32.xlu0 %v1851, 64
        %v2218 = vpop.permute.xlu0 %2217
        %2219 = vrot.lane.b32.xlu0 %v1854, 64
        %v2220 = vpop.permute.xlu0 %2219
        %v2224 = vsel %vm1502, %v2212, 0
        %v2227 = vsel %vm1502, %v2213, 0
        %v2230 = vsel %vm1502, %v2214, 0
        %v2232 = vsel %vm1512, %v2220, 0
        %2234 = vmatpush.msra.mxu0 0.0
        %2235 = vmatpush.msra.mxu0 0.0
        %2236 = vmatpush.msra.mxu0 0.0
        %2237 = vmatpush.msra.mxu0 0.0
        %2238 = vmatpush.msra.mxu0 0.0
        %2239 = vmatpush.msra.mxu0 0.0
        %2240 = vmatpush.msra.mxu0 0.0
        %2241 = vmatpush.msra.mxu0 0.0
        %2242 = vmatpush.msra.mxu0 0.0
        %2243 = vmatpush.msra.mxu0 0.0
        %2244 = vmatpush.msra.mxu0 0.0
        %2245 = vmatpush.msra.mxu0 0.0
        %2246 = vmatpush.msra.mxu0 0.0
        %2247 = vmatpush.msra.mxu0 %v2232
        %2248 = vmatpush.msra.mxu0 %v2218
        %2249 = vmatpush.msra.mxu0 %v2216
        %2250 = vmatmul.f32.gmra.mxu0 %v2224
        %v2251 = vpop.f32.mrf.mxu0
        %v2252 = vadd.f32 0.0, %v2251
        %2253 = vmatmul.f32.gmra.mxu0 %v2227
        %v2254 = vpop.f32.mrf.mxu0
        %v2255 = vadd.f32 0.0, %v2254
        %2256 = vmatmul.f32.gmra.mxu0 %v2230
        %v2257 = vpop.f32.mrf.mxu0
        %v2258 = vadd.f32 0.0, %v2257
        %2259 = vdwg.mxu0
        %2263 = vrot.lane.b32.xlu0 %v2252, 16
        %v2264 = vpop.permute.xlu0 %2263
        %2265 = vrot.lane.b32.xlu0 %v2255, 16
        %v2266 = vpop.permute.xlu0 %2265
        %2267 = vrot.lane.b32.xlu0 %v2258, 16
        %v2268 = vpop.permute.xlu0 %2267
        %vm2272 = vcmask 195712
        %2273 = vst.msk [vmem:[#allocation2] sm:$0xff] %vm2272, %v2264
        %2274 = vst.msk [vmem:[#allocation2 + $0x8] sm:$0xff] %vm2272, %v2266
        %vm2275 = vcmask 190592
        %2276 = vst.msk [vmem:[#allocation2 + $0x10] sm:$0x7] %vm2275, %v2268
        %2277 = vrot.lane.b32.xlu0 %v1848, 56
        %v2278 = vpop.permute.xlu0 %2277
        %2279 = vrot.lane.b32.xlu0 %v1851, 56
        %v2280 = vpop.permute.xlu0 %2279
        %2281 = vrot.lane.b32.xlu0 %v1854, 56
        %v2282 = vpop.permute.xlu0 %2281
        %2283 = vrot.lane.b32.xlu0 %v1848, 48
        %v2284 = vpop.permute.xlu0 %2283
        %2285 = vrot.lane.b32.xlu0 %v1851, 48
        %v2286 = vpop.permute.xlu0 %2285
        %2287 = vrot.lane.b32.xlu0 %v1854, 48
        %v2288 = vpop.permute.xlu0 %2287
        %v2289 = vsel %vm1865, %v2278, 0
        %v2291 = vsel %vm1865, %v2280, 0
        %v2293 = vsel %vm1865, %v2282, 0
        %v2295 = vsel %vm1865, %v2284, 0
        %v2297 = vsel %vm1865, %v2286, 0
        %v2299 = vsel %vm1865, %v2288, 0
        %2301 = vmatpush.xpose.msra.mxu0 0.0
        %2302 = vmatpush.xpose.msra.mxu0 0.0
        %2303 = vmatpush.xpose.msra.mxu0 0.0
        %2304 = vmatpush.xpose.msra.mxu0 0.0
        %2305 = vmatpush.xpose.msra.mxu0 0.0
        %2306 = vmatpush.xpose.msra.mxu0 0.0
        %2307 = vmatpush.xpose.msra.mxu0 0.0
        %2308 = vmatpush.xpose.msra.mxu0 0.0
        %2309 = vmatpush.xpose.msra.mxu0 0.0
        %2310 = vmatpush.xpose.msra.mxu0 0.0
        %2311 = vmatpush.xpose.msra.mxu0 0.0
        %2312 = vmatpush.xpose.msra.mxu0 0.0
        %2313 = vmatpush.xpose.msra.mxu0 0.0
        %2314 = vmatpush.xpose.msra.mxu0 %v2299
        %2315 = vmatpush.xpose.msra.mxu0 %v2297
        %2316 = vmatpush.xpose.msra.mxu0 %v2295
        %2317 = vmatmul.f32.gmra.mxu0 %v2289
        %v2318 = vpop.f32.mrf.mxu0
        %v2319 = vadd.f32 0.0, %v2318
        %2320 = vmatmul.f32.gmra.mxu0 %v2291
        %v2321 = vpop.f32.mrf.mxu0
        %v2322 = vadd.f32 0.0, %v2321
        %2323 = vmatmul.f32.gmra.mxu0 %v2293
        %v2324 = vpop.f32.mrf.mxu0
        %v2325 = vadd.f32 0.0, %v2324
        %2326 = vdwg.mxu0
        %v2327 = vsel %vm1502, %v2319, -inf
        %2328 = vmax.xlane.f32.xlu0 %v2327
        %v2329 = vpop.xlane.xlu0 %2328
        %v2330 = vsel %vm1502, %v2322, -inf
        %2331 = vmax.xlane.f32.xlu0 %v2330
        %v2332 = vpop.xlane.xlu0 %2331
        %v2333 = vsel %vm1910, %v2325, -inf
        %2334 = vmax.xlane.f32.xlu0 %v2333
        %v2335 = vpop.xlane.xlu0 %2334
        %v2336 = vsub.f32 %v2319, %v2329
        %v2337 = vsub.f32 %v2322, %v2332
        %v2338 = vsub.f32 %v2325, %v2335
        %v2339 = vmul.f32 %v2336, 1.442695
        %v2340 = vpow.pop %v2339
        %v2341 = vmul.f32 %v2337, 1.442695
        %v2342 = vpow.pop %v2341
        %v2343 = vmul.f32 %v2338, 1.442695
        %v2344 = vpow.pop %v2343
        %v2345 = vsel %vm1502, %v2340, 0.0
        %2346 = vadd.xlane.f32.xlu0 %v2345
        %v2347 = vpop.xlane.xlu0 %2346
        %v2348 = vsel %vm1502, %v2342, 0.0
        %2349 = vadd.xlane.f32.xlu0 %v2348
        %v2350 = vpop.xlane.xlu0 %2349
        %v2351 = vsel %vm1910, %v2344, 0.0
        %2352 = vadd.xlane.f32.xlu0 %v2351
        %v2353 = vpop.xlane.xlu0 %2352
        %v2354 = vrcp.pop %v2347
        %v2355 = vrcp.pop %v2350
        %v2356 = vrcp.pop %v2353
        %v2357 = vmul.f32 %v2340, %v2354
        %v2358 = vmul.f32 %v2342, %v2355
        %v2359 = vmul.f32 %v2344, %v2356
        %2360 = vrot.lane.b32.xlu0 %v1848, 40
        %v2361 = vpop.permute.xlu0 %2360
        %2362 = vrot.lane.b32.xlu0 %v1851, 40
        %v2363 = vpop.permute.xlu0 %2362
        %2364 = vrot.lane.b32.xlu0 %v1854, 40
        %v2365 = vpop.permute.xlu0 %2364
        %v2369 = vsel %vm1502, %v2357, 0
        %v2372 = vsel %vm1502, %v2358, 0
        %v2375 = vsel %vm1502, %v2359, 0
        %v2377 = vsel %vm1512, %v2365, 0
        %2379 = vmatpush.msra.mxu0 0.0
        %2380 = vmatpush.msra.mxu0 0.0
        %2381 = vmatpush.msra.mxu0 0.0
        %2382 = vmatpush.msra.mxu0 0.0
        %2383 = vmatpush.msra.mxu0 0.0
        %2384 = vmatpush.msra.mxu0 0.0
        %2385 = vmatpush.msra.mxu0 0.0
        %2386 = vmatpush.msra.mxu0 0.0
        %2387 = vmatpush.msra.mxu0 0.0
        %2388 = vmatpush.msra.mxu0 0.0
        %2389 = vmatpush.msra.mxu0 0.0
        %2390 = vmatpush.msra.mxu0 0.0
        %2391 = vmatpush.msra.mxu0 0.0
        %2392 = vmatpush.msra.mxu0 %v2377
        %2393 = vmatpush.msra.mxu0 %v2363
        %2394 = vmatpush.msra.mxu0 %v2361
        %2395 = vmatmul.f32.gmra.mxu0 %v2369
        %v2396 = vpop.f32.mrf.mxu0
        %v2397 = vadd.f32 0.0, %v2396
        %2398 = vmatmul.f32.gmra.mxu0 %v2372
        %v2399 = vpop.f32.mrf.mxu0
        %v2400 = vadd.f32 0.0, %v2399
        %2401 = vmatmul.f32.gmra.mxu0 %v2375
        %v2402 = vpop.f32.mrf.mxu0
        %v2403 = vadd.f32 0.0, %v2402
        %2404 = vdwg.mxu0
        %2408 = vrot.lane.b32.xlu0 %v2397, 24
        %v2409 = vpop.permute.xlu0 %2408
        %2410 = vrot.lane.b32.xlu0 %v2400, 24
        %v2411 = vpop.permute.xlu0 %2410
        %2412 = vrot.lane.b32.xlu0 %v2403, 24
        %v2413 = vpop.permute.xlu0 %2412
        %vm2417 = vcmask 261312
        %2418 = vst.msk [vmem:[#allocation2] sm:$0xff] %vm2417, %v2409
        %2419 = vst.msk [vmem:[#allocation2 + $0x8] sm:$0xff] %vm2417, %v2411
        %vm2420 = vcmask 256192
        %2421 = vst.msk [vmem:[#allocation2 + $0x10] sm:$0x7] %vm2420, %v2413
        %v2422 = vld [vmem:[#allocation2] sm:$0xff]
        %v2423 = vld [vmem:[#allocation2 + $0x8] sm:$0xff]
        %v2424 = vld [vmem:[#allocation2 + $0x10] sm:$0x7]
        %v2425 = vld [vmem:[%s4] sm:$0xff]
        %v2426 = vld [vmem:[%s4 + $0x8] sm:$0xff]
        %v2427 = vld [vmem:[%s4 + $0x10] sm:$0xff]
        %v2428 = vld [vmem:[%s4 + $0x18] sm:$0xff]
        %v2429 = vperm.slane %v1815, 1
        %v2431 = vsel %vm487, %v2422, 0
        %v2434 = vsel %vm487, %v2423, 0
        %v2437 = vsel %vm487, %v2424, 0
        %2439 = vmatpush.msra.mxu0 0.0
        %2440 = vmatpush.msra.mxu0 0.0
        %2441 = vmatpush.msra.mxu0 0.0
        %2442 = vmatpush.msra.mxu0 0.0
        %2443 = vmatpush.msra.mxu0 0.0
        %2444 = vmatpush.msra.mxu0 0.0
        %2445 = vmatpush.msra.mxu0 0.0
        %2446 = vmatpush.msra.mxu0 0.0
        %2447 = vmatpush.msra.mxu0 0.0
        %2448 = vmatpush.msra.mxu0 0.0
        %2449 = vmatpush.msra.mxu0 0.0
        %2450 = vmatpush.msra.mxu0 0.0
        %2451 = vmatpush.msra.mxu0 %v2428
        %2452 = vmatpush.msra.mxu0 %v2427
        %2453 = vmatpush.msra.mxu0 %v2426
        %2454 = vmatpush.msra.mxu0 %v2425
        %2455 = vmatmul.f32.gmra.mxu0 %v2431
        %v2456 = vpop.f32.mrf.mxu0
        %v2457 = vadd.f32 %v2429, %v2456
        %2458 = vmatmul.f32.gmra.mxu0 %v2434
        %v2459 = vpop.f32.mrf.mxu0
        %v2460 = vadd.f32 %v2429, %v2459
        %2461 = vmatmul.f32.gmra.mxu0 %v2437
        %v2462 = vpop.f32.mrf.mxu0
        %v2463 = vadd.f32 %v2429, %v2462
        %2464 = vdwg.mxu0
        %v2465 = vadd.f32 %v1812, %v2457
        %v2466 = vadd.f32 %v1813, %v2460
        %v2467 = vadd.f32 %v1814, %v2463
        %v2468 = vsel %vm487, %v2465, 0.0
        %2469 = vadd.xlane.f32.xlu0 %v2468
        %v2470 = vpop.xlane.xlu0 %2469
        %v2471 = vsel %vm487, %v2466, 0.0
        %2472 = vadd.xlane.f32.xlu0 %v2471
        %v2473 = vpop.xlane.xlu0 %2472
        %v2474 = vsel %vm1369, %v2467, 0.0
        %2475 = vadd.xlane.f32.xlu0 %v2474
        %v2476 = vpop.xlane.xlu0 %2475
        %v2477 = vmul.f32 %v2470, %v1379
        %v2478 = vmul.f32 %v2473, %v1379
        %v2479 = vmul.f32 %v2476, %v1379
        %v2480 = vsub.f32 %v2465, %v2477
        %v2481 = vsub.f32 %v2466, %v2478
        %v2482 = vsub.f32 %v2467, %v2479
        %v2483 = vmul.f32 %v2480, %v2480
        %v2484 = vmul.f32 %v2481, %v2481
        %v2485 = vmul.f32 %v2482, %v2482
        %v2486 = vsel %vm487, %v2483, 0.0
        %2487 = vadd.xlane.f32.xlu0 %v2486
        %v2488 = vpop.xlane.xlu0 %2487
        %v2489 = vsel %vm487, %v2484, 0.0
        %2490 = vadd.xlane.f32.xlu0 %v2489
        %v2491 = vpop.xlane.xlu0 %2490
        %v2492 = vsel %vm1369, %v2485, 0.0
        %2493 = vadd.xlane.f32.xlu0 %v2492
        %v2494 = vpop.xlane.xlu0 %2493
        %v2495 = vmul.f32 %v2488, %v1379
        %v2496 = vmul.f32 %v2491, %v1379
        %v2497 = vmul.f32 %v2494, %v1379
        %v2498 = vadd.f32 %v2495, 1e-05
        %v2499 = vadd.f32 %v2496, 1e-05
        %v2500 = vadd.f32 %v2497, 1e-05
        %v2501 = vrsqrt.pop %v2498
        %v2502 = vmul.f32 %v2501, %v2498
        %v2503 = vmul.f32 %v2502, %v2501
        %v2504 = vmul.f32 0.5, %v2503
        %v2505 = vsub.f32 1.5, %v2504
        %v2506 = vmul.f32 %v2501, %v2505
        %vm2507 = vweird.f32 %v2498
        %vm2508 = vweird.f32 %v2501
        %vm2509 = vmor %vm2507, %vm2508
        %v2510 = vsel %vm2509, %v2501, %v2506
        %v2511 = vrsqrt.pop %v2499
        %v2512 = vmul.f32 %v2511, %v2499
        %v2513 = vmul.f32 %v2512, %v2511
        %v2514 = vmul.f32 0.5, %v2513
        %v2515 = vsub.f32 1.5, %v2514
        %v2516 = vmul.f32 %v2511, %v2515
        %vm2517 = vweird.f32 %v2499
        %vm2518 = vweird.f32 %v2511
        %vm2519 = vmor %vm2517, %vm2518
        %v2520 = vsel %vm2519, %v2511, %v2516
        %v2521 = vrsqrt.pop %v2500
        %v2522 = vmul.f32 %v2521, %v2500
        %v2523 = vmul.f32 %v2522, %v2521
        %v2524 = vmul.f32 0.5, %v2523
        %v2525 = vsub.f32 1.5, %v2524
        %v2526 = vmul.f32 %v2521, %v2525
        %vm2527 = vweird.f32 %v2500
        %vm2528 = vweird.f32 %v2521
        %vm2529 = vmor %vm2527, %vm2528
        %v2530 = vsel %vm2529, %v2521, %v2526
        %v2531 = vmul.f32 %v2480, %v2510
        %v2532 = vmul.f32 %v2481, %v2520
        %v2533 = vmul.f32 %v2482, %v2530
        %v2534 = vperm.slane %v1815, 2
        %v2535 = vmul.f32 %v2531, %v2534
        %v2536 = vmul.f32 %v2532, %v2534
        %v2537 = vmul.f32 %v2533, %v2534
        %v2538 = vperm.slane %v1815, 3
        %v2539 = vadd.f32 %v2535, %v2538
        %v2540 = vadd.f32 %v2536, %v2538
        %v2541 = vadd.f32 %v2537, %v2538
        %v2542 = vld [vmem:[%s5] sm:$0xff]
        %v2543 = vld [vmem:[%s5 + $0x8] sm:$0xff]
        %v2544 = vld [vmem:[%s5 + $0x10] sm:$0xff]
        %v2545 = vld [vmem:[%s5 + $0x18] sm:$0xff]
        %v2546 = vperm.slane %v1815, 4
        %v2548 = vsel %vm487, %v2539, 0
        %v2551 = vsel %vm487, %v2540, 0
        %v2554 = vsel %vm487, %v2541, 0
        %2556 = vmatpush.msra.mxu0 0.0
        %2557 = vmatpush.msra.mxu0 0.0
        %2558 = vmatpush.msra.mxu0 0.0
        %2559 = vmatpush.msra.mxu0 0.0
        %2560 = vmatpush.msra.mxu0 0.0
        %2561 = vmatpush.msra.mxu0 0.0
        %2562 = vmatpush.msra.mxu0 0.0
        %2563 = vmatpush.msra.mxu0 0.0
        %2564 = vmatpush.msra.mxu0 0.0
        %2565 = vmatpush.msra.mxu0 0.0
        %2566 = vmatpush.msra.mxu0 0.0
        %2567 = vmatpush.msra.mxu0 0.0
        %2568 = vmatpush.msra.mxu0 %v2545
        %2569 = vmatpush.msra.mxu0 %v2544
        %2570 = vmatpush.msra.mxu0 %v2543
        %2571 = vmatpush.msra.mxu0 %v2542
        %2572 = vmatmul.f32.gmra.mxu0 %v2548
        %v2573 = vpop.f32.mrf.mxu0
        %v2574 = vadd.f32 %v2546, %v2573
        %2575 = vmatmul.f32.gmra.mxu0 %v2551
        %v2576 = vpop.f32.mrf.mxu0
        %v2577 = vadd.f32 %v2546, %v2576
        %2578 = vmatmul.f32.gmra.mxu0 %v2554
        %v2579 = vpop.f32.mrf.mxu0
        %v2580 = vadd.f32 %v2546, %v2579
        %2581 = vdwg.mxu0
        %v2582 = vmul.f32 %v2574, 0.5
        %v2583 = vmul.f32 %v2577, 0.5
        %v2584 = vmul.f32 %v2580, 0.5
        %v2585 = vmul.f32 %v2574, 0.044715
        %v2586 = vmul.f32 %v2577, 0.044715
        %v2587 = vmul.f32 %v2580, 0.044715
        %v2588 = vmul.f32 %v2585, %v2574
        %v2589 = vmul.f32 %v2586, %v2577
        %v2590 = vmul.f32 %v2587, %v2580
        %v2591 = vmul.f32 %v2588, %v2574
        %v2592 = vmul.f32 %v2589, %v2577
        %v2593 = vmul.f32 %v2590, %v2580
        %v2594 = vadd.f32 %v2574, %v2591
        %v2595 = vadd.f32 %v2577, %v2592
        %v2596 = vadd.f32 %v2580, %v2593
        %v2597 = vmul.f32 %v2594, 0.7978846
        %v2598 = vmul.f32 %v2595, 0.7978846
        %v2599 = vmul.f32 %v2596, 0.7978846
        %v2600 = vtanh.pop %v2597
        %v2601 = vtanh.pop %v2598
        %v2602 = vtanh.pop %v2599
        %v2603 = vadd.f32 %v2600, 1.0
        %v2604 = vadd.f32 %v2601, 1.0
        %v2605 = vadd.f32 %v2602, 1.0
        %v2606 = vmul.f32 %v2582, %v2603
        %v2607 = vmul.f32 %v2583, %v2604
        %v2608 = vmul.f32 %v2584, %v2605
        %v2609 = vld [vmem:[%s6] sm:$0xff]
        %v2610 = vld [vmem:[%s6 + $0x8] sm:$0xff]
        %v2611 = vld [vmem:[%s6 + $0x10] sm:$0xff]
        %v2612 = vld [vmem:[%s6 + $0x18] sm:$0xff]
        %v2613 = vld [vmem:[%s6 + $0x20] sm:$0xff]
        %v2614 = vld [vmem:[%s6 + $0x28] sm:$0xff]
        %v2615 = vld [vmem:[%s6 + $0x30] sm:$0xff]
        %v2616 = vld [vmem:[%s6 + $0x38] sm:$0xff]
        %v2617 = vperm.slane %v1815, 5
        %vm2618 = vcmask 523264
        %v2620 = vsel %vm2618, %v2606, 0
        %v2623 = vsel %vm2618, %v2607, 0
        %v2626 = vsel %vm2618, %v2608, 0
        %2628 = vmatpush.msra.mxu0 0.0
        %2629 = vmatpush.msra.mxu0 0.0
        %2630 = vmatpush.msra.mxu0 0.0
        %2631 = vmatpush.msra.mxu0 0.0
        %2632 = vmatpush.msra.mxu0 0.0
        %2633 = vmatpush.msra.mxu0 0.0
        %2634 = vmatpush.msra.mxu0 0.0
        %2635 = vmatpush.msra.mxu0 0.0
        %2636 = vmatpush.msra.mxu0 %v2616
        %2637 = vmatpush.msra.mxu0 %v2615
        %2638 = vmatpush.msra.mxu0 %v2614
        %2639 = vmatpush.msra.mxu0 %v2613
        %2640 = vmatpush.msra.mxu0 %v2612
        %2641 = vmatpush.msra.mxu0 %v2611
        %2642 = vmatpush.msra.mxu0 %v2610
        %2643 = vmatpush.msra.mxu0 %v2609
        %2644 = vmatmul.f32.gmra.mxu0 %v2620
        %v2645 = vpop.f32.mrf.mxu0
        %v2646 = vadd.f32 %v2617, %v2645
        %2647 = vmatmul.f32.gmra.mxu0 %v2623
        %v2648 = vpop.f32.mrf.mxu0
        %v2649 = vadd.f32 %v2617, %v2648
        %2650 = vmatmul.f32.gmra.mxu0 %v2626
        %v2651 = vpop.f32.mrf.mxu0
        %v2652 = vadd.f32 %v2617, %v2651
        %2653 = vdwg.mxu0
        %v2654 = vadd.f32 %v2539, %v2646
        %v2655 = vadd.f32 %v2540, %v2649
        %v2656 = vadd.f32 %v2541, %v2652
        %v2657 = vsel %vm487, %v2654, 0.0
        %2658 = vadd.xlane.f32.xlu0 %v2657
        %v2659 = vpop.xlane.xlu0 %2658
        %v2660 = vsel %vm487, %v2655, 0.0
        %2661 = vadd.xlane.f32.xlu0 %v2660
        %v2662 = vpop.xlane.xlu0 %2661
        %v2663 = vsel %vm1369, %v2656, 0.0
        %2664 = vadd.xlane.f32.xlu0 %v2663
        %v2665 = vpop.xlane.xlu0 %2664
        %v2666 = vmul.f32 %v2659, %v1379
        %v2667 = vmul.f32 %v2662, %v1379
        %v2668 = vmul.f32 %v2665, %v1379
        %v2669 = vsub.f32 %v2654, %v2666
        %v2670 = vsub.f32 %v2655, %v2667
        %v2671 = vsub.f32 %v2656, %v2668
        %v2672 = vmul.f32 %v2669, %v2669
        %v2673 = vmul.f32 %v2670, %v2670
        %v2674 = vmul.f32 %v2671, %v2671
        %v2675 = vsel %vm487, %v2672, 0.0
        %2676 = vadd.xlane.f32.xlu0 %v2675
        %v2677 = vpop.xlane.xlu0 %2676
        %v2678 = vsel %vm487, %v2673, 0.0
        %2679 = vadd.xlane.f32.xlu0 %v2678
        %v2680 = vpop.xlane.xlu0 %2679
        %v2681 = vsel %vm1369, %v2674, 0.0
        %2682 = vadd.xlane.f32.xlu0 %v2681
        %v2683 = vpop.xlane.xlu0 %2682
        %v2684 = vmul.f32 %v2677, %v1379
        %v2685 = vmul.f32 %v2680, %v1379
        %v2686 = vmul.f32 %v2683, %v1379
        %v2687 = vadd.f32 %v2684, 1e-05
        %v2688 = vadd.f32 %v2685, 1e-05
        %v2689 = vadd.f32 %v2686, 1e-05
        %v2690 = vrsqrt.pop %v2687
        %v2691 = vmul.f32 %v2690, %v2687
        %v2692 = vmul.f32 %v2691, %v2690
        %v2693 = vmul.f32 0.5, %v2692
        %v2694 = vsub.f32 1.5, %v2693
        %v2695 = vmul.f32 %v2690, %v2694
        %vm2696 = vweird.f32 %v2687
        %vm2697 = vweird.f32 %v2690
        %vm2698 = vmor %vm2696, %vm2697
        %v2699 = vsel %vm2698, %v2690, %v2695
        %v2700 = vrsqrt.pop %v2688
        %v2701 = vmul.f32 %v2700, %v2688
        %v2702 = vmul.f32 %v2701, %v2700
        %v2703 = vmul.f32 0.5, %v2702
        %v2704 = vsub.f32 1.5, %v2703
        %v2705 = vmul.f32 %v2700, %v2704
        %vm2706 = vweird.f32 %v2688
        %vm2707 = vweird.f32 %v2700
        %vm2708 = vmor %vm2706, %vm2707
        %v2709 = vsel %vm2708, %v2700, %v2705
        %v2710 = vrsqrt.pop %v2689
        %v2711 = vmul.f32 %v2710, %v2689
        %v2712 = vmul.f32 %v2711, %v2710
        %v2713 = vmul.f32 0.5, %v2712
        %v2714 = vsub.f32 1.5, %v2713
        %v2715 = vmul.f32 %v2710, %v2714
        %vm2716 = vweird.f32 %v2689
        %vm2717 = vweird.f32 %v2710
        %vm2718 = vmor %vm2716, %vm2717
        %v2719 = vsel %vm2718, %v2710, %v2715
        %v2720 = vmul.f32 %v2669, %v2699
        %v2721 = vmul.f32 %v2670, %v2709
        %v2722 = vmul.f32 %v2671, %v2719
        %v2723 = vperm.slane %v1815, 6
        %v2724 = vmul.f32 %v2720, %v2723
        %v2725 = vmul.f32 %v2721, %v2723
        %v2726 = vmul.f32 %v2722, %v2723
        %v2727 = vperm.slane %v1815, 7
        %v2728 = vadd.f32 %v2724, %v2727
        %v2729 = vadd.f32 %v2725, %v2727
        %v2730 = vadd.f32 %v2726, %v2727
        %s2731 = scalar_lea.vmem %s7, 8
        %v2732 = vld [vmem:[%s2731] sm:$0xff]
        %s2733 = scalar_lea.vmem %s3, 32
        %v2734 = vld [vmem:[%s2733] sm:$0xff]
        %v2735 = vld [vmem:[%s2733 + $0x8] sm:$0xff]
        %v2736 = vld [vmem:[%s2733 + $0x10] sm:$0xff]
        %v2737 = vld [vmem:[%s2733 + $0x18] sm:$0xff]
        %v2738 = vperm.slane %v2732, 0
        %v2740 = vsel %vm487, %v2728, 0
        %v2743 = vsel %vm487, %v2729, 0
        %v2746 = vsel %vm487, %v2730, 0
        %2748 = vmatpush.msra.mxu0 0.0
        %2749 = vmatpush.msra.mxu0 0.0
        %2750 = vmatpush.msra.mxu0 0.0
        %2751 = vmatpush.msra.mxu0 0.0
        %2752 = vmatpush.msra.mxu0 0.0
        %2753 = vmatpush.msra.mxu0 0.0
        %2754 = vmatpush.msra.mxu0 0.0
        %2755 = vmatpush.msra.mxu0 0.0
        %2756 = vmatpush.msra.mxu0 0.0
        %2757 = vmatpush.msra.mxu0 0.0
        %2758 = vmatpush.msra.mxu0 0.0
        %2759 = vmatpush.msra.mxu0 0.0
        %2760 = vmatpush.msra.mxu0 %v2737
        %2761 = vmatpush.msra.mxu0 %v2736
        %2762 = vmatpush.msra.mxu0 %v2735
        %2763 = vmatpush.msra.mxu0 %v2734
        %2764 = vmatmul.f32.gmra.mxu0 %v2740
        %v2765 = vpop.f32.mrf.mxu0
        %v2766 = vadd.f32 %v2738, %v2765
        %2767 = vmatmul.f32.gmra.mxu0 %v2743
        %v2768 = vpop.f32.mrf.mxu0
        %v2769 = vadd.f32 %v2738, %v2768
        %2770 = vmatmul.f32.gmra.mxu0 %v2746
        %v2771 = vpop.f32.mrf.mxu0
        %v2772 = vadd.f32 %v2738, %v2771
        %2773 = vdwg.mxu0
        %2777 = vrot.lane.b32.xlu0 %v2766, 120
        %v2778 = vpop.permute.xlu0 %2777
        %2779 = vrot.lane.b32.xlu0 %v2769, 120
        %v2780 = vpop.permute.xlu0 %2779
        %2781 = vrot.lane.b32.xlu0 %v2772, 120
        %v2782 = vpop.permute.xlu0 %2781
        %v2783 = vsel %vm1865, %v2766, 0
        %v2785 = vsel %vm1865, %v2769, 0
        %v2787 = vsel %vm1865, %v2772, 0
        %v2789 = vsel %vm1865, %v2778, 0
        %v2791 = vsel %vm1865, %v2780, 0
        %v2793 = vsel %vm1865, %v2782, 0
        %2795 = vmatpush.xpose.msra.mxu0 0.0
        %2796 = vmatpush.xpose.msra.mxu0 0.0
        %2797 = vmatpush.xpose.msra.mxu0 0.0
        %2798 = vmatpush.xpose.msra.mxu0 0.0
        %2799 = vmatpush.xpose.msra.mxu0 0.0
        %2800 = vmatpush.xpose.msra.mxu0 0.0
        %2801 = vmatpush.xpose.msra.mxu0 0.0
        %2802 = vmatpush.xpose.msra.mxu0 0.0
        %2803 = vmatpush.xpose.msra.mxu0 0.0
        %2804 = vmatpush.xpose.msra.mxu0 0.0
        %2805 = vmatpush.xpose.msra.mxu0 0.0
        %2806 = vmatpush.xpose.msra.mxu0 0.0
        %2807 = vmatpush.xpose.msra.mxu0 0.0
        %2808 = vmatpush.xpose.msra.mxu0 %v2793
        %2809 = vmatpush.xpose.msra.mxu0 %v2791
        %2810 = vmatpush.xpose.msra.mxu0 %v2789
        %2811 = vmatmul.f32.gmra.mxu0 %v2783
        %v2812 = vpop.f32.mrf.mxu0
        %v2813 = vadd.f32 0.0, %v2812
        %2814 = vmatmul.f32.gmra.mxu0 %v2785
        %v2815 = vpop.f32.mrf.mxu0
        %v2816 = vadd.f32 0.0, %v2815
        %2817 = vmatmul.f32.gmra.mxu0 %v2787
        %v2818 = vpop.f32.mrf.mxu0
        %v2819 = vadd.f32 0.0, %v2818
        %2820 = vdwg.mxu0
        %v2821 = vsel %vm1502, %v2813, -inf
        %2822 = vmax.xlane.f32.xlu0 %v2821
        %v2823 = vpop.xlane.xlu0 %2822
        %v2824 = vsel %vm1502, %v2816, -inf
        %2825 = vmax.xlane.f32.xlu0 %v2824
        %v2826 = vpop.xlane.xlu0 %2825
        %v2827 = vsel %vm1910, %v2819, -inf
        %2828 = vmax.xlane.f32.xlu0 %v2827
        %v2829 = vpop.xlane.xlu0 %2828
        %v2830 = vsub.f32 %v2813, %v2823
        %v2831 = vsub.f32 %v2816, %v2826
        %v2832 = vsub.f32 %v2819, %v2829
        %v2833 = vmul.f32 %v2830, 1.442695
        %v2834 = vpow.pop %v2833
        %v2835 = vmul.f32 %v2831, 1.442695
        %v2836 = vpow.pop %v2835
        %v2837 = vmul.f32 %v2832, 1.442695
        %v2838 = vpow.pop %v2837
        %v2839 = vsel %vm1502, %v2834, 0.0
        %2840 = vadd.xlane.f32.xlu0 %v2839
        %v2841 = vpop.xlane.xlu0 %2840
        %v2842 = vsel %vm1502, %v2836, 0.0
        %2843 = vadd.xlane.f32.xlu0 %v2842
        %v2844 = vpop.xlane.xlu0 %2843
        %v2845 = vsel %vm1910, %v2838, 0.0
        %2846 = vadd.xlane.f32.xlu0 %v2845
        %v2847 = vpop.xlane.xlu0 %2846
        %v2848 = vrcp.pop %v2841
        %v2849 = vrcp.pop %v2844
        %v2850 = vrcp.pop %v2847
        %v2851 = vmul.f32 %v2834, %v2848
        %v2852 = vmul.f32 %v2836, %v2849
        %v2853 = vmul.f32 %v2838, %v2850
        %2854 = vrot.lane.b32.xlu0 %v2766, 112
        %v2855 = vpop.permute.xlu0 %2854
        %2856 = vrot.lane.b32.xlu0 %v2769, 112
        %v2857 = vpop.permute.xlu0 %2856
        %2858 = vrot.lane.b32.xlu0 %v2772, 112
        %v2859 = vpop.permute.xlu0 %2858
        %v2863 = vsel %vm1502, %v2851, 0
        %v2866 = vsel %vm1502, %v2852, 0
        %v2869 = vsel %vm1502, %v2853, 0
        %v2871 = vsel %vm1512, %v2859, 0
        %2873 = vmatpush.msra.mxu0 0.0
        %2874 = vmatpush.msra.mxu0 0.0
        %2875 = vmatpush.msra.mxu0 0.0
        %2876 = vmatpush.msra.mxu0 0.0
        %2877 = vmatpush.msra.mxu0 0.0
        %2878 = vmatpush.msra.mxu0 0.0
        %2879 = vmatpush.msra.mxu0 0.0
        %2880 = vmatpush.msra.mxu0 0.0
        %2881 = vmatpush.msra.mxu0 0.0
        %2882 = vmatpush.msra.mxu0 0.0
        %2883 = vmatpush.msra.mxu0 0.0
        %2884 = vmatpush.msra.mxu0 0.0
        %2885 = vmatpush.msra.mxu0 0.0
        %2886 = vmatpush.msra.mxu0 %v2871
        %2887 = vmatpush.msra.mxu0 %v2857
        %2888 = vmatpush.msra.mxu0 %v2855
        %2889 = vmatmul.f32.gmra.mxu0 %v2863
        %v2890 = vpop.f32.mrf.mxu0
        %v2891 = vadd.f32 0.0, %v2890
        %2892 = vmatmul.f32.gmra.mxu0 %v2866
        %v2893 = vpop.f32.mrf.mxu0
        %v2894 = vadd.f32 0.0, %v2893
        %2895 = vmatmul.f32.gmra.mxu0 %v2869
        %v2896 = vpop.f32.mrf.mxu0
        %v2897 = vadd.f32 0.0, %v2896
        %2898 = vdwg.mxu0
        %2899 = vst.msk [vmem:[#allocation2] sm:$0xff] %vm1865, %v2891
        %2900 = vst.msk [vmem:[#allocation2 + $0x8] sm:$0xff] %vm1865, %v2894
        %2901 = vst.msk [vmem:[#allocation2 + $0x10] sm:$0x7] %vm1985, %v2897
        %2902 = vrot.lane.b32.xlu0 %v2766, 104
        %v2903 = vpop.permute.xlu0 %2902
        %2904 = vrot.lane.b32.xlu0 %v2769, 104
        %v2905 = vpop.permute.xlu0 %2904
        %2906 = vrot.lane.b32.xlu0 %v2772, 104
        %v2907 = vpop.permute.xlu0 %2906
        %2908 = vrot.lane.b32.xlu0 %v2766, 96
        %v2909 = vpop.permute.xlu0 %2908
        %2910 = vrot.lane.b32.xlu0 %v2769, 96
        %v2911 = vpop.permute.xlu0 %2910
        %2912 = vrot.lane.b32.xlu0 %v2772, 96
        %v2913 = vpop.permute.xlu0 %2912
        %v2914 = vsel %vm1865, %v2903, 0
        %v2916 = vsel %vm1865, %v2905, 0
        %v2918 = vsel %vm1865, %v2907, 0
        %v2920 = vsel %vm1865, %v2909, 0
        %v2922 = vsel %vm1865, %v2911, 0
        %v2924 = vsel %vm1865, %v2913, 0
        %2926 = vmatpush.xpose.msra.mxu0 0.0
        %2927 = vmatpush.xpose.msra.mxu0 0.0
        %2928 = vmatpush.xpose.msra.mxu0 0.0
        %2929 = vmatpush.xpose.msra.mxu0 0.0
        %2930 = vmatpush.xpose.msra.mxu0 0.0
        %2931 = vmatpush.xpose.msra.mxu0 0.0
        %2932 = vmatpush.xpose.msra.mxu0 0.0
        %2933 = vmatpush.xpose.msra.mxu0 0.0
        %2934 = vmatpush.xpose.msra.mxu0 0.0
        %2935 = vmatpush.xpose.msra.mxu0 0.0
        %2936 = vmatpush.xpose.msra.mxu0 0.0
        %2937 = vmatpush.xpose.msra.mxu0 0.0
        %2938 = vmatpush.xpose.msra.mxu0 0.0
        %2939 = vmatpush.xpose.msra.mxu0 %v2924
        %2940 = vmatpush.xpose.msra.mxu0 %v2922
        %2941 = vmatpush.xpose.msra.mxu0 %v2920
        %2942 = vmatmul.f32.gmra.mxu0 %v2914
        %v2943 = vpop.f32.mrf.mxu0
        %v2944 = vadd.f32 0.0, %v2943
        %2945 = vmatmul.f32.gmra.mxu0 %v2916
        %v2946 = vpop.f32.mrf.mxu0
        %v2947 = vadd.f32 0.0, %v2946
        %2948 = vmatmul.f32.gmra.mxu0 %v2918
        %v2949 = vpop.f32.mrf.mxu0
        %v2950 = vadd.f32 0.0, %v2949
        %2951 = vdwg.mxu0
        %v2952 = vsel %vm1502, %v2944, -inf
        %2953 = vmax.xlane.f32.xlu0 %v2952
        %v2954 = vpop.xlane.xlu0 %2953
        %v2955 = vsel %vm1502, %v2947, -inf
        %2956 = vmax.xlane.f32.xlu0 %v2955
        %v2957 = vpop.xlane.xlu0 %2956
        %v2958 = vsel %vm1910, %v2950, -inf
        %2959 = vmax.xlane.f32.xlu0 %v2958
        %v2960 = vpop.xlane.xlu0 %2959
        %v2961 = vsub.f32 %v2944, %v2954
        %v2962 = vsub.f32 %v2947, %v2957
        %v2963 = vsub.f32 %v2950, %v2960
        %v2964 = vmul.f32 %v2961, 1.442695
        %v2965 = vpow.pop %v2964
        %v2966 = vmul.f32 %v2962, 1.442695
        %v2967 = vpow.pop %v2966
        %v2968 = vmul.f32 %v2963, 1.442695
        %v2969 = vpow.pop %v2968
        %v2970 = vsel %vm1502, %v2965, 0.0
        %2971 = vadd.xlane.f32.xlu0 %v2970
        %v2972 = vpop.xlane.xlu0 %2971
        %v2973 = vsel %vm1502, %v2967, 0.0
        %2974 = vadd.xlane.f32.xlu0 %v2973
        %v2975 = vpop.xlane.xlu0 %2974
        %v2976 = vsel %vm1910, %v2969, 0.0
        %2977 = vadd.xlane.f32.xlu0 %v2976
        %v2978 = vpop.xlane.xlu0 %2977
        %v2979 = vrcp.pop %v2972
        %v2980 = vrcp.pop %v2975
        %v2981 = vrcp.pop %v2978
        %v2982 = vmul.f32 %v2965, %v2979
        %v2983 = vmul.f32 %v2967, %v2980
        %v2984 = vmul.f32 %v2969, %v2981
        %2985 = vrot.lane.b32.xlu0 %v2766, 88
        %v2986 = vpop.permute.xlu0 %2985
        %2987 = vrot.lane.b32.xlu0 %v2769, 88
        %v2988 = vpop.permute.xlu0 %2987
        %2989 = vrot.lane.b32.xlu0 %v2772, 88
        %v2990 = vpop.permute.xlu0 %2989
        %v2994 = vsel %vm1502, %v2982, 0
        %v2997 = vsel %vm1502, %v2983, 0
        %v3000 = vsel %vm1502, %v2984, 0
        %v3002 = vsel %vm1512, %v2990, 0
        %3004 = vmatpush.msra.mxu0 0.0
        %3005 = vmatpush.msra.mxu0 0.0
        %3006 = vmatpush.msra.mxu0 0.0
        %3007 = vmatpush.msra.mxu0 0.0
        %3008 = vmatpush.msra.mxu0 0.0
        %3009 = vmatpush.msra.mxu0 0.0
        %3010 = vmatpush.msra.mxu0 0.0
        %3011 = vmatpush.msra.mxu0 0.0
        %3012 = vmatpush.msra.mxu0 0.0
        %3013 = vmatpush.msra.mxu0 0.0
        %3014 = vmatpush.msra.mxu0 0.0
        %3015 = vmatpush.msra.mxu0 0.0
        %3016 = vmatpush.msra.mxu0 0.0
        %3017 = vmatpush.msra.mxu0 %v3002
        %3018 = vmatpush.msra.mxu0 %v2988
        %3019 = vmatpush.msra.mxu0 %v2986
        %3020 = vmatmul.f32.gmra.mxu0 %v2994
        %v3021 = vpop.f32.mrf.mxu0
        %v3022 = vadd.f32 0.0, %v3021
        %3023 = vmatmul.f32.gmra.mxu0 %v2997
        %v3024 = vpop.f32.mrf.mxu0
        %v3025 = vadd.f32 0.0, %v3024
        %3026 = vmatmul.f32.gmra.mxu0 %v3000
        %v3027 = vpop.f32.mrf.mxu0
        %v3028 = vadd.f32 0.0, %v3027
        %3029 = vdwg.mxu0
        %3033 = vrot.lane.b32.xlu0 %v3022, 8
        %v3034 = vpop.permute.xlu0 %3033
        %3035 = vrot.lane.b32.xlu0 %v3025, 8
        %v3036 = vpop.permute.xlu0 %3035
        %3037 = vrot.lane.b32.xlu0 %v3028, 8
        %v3038 = vpop.permute.xlu0 %3037
        %3042 = vst.msk [vmem:[#allocation2] sm:$0xff] %vm2127, %v3034
        %3043 = vst.msk [vmem:[#allocation2 + $0x8] sm:$0xff] %vm2127, %v3036
        %3044 = vst.msk [vmem:[#allocation2 + $0x10] sm:$0x7] %vm2130, %v3038
        %3045 = vrot.lane.b32.xlu0 %v2766, 80
        %v3046 = vpop.permute.xlu0 %3045
        %3047 = vrot.lane.b32.xlu0 %v2769, 80
        %v3048 = vpop.permute.xlu0 %3047
        %3049 = vrot.lane.b32.xlu0 %v2772, 80
        %v3050 = vpop.permute.xlu0 %3049
        %3051 = vrot.lane.b32.xlu0 %v2766, 72
        %v3052 = vpop.permute.xlu0 %3051
        %3053 = vrot.lane.b32.xlu0 %v2769, 72
        %v3054 = vpop.permute.xlu0 %3053
        %3055 = vrot.lane.b32.xlu0 %v2772, 72
        %v3056 = vpop.permute.xlu0 %3055
        %v3057 = vsel %vm1865, %v3046, 0
        %v3059 = vsel %vm1865, %v3048, 0
        %v3061 = vsel %vm1865, %v3050, 0
        %v3063 = vsel %vm1865, %v3052, 0
        %v3065 = vsel %vm1865, %v3054, 0
        %v3067 = vsel %vm1865, %v3056, 0
        %3069 = vmatpush.xpose.msra.mxu0 0.0
        %3070 = vmatpush.xpose.msra.mxu0 0.0
        %3071 = vmatpush.xpose.msra.mxu0 0.0
        %3072 = vmatpush.xpose.msra.mxu0 0.0
        %3073 = vmatpush.xpose.msra.mxu0 0.0
        %3074 = vmatpush.xpose.msra.mxu0 0.0
        %3075 = vmatpush.xpose.msra.mxu0 0.0
        %3076 = vmatpush.xpose.msra.mxu0 0.0
        %3077 = vmatpush.xpose.msra.mxu0 0.0
        %3078 = vmatpush.xpose.msra.mxu0 0.0
        %3079 = vmatpush.xpose.msra.mxu0 0.0
        %3080 = vmatpush.xpose.msra.mxu0 0.0
        %3081 = vmatpush.xpose.msra.mxu0 0.0
        %3082 = vmatpush.xpose.msra.mxu0 %v3067
        %3083 = vmatpush.xpose.msra.mxu0 %v3065
        %3084 = vmatpush.xpose.msra.mxu0 %v3063
        %3085 = vmatmul.f32.gmra.mxu0 %v3057
        %v3086 = vpop.f32.mrf.mxu0
        %v3087 = vadd.f32 0.0, %v3086
        %3088 = vmatmul.f32.gmra.mxu0 %v3059
        %v3089 = vpop.f32.mrf.mxu0
        %v3090 = vadd.f32 0.0, %v3089
        %3091 = vmatmul.f32.gmra.mxu0 %v3061
        %v3092 = vpop.f32.mrf.mxu0
        %v3093 = vadd.f32 0.0, %v3092
        %3094 = vdwg.mxu0
        %v3095 = vsel %vm1502, %v3087, -inf
        %3096 = vmax.xlane.f32.xlu0 %v3095
        %v3097 = vpop.xlane.xlu0 %3096
        %v3098 = vsel %vm1502, %v3090, -inf
        %3099 = vmax.xlane.f32.xlu0 %v3098
        %v3100 = vpop.xlane.xlu0 %3099
        %v3101 = vsel %vm1910, %v3093, -inf
        %3102 = vmax.xlane.f32.xlu0 %v3101
        %v3103 = vpop.xlane.xlu0 %3102
        %v3104 = vsub.f32 %v3087, %v3097
        %v3105 = vsub.f32 %v3090, %v3100
        %v3106 = vsub.f32 %v3093, %v3103
        %v3107 = vmul.f32 %v3104, 1.442695
        %v3108 = vpow.pop %v3107
        %v3109 = vmul.f32 %v3105, 1.442695
        %v3110 = vpow.pop %v3109
        %v3111 = vmul.f32 %v3106, 1.442695
        %v3112 = vpow.pop %v3111
        %v3113 = vsel %vm1502, %v3108, 0.0
        %3114 = vadd.xlane.f32.xlu0 %v3113
        %v3115 = vpop.xlane.xlu0 %3114
        %v3116 = vsel %vm1502, %v3110, 0.0
        %3117 = vadd.xlane.f32.xlu0 %v3116
        %v3118 = vpop.xlane.xlu0 %3117
        %v3119 = vsel %vm1910, %v3112, 0.0
        %3120 = vadd.xlane.f32.xlu0 %v3119
        %v3121 = vpop.xlane.xlu0 %3120
        %v3122 = vrcp.pop %v3115
        %v3123 = vrcp.pop %v3118
        %v3124 = vrcp.pop %v3121
        %v3125 = vmul.f32 %v3108, %v3122
        %v3126 = vmul.f32 %v3110, %v3123
        %v3127 = vmul.f32 %v3112, %v3124
        %3128 = vrot.lane.b32.xlu0 %v2766, 64
        %v3129 = vpop.permute.xlu0 %3128
        %3130 = vrot.lane.b32.xlu0 %v2769, 64
        %v3131 = vpop.permute.xlu0 %3130
        %3132 = vrot.lane.b32.xlu0 %v2772, 64
        %v3133 = vpop.permute.xlu0 %3132
        %v3137 = vsel %vm1502, %v3125, 0
        %v3140 = vsel %vm1502, %v3126, 0
        %v3143 = vsel %vm1502, %v3127, 0
        %v3145 = vsel %vm1512, %v3133, 0
        %3147 = vmatpush.msra.mxu0 0.0
        %3148 = vmatpush.msra.mxu0 0.0
        %3149 = vmatpush.msra.mxu0 0.0
        %3150 = vmatpush.msra.mxu0 0.0
        %3151 = vmatpush.msra.mxu0 0.0
        %3152 = vmatpush.msra.mxu0 0.0
        %3153 = vmatpush.msra.mxu0 0.0
        %3154 = vmatpush.msra.mxu0 0.0
        %3155 = vmatpush.msra.mxu0 0.0
        %3156 = vmatpush.msra.mxu0 0.0
        %3157 = vmatpush.msra.mxu0 0.0
        %3158 = vmatpush.msra.mxu0 0.0
        %3159 = vmatpush.msra.mxu0 0.0
        %3160 = vmatpush.msra.mxu0 %v3145
        %3161 = vmatpush.msra.mxu0 %v3131
        %3162 = vmatpush.msra.mxu0 %v3129
        %3163 = vmatmul.f32.gmra.mxu0 %v3137
        %v3164 = vpop.f32.mrf.mxu0
        %v3165 = vadd.f32 0.0, %v3164
        %3166 = vmatmul.f32.gmra.mxu0 %v3140
        %v3167 = vpop.f32.mrf.mxu0
        %v3168 = vadd.f32 0.0, %v3167
        %3169 = vmatmul.f32.gmra.mxu0 %v3143
        %v3170 = vpop.f32.mrf.mxu0
        %v3171 = vadd.f32 0.0, %v3170
        %3172 = vdwg.mxu0
        %3176 = vrot.lane.b32.xlu0 %v3165, 16
        %v3177 = vpop.permute.xlu0 %3176
        %3178 = vrot.lane.b32.xlu0 %v3168, 16
        %v3179 = vpop.permute.xlu0 %3178
        %3180 = vrot.lane.b32.xlu0 %v3171, 16
        %v3181 = vpop.permute.xlu0 %3180
        %3185 = vst.msk [vmem:[#allocation2] sm:$0xff] %vm2272, %v3177
        %3186 = vst.msk [vmem:[#allocation2 + $0x8] sm:$0xff] %vm2272, %v3179
        %3187 = vst.msk [vmem:[#allocation2 + $0x10] sm:$0x7] %vm2275, %v3181
        %3188 = vrot.lane.b32.xlu0 %v2766, 56
        %v3189 = vpop.permute.xlu0 %3188
        %3190 = vrot.lane.b32.xlu0 %v2769, 56
        %v3191 = vpop.permute.xlu0 %3190
        %3192 = vrot.lane.b32.xlu0 %v2772, 56
        %v3193 = vpop.permute.xlu0 %3192
        %3194 = vrot.lane.b32.xlu0 %v2766, 48
        %v3195 = vpop.permute.xlu0 %3194
        %3196 = vrot.lane.b32.xlu0 %v2769, 48
        %v3197 = vpop.permute.xlu0 %3196
        %3198 = vrot.lane.b32.xlu0 %v2772, 48
        %v3199 = vpop.permute.xlu0 %3198
        %v3200 = vsel %vm1865, %v3189, 0
        %v3202 = vsel %vm1865, %v3191, 0
        %v3204 = vsel %vm1865, %v3193, 0
        %v3206 = vsel %vm1865, %v3195, 0
        %v3208 = vsel %vm1865, %v3197, 0
        %v3210 = vsel %vm1865, %v3199, 0
        %3212 = vmatpush.xpose.msra.mxu0 0.0
        %3213 = vmatpush.xpose.msra.mxu0 0.0
        %3214 = vmatpush.xpose.msra.mxu0 0.0
        %3215 = vmatpush.xpose.msra.mxu0 0.0
        %3216 = vmatpush.xpose.msra.mxu0 0.0
        %3217 = vmatpush.xpose.msra.mxu0 0.0
        %3218 = vmatpush.xpose.msra.mxu0 0.0
        %3219 = vmatpush.xpose.msra.mxu0 0.0
        %3220 = vmatpush.xpose.msra.mxu0 0.0
        %3221 = vmatpush.xpose.msra.mxu0 0.0
        %3222 = vmatpush.xpose.msra.mxu0 0.0
        %3223 = vmatpush.xpose.msra.mxu0 0.0
        %3224 = vmatpush.xpose.msra.mxu0 0.0
        %3225 = vmatpush.xpose.msra.mxu0 %v3210
        %3226 = vmatpush.xpose.msra.mxu0 %v3208
        %3227 = vmatpush.xpose.msra.mxu0 %v3206
        %3228 = vmatmul.f32.gmra.mxu0 %v3200
        %v3229 = vpop.f32.mrf.mxu0
        %v3230 = vadd.f32 0.0, %v3229
        %3231 = vmatmul.f32.gmra.mxu0 %v3202
        %v3232 = vpop.f32.mrf.mxu0
        %v3233 = vadd.f32 0.0, %v3232
        %3234 = vmatmul.f32.gmra.mxu0 %v3204
        %v3235 = vpop.f32.mrf.mxu0
        %v3236 = vadd.f32 0.0, %v3235
        %3237 = vdwg.mxu0
        %v3238 = vsel %vm1502, %v3230, -inf
        %3239 = vmax.xlane.f32.xlu0 %v3238
        %v3240 = vpop.xlane.xlu0 %3239
        %v3241 = vsel %vm1502, %v3233, -inf
        %3242 = vmax.xlane.f32.xlu0 %v3241
        %v3243 = vpop.xlane.xlu0 %3242
        %v3244 = vsel %vm1910, %v3236, -inf
        %3245 = vmax.xlane.f32.xlu0 %v3244
        %v3246 = vpop.xlane.xlu0 %3245
        %v3247 = vsub.f32 %v3230, %v3240
        %v3248 = vsub.f32 %v3233, %v3243
        %v3249 = vsub.f32 %v3236, %v3246
        %v3250 = vmul.f32 %v3247, 1.442695
        %v3251 = vpow.pop %v3250
        %v3252 = vmul.f32 %v3248, 1.442695
        %v3253 = vpow.pop %v3252
        %v3254 = vmul.f32 %v3249, 1.442695
        %v3255 = vpow.pop %v3254
        %v3256 = vsel %vm1502, %v3251, 0.0
        %3257 = vadd.xlane.f32.xlu0 %v3256
        %v3258 = vpop.xlane.xlu0 %3257
        %v3259 = vsel %vm1502, %v3253, 0.0
        %3260 = vadd.xlane.f32.xlu0 %v3259
        %v3261 = vpop.xlane.xlu0 %3260
        %v3262 = vsel %vm1910, %v3255, 0.0
        %3263 = vadd.xlane.f32.xlu0 %v3262
        %v3264 = vpop.xlane.xlu0 %3263
        %v3265 = vrcp.pop %v3258
        %v3266 = vrcp.pop %v3261
        %v3267 = vrcp.pop %v3264
        %v3268 = vmul.f32 %v3251, %v3265
        %v3269 = vmul.f32 %v3253, %v3266
        %v3270 = vmul.f32 %v3255, %v3267
        %3271 = vrot.lane.b32.xlu0 %v2766, 40
        %v3272 = vpop.permute.xlu0 %3271
        %3273 = vrot.lane.b32.xlu0 %v2769, 40
        %v3274 = vpop.permute.xlu0 %3273
        %3275 = vrot.lane.b32.xlu0 %v2772, 40
        %v3276 = vpop.permute.xlu0 %3275
        %v3280 = vsel %vm1502, %v3268, 0
        %v3283 = vsel %vm1502, %v3269, 0
        %v3286 = vsel %vm1502, %v3270, 0
        %v3288 = vsel %vm1512, %v3276, 0
        %3290 = vmatpush.msra.mxu0 0.0
        %3291 = vmatpush.msra.mxu0 0.0
        %3292 = vmatpush.msra.mxu0 0.0
        %3293 = vmatpush.msra.mxu0 0.0
        %3294 = vmatpush.msra.mxu0 0.0
        %3295 = vmatpush.msra.mxu0 0.0
        %3296 = vmatpush.msra.mxu0 0.0
        %3297 = vmatpush.msra.mxu0 0.0
        %3298 = vmatpush.msra.mxu0 0.0
        %3299 = vmatpush.msra.mxu0 0.0
        %3300 = vmatpush.msra.mxu0 0.0
        %3301 = vmatpush.msra.mxu0 0.0
        %3302 = vmatpush.msra.mxu0 0.0
        %3303 = vmatpush.msra.mxu0 %v3288
        %3304 = vmatpush.msra.mxu0 %v3274
        %3305 = vmatpush.msra.mxu0 %v3272
        %3306 = vmatmul.f32.gmra.mxu0 %v3280
        %v3307 = vpop.f32.mrf.mxu0
        %v3308 = vadd.f32 0.0, %v3307
        %3309 = vmatmul.f32.gmra.mxu0 %v3283
        %v3310 = vpop.f32.mrf.mxu0
        %v3311 = vadd.f32 0.0, %v3310
        %3312 = vmatmul.f32.gmra.mxu0 %v3286
        %v3313 = vpop.f32.mrf.mxu0
        %v3314 = vadd.f32 0.0, %v3313
        %3315 = vdwg.mxu0
        %3319 = vrot.lane.b32.xlu0 %v3308, 24
        %v3320 = vpop.permute.xlu0 %3319
        %3321 = vrot.lane.b32.xlu0 %v3311, 24
        %v3322 = vpop.permute.xlu0 %3321
        %3323 = vrot.lane.b32.xlu0 %v3314, 24
        %v3324 = vpop.permute.xlu0 %3323
        %3328 = vst.msk [vmem:[#allocation2] sm:$0xff] %vm2417, %v3320
        %3329 = vst.msk [vmem:[#allocation2 + $0x8] sm:$0xff] %vm2417, %v3322
        %3330 = vst.msk [vmem:[#allocation2 + $0x10] sm:$0x7] %vm2420, %v3324
        %v3331 = vld [vmem:[#allocation2] sm:$0xff]
        %v3332 = vld [vmem:[#allocation2 + $0x8] sm:$0xff]
        %v3333 = vld [vmem:[#allocation2 + $0x10] sm:$0x7]
        %s3334 = scalar_lea.vmem %s4, 32
        %v3335 = vld [vmem:[%s3334] sm:$0xff]
        %v3336 = vld [vmem:[%s3334 + $0x8] sm:$0xff]
        %v3337 = vld [vmem:[%s3334 + $0x10] sm:$0xff]
        %v3338 = vld [vmem:[%s3334 + $0x18] sm:$0xff]
        %v3339 = vperm.slane %v2732, 1
        %v3341 = vsel %vm487, %v3331, 0
        %v3344 = vsel %vm487, %v3332, 0
        %v3347 = vsel %vm487, %v3333, 0
        %3349 = vmatpush.msra.mxu0 0.0
        %3350 = vmatpush.msra.mxu0 0.0
        %3351 = vmatpush.msra.mxu0 0.0
        %3352 = vmatpush.msra.mxu0 0.0
        %3353 = vmatpush.msra.mxu0 0.0
        %3354 = vmatpush.msra.mxu0 0.0
        %3355 = vmatpush.msra.mxu0 0.0
        %3356 = vmatpush.msra.mxu0 0.0
        %3357 = vmatpush.msra.mxu0 0.0
        %3358 = vmatpush.msra.mxu0 0.0
        %3359 = vmatpush.msra.mxu0 0.0
        %3360 = vmatpush.msra.mxu0 0.0
        %3361 = vmatpush.msra.mxu0 %v3338
        %3362 = vmatpush.msra.mxu0 %v3337
        %3363 = vmatpush.msra.mxu0 %v3336
        %3364 = vmatpush.msra.mxu0 %v3335
        %3365 = vmatmul.f32.gmra.mxu0 %v3341
        %v3366 = vpop.f32.mrf.mxu0
        %v3367 = vadd.f32 %v3339, %v3366
        %3368 = vmatmul.f32.gmra.mxu0 %v3344
        %v3369 = vpop.f32.mrf.mxu0
        %v3370 = vadd.f32 %v3339, %v3369
        %3371 = vmatmul.f32.gmra.mxu0 %v3347
        %v3372 = vpop.f32.mrf.mxu0
        %v3373 = vadd.f32 %v3339, %v3372
        %3374 = vdwg.mxu0
        %v3375 = vadd.f32 %v2728, %v3367
        %v3376 = vadd.f32 %v2729, %v3370
        %v3377 = vadd.f32 %v2730, %v3373
        %v3378 = vsel %vm487, %v3375, 0.0
        %3379 = vadd.xlane.f32.xlu0 %v3378
        %v3380 = vpop.xlane.xlu0 %3379
        %v3381 = vsel %vm487, %v3376, 0.0
        %3382 = vadd.xlane.f32.xlu0 %v3381
        %v3383 = vpop.xlane.xlu0 %3382
        %v3384 = vsel %vm1369, %v3377, 0.0
        %3385 = vadd.xlane.f32.xlu0 %v3384
        %v3386 = vpop.xlane.xlu0 %3385
        %v3387 = vmul.f32 %v3380, %v1379
        %v3388 = vmul.f32 %v3383, %v1379
        %v3389 = vmul.f32 %v3386, %v1379
        %v3390 = vsub.f32 %v3375, %v3387
        %v3391 = vsub.f32 %v3376, %v3388
        %v3392 = vsub.f32 %v3377, %v3389
        %v3393 = vmul.f32 %v3390, %v3390
        %v3394 = vmul.f32 %v3391, %v3391
        %v3395 = vmul.f32 %v3392, %v3392
        %v3396 = vsel %vm487, %v3393, 0.0
        %3397 = vadd.xlane.f32.xlu0 %v3396
        %v3398 = vpop.xlane.xlu0 %3397
        %v3399 = vsel %vm487, %v3394, 0.0
        %3400 = vadd.xlane.f32.xlu0 %v3399
        %v3401 = vpop.xlane.xlu0 %3400
        %v3402 = vsel %vm1369, %v3395, 0.0
        %3403 = vadd.xlane.f32.xlu0 %v3402
        %v3404 = vpop.xlane.xlu0 %3403
        %v3405 = vmul.f32 %v3398, %v1379
        %v3406 = vmul.f32 %v3401, %v1379
        %v3407 = vmul.f32 %v3404, %v1379
        %v3408 = vadd.f32 %v3405, 1e-05
        %v3409 = vadd.f32 %v3406, 1e-05
        %v3410 = vadd.f32 %v3407, 1e-05
        %v3411 = vrsqrt.pop %v3408
        %v3412 = vmul.f32 %v3411, %v3408
        %v3413 = vmul.f32 %v3412, %v3411
        %v3414 = vmul.f32 0.5, %v3413
        %v3415 = vsub.f32 1.5, %v3414
        %v3416 = vmul.f32 %v3411, %v3415
        %vm3417 = vweird.f32 %v3408
        %vm3418 = vweird.f32 %v3411
        %vm3419 = vmor %vm3417, %vm3418
        %v3420 = vsel %vm3419, %v3411, %v3416
        %v3421 = vrsqrt.pop %v3409
        %v3422 = vmul.f32 %v3421, %v3409
        %v3423 = vmul.f32 %v3422, %v3421
        %v3424 = vmul.f32 0.5, %v3423
        %v3425 = vsub.f32 1.5, %v3424
        %v3426 = vmul.f32 %v3421, %v3425
        %vm3427 = vweird.f32 %v3409
        %vm3428 = vweird.f32 %v3421
        %vm3429 = vmor %vm3427, %vm3428
        %v3430 = vsel %vm3429, %v3421, %v3426
        %v3431 = vrsqrt.pop %v3410
        %v3432 = vmul.f32 %v3431, %v3410
        %v3433 = vmul.f32 %v3432, %v3431
        %v3434 = vmul.f32 0.5, %v3433
        %v3435 = vsub.f32 1.5, %v3434
        %v3436 = vmul.f32 %v3431, %v3435
        %vm3437 = vweird.f32 %v3410
        %vm3438 = vweird.f32 %v3431
        %vm3439 = vmor %vm3437, %vm3438
        %v3440 = vsel %vm3439, %v3431, %v3436
        %v3441 = vmul.f32 %v3390, %v3420
        %v3442 = vmul.f32 %v3391, %v3430
        %v3443 = vmul.f32 %v3392, %v3440
        %v3444 = vperm.slane %v2732, 2
        %v3445 = vmul.f32 %v3441, %v3444
        %v3446 = vmul.f32 %v3442, %v3444
        %v3447 = vmul.f32 %v3443, %v3444
        %v3448 = vperm.slane %v2732, 3
        %v3449 = vadd.f32 %v3445, %v3448
        %v3450 = vadd.f32 %v3446, %v3448
        %v3451 = vadd.f32 %v3447, %v3448
        %s3452 = scalar_lea.vmem %s5, 32
        %v3453 = vld [vmem:[%s3452] sm:$0xff]
        %v3454 = vld [vmem:[%s3452 + $0x8] sm:$0xff]
        %v3455 = vld [vmem:[%s3452 + $0x10] sm:$0xff]
        %v3456 = vld [vmem:[%s3452 + $0x18] sm:$0xff]
        %v3457 = vperm.slane %v2732, 4
        %v3459 = vsel %vm487, %v3449, 0
        %v3462 = vsel %vm487, %v3450, 0
        %v3465 = vsel %vm487, %v3451, 0
        %3467 = vmatpush.msra.mxu0 0.0
        %3468 = vmatpush.msra.mxu0 0.0
        %3469 = vmatpush.msra.mxu0 0.0
        %3470 = vmatpush.msra.mxu0 0.0
        %3471 = vmatpush.msra.mxu0 0.0
        %3472 = vmatpush.msra.mxu0 0.0
        %3473 = vmatpush.msra.mxu0 0.0
        %3474 = vmatpush.msra.mxu0 0.0
        %3475 = vmatpush.msra.mxu0 0.0
        %3476 = vmatpush.msra.mxu0 0.0
        %3477 = vmatpush.msra.mxu0 0.0
        %3478 = vmatpush.msra.mxu0 0.0
        %3479 = vmatpush.msra.mxu0 %v3456
        %3480 = vmatpush.msra.mxu0 %v3455
        %3481 = vmatpush.msra.mxu0 %v3454
        %3482 = vmatpush.msra.mxu0 %v3453
        %3483 = vmatmul.f32.gmra.mxu0 %v3459
        %v3484 = vpop.f32.mrf.mxu0
        %v3485 = vadd.f32 %v3457, %v3484
        %3486 = vmatmul.f32.gmra.mxu0 %v3462
        %v3487 = vpop.f32.mrf.mxu0
        %v3488 = vadd.f32 %v3457, %v3487
        %3489 = vmatmul.f32.gmra.mxu0 %v3465
        %v3490 = vpop.f32.mrf.mxu0
        %v3491 = vadd.f32 %v3457, %v3490
        %3492 = vdwg.mxu0
        %v3493 = vmul.f32 %v3485, 0.5
        %v3494 = vmul.f32 %v3488, 0.5
        %v3495 = vmul.f32 %v3491, 0.5
        %v3496 = vmul.f32 %v3485, 0.044715
        %v3497 = vmul.f32 %v3488, 0.044715
        %v3498 = vmul.f32 %v3491, 0.044715
        %v3499 = vmul.f32 %v3496, %v3485
        %v3500 = vmul.f32 %v3497, %v3488
        %v3501 = vmul.f32 %v3498, %v3491
        %v3502 = vmul.f32 %v3499, %v3485
        %v3503 = vmul.f32 %v3500, %v3488
        %v3504 = vmul.f32 %v3501, %v3491
        %v3505 = vadd.f32 %v3485, %v3502
        %v3506 = vadd.f32 %v3488, %v3503
        %v3507 = vadd.f32 %v3491, %v3504
        %v3508 = vmul.f32 %v3505, 0.7978846
        %v3509 = vmul.f32 %v3506, 0.7978846
        %v3510 = vmul.f32 %v3507, 0.7978846
        %v3511 = vtanh.pop %v3508
        %v3512 = vtanh.pop %v3509
        %v3513 = vtanh.pop %v3510
        %v3514 = vadd.f32 %v3511, 1.0
        %v3515 = vadd.f32 %v3512, 1.0
        %v3516 = vadd.f32 %v3513, 1.0
        %v3517 = vmul.f32 %v3493, %v3514
        %v3518 = vmul.f32 %v3494, %v3515
        %v3519 = vmul.f32 %v3495, %v3516
        %s3520 = scalar_lea.vmem %s6, 64
        %v3521 = vld [vmem:[%s3520] sm:$0xff]
        %v3522 = vld [vmem:[%s3520 + $0x8] sm:$0xff]
        %v3523 = vld [vmem:[%s3520 + $0x10] sm:$0xff]
        %v3524 = vld [vmem:[%s3520 + $0x18] sm:$0xff]
        %v3525 = vld [vmem:[%s3520 + $0x20] sm:$0xff]
        %v3526 = vld [vmem:[%s3520 + $0x28] sm:$0xff]
        %v3527 = vld [vmem:[%s3520 + $0x30] sm:$0xff]
        %v3528 = vld [vmem:[%s3520 + $0x38] sm:$0xff]
        %v3529 = vperm.slane %v2732, 5
        %v3531 = vsel %vm2618, %v3517, 0
        %v3534 = vsel %vm2618, %v3518, 0
        %v3537 = vsel %vm2618, %v3519, 0
        %3539 = vmatpush.msra.mxu0 0.0
        %3540 = vmatpush.msra.mxu0 0.0
        %3541 = vmatpush.msra.mxu0 0.0
        %3542 = vmatpush.msra.mxu0 0.0
        %3543 = vmatpush.msra.mxu0 0.0
        %3544 = vmatpush.msra.mxu0 0.0
        %3545 = vmatpush.msra.mxu0 0.0
        %3546 = vmatpush.msra.mxu0 0.0
        %3547 = vmatpush.msra.mxu0 %v3528
        %3548 = vmatpush.msra.mxu0 %v3527
        %3549 = vmatpush.msra.mxu0 %v3526
        %3550 = vmatpush.msra.mxu0 %v3525
        %3551 = vmatpush.msra.mxu0 %v3524
        %3552 = vmatpush.msra.mxu0 %v3523
        %3553 = vmatpush.msra.mxu0 %v3522
        %3554 = vmatpush.msra.mxu0 %v3521
        %3555 = vmatmul.f32.gmra.mxu0 %v3531
        %v3556 = vpop.f32.mrf.mxu0
        %v3557 = vadd.f32 %v3529, %v3556
        %3558 = vmatmul.f32.gmra.mxu0 %v3534
        %v3559 = vpop.f32.mrf.mxu0
        %v3560 = vadd.f32 %v3529, %v3559
        %3561 = vmatmul.f32.gmra.mxu0 %v3537
        %v3562 = vpop.f32.mrf.mxu0
        %v3563 = vadd.f32 %v3529, %v3562
        %3564 = vdwg.mxu0
        %v3565 = vadd.f32 %v3449, %v3557
        %v3566 = vadd.f32 %v3450, %v3560
        %v3567 = vadd.f32 %v3451, %v3563
        %v3568 = vsel %vm487, %v3565, 0.0
        %3569 = vadd.xlane.f32.xlu0 %v3568
        %v3570 = vpop.xlane.xlu0 %3569
        %v3571 = vsel %vm487, %v3566, 0.0
        %3572 = vadd.xlane.f32.xlu0 %v3571
        %v3573 = vpop.xlane.xlu0 %3572
        %v3574 = vsel %vm1369, %v3567, 0.0
        %3575 = vadd.xlane.f32.xlu0 %v3574
        %v3576 = vpop.xlane.xlu0 %3575
        %v3577 = vmul.f32 %v3570, %v1379
        %v3578 = vmul.f32 %v3573, %v1379
        %v3579 = vmul.f32 %v3576, %v1379
        %v3580 = vsub.f32 %v3565, %v3577
        %v3581 = vsub.f32 %v3566, %v3578
        %v3582 = vsub.f32 %v3567, %v3579
        %v3583 = vmul.f32 %v3580, %v3580
        %v3584 = vmul.f32 %v3581, %v3581
        %v3585 = vmul.f32 %v3582, %v3582
        %v3586 = vsel %vm487, %v3583, 0.0
        %3587 = vadd.xlane.f32.xlu0 %v3586
        %v3588 = vpop.xlane.xlu0 %3587
        %v3589 = vsel %vm487, %v3584, 0.0
        %3590 = vadd.xlane.f32.xlu0 %v3589
        %v3591 = vpop.xlane.xlu0 %3590
        %v3592 = vsel %vm1369, %v3585, 0.0
        %3593 = vadd.xlane.f32.xlu0 %v3592
        %v3594 = vpop.xlane.xlu0 %3593
        %v3595 = vmul.f32 %v3588, %v1379
        %v3596 = vmul.f32 %v3591, %v1379
        %v3597 = vmul.f32 %v3594, %v1379
        %v3598 = vadd.f32 %v3595, 1e-05
        %v3599 = vadd.f32 %v3596, 1e-05
        %v3600 = vadd.f32 %v3597, 1e-05
        %v3601 = vrsqrt.pop %v3598
        %v3602 = vmul.f32 %v3601, %v3598
        %v3603 = vmul.f32 %v3602, %v3601
        %v3604 = vmul.f32 0.5, %v3603
        %v3605 = vsub.f32 1.5, %v3604
        %v3606 = vmul.f32 %v3601, %v3605
        %vm3607 = vweird.f32 %v3598
        %vm3608 = vweird.f32 %v3601
        %vm3609 = vmor %vm3607, %vm3608
        %v3610 = vsel %vm3609, %v3601, %v3606
        %v3611 = vrsqrt.pop %v3599
        %v3612 = vmul.f32 %v3611, %v3599
        %v3613 = vmul.f32 %v3612, %v3611
        %v3614 = vmul.f32 0.5, %v3613
        %v3615 = vsub.f32 1.5, %v3614
        %v3616 = vmul.f32 %v3611, %v3615
        %vm3617 = vweird.f32 %v3599
        %vm3618 = vweird.f32 %v3611
        %vm3619 = vmor %vm3617, %vm3618
        %v3620 = vsel %vm3619, %v3611, %v3616
        %v3621 = vrsqrt.pop %v3600
        %v3622 = vmul.f32 %v3621, %v3600
        %v3623 = vmul.f32 %v3622, %v3621
        %v3624 = vmul.f32 0.5, %v3623
        %v3625 = vsub.f32 1.5, %v3624
        %v3626 = vmul.f32 %v3621, %v3625
        %vm3627 = vweird.f32 %v3600
        %vm3628 = vweird.f32 %v3621
        %vm3629 = vmor %vm3627, %vm3628
        %v3630 = vsel %vm3629, %v3621, %v3626
        %v3631 = vmul.f32 %v3580, %v3610
        %v3632 = vmul.f32 %v3581, %v3620
        %v3633 = vmul.f32 %v3582, %v3630
        %v3634 = vperm.slane %v2732, 6
        %v3635 = vmul.f32 %v3631, %v3634
        %v3636 = vmul.f32 %v3632, %v3634
        %v3637 = vmul.f32 %v3633, %v3634
        %v3638 = vperm.slane %v2732, 7
        %v3639 = vadd.f32 %v3635, %v3638
        %v3640 = vadd.f32 %v3636, %v3638
        %v3641 = vadd.f32 %v3637, %v3638
        %v3642 = vsel %vm487, %v3639, 0.0
        %v3643 = vsel %vm487, %v3640, 0.0
        %v3644 = vadd.f32 %v3642, %v3643
        %v3645 = vsel %vm1369, %v3641, 0.0
        %v3646 = vadd.f32 %v3644, %v3645
        %v3647 = vrot.slane %v3646, 4
        %v3648 = vadd.f32 %v3646, %v3647
        %v3649 = vrot.slane %v3648, 2
        %v3650 = vadd.f32 %v3648, %v3649
        %v3651 = vrot.slane %v3650, 1
        %v3652 = vadd.f32 %v3650, %v3651
        %v3653 = vrcp.pop 19.0
        %v3654 = vmul.f32 19.0, %v3653
        %v3655 = vsub.f32 1.0, %v3654
        %v3656 = vmul.f32 %v3653, %v3655
        %v3657 = vadd.f32 %v3653, %v3656
        %vm3658 = vweird.f32 %v3653
        %v3659 = vsel %vm3658, %v3653, %v3657
        %v3660 = vmul.f32 %v3652, %v3659
        %v3661 = vld [vmem:[%s1 + $0x150] sm:$0xff]
        %v3662 = vld [vmem:[%s1 + $0x158] sm:$0xff]
        %v3663 = vld [vmem:[%s1 + $0x160] sm:$0xff]
        %v3664 = vld [vmem:[%s1 + $0x168] sm:$0xff]
        %v3665 = vld [vmem:[%s2 + $0x8] sm:$0x1]
        %v3667 = vsel %vm487, %v3660, 0
        %3669 = vmatpush.msra.mxu0 0.0
        %3670 = vmatpush.msra.mxu0 0.0
        %3671 = vmatpush.msra.mxu0 0.0
        %3672 = vmatpush.msra.mxu0 0.0
        %3673 = vmatpush.msra.mxu0 0.0
        %3674 = vmatpush.msra.mxu0 0.0
        %3675 = vmatpush.msra.mxu0 0.0
        %3676 = vmatpush.msra.mxu0 0.0
        %3677 = vmatpush.msra.mxu0 0.0
        %3678 = vmatpush.msra.mxu0 0.0
        %3679 = vmatpush.msra.mxu0 0.0
        %3680 = vmatpush.msra.mxu0 0.0
        %3681 = vmatpush.msra.mxu0 %v3664
        %3682 = vmatpush.msra.mxu0 %v3663
        %3683 = vmatpush.msra.mxu0 %v3662
        %3684 = vmatpush.msra.mxu0 %v3661
        %3685 = vmatmul.f32.gmra.mxu0 %v3667
        %v3686 = vpop.f32.mrf.mxu0
        %v3687 = vadd.f32 %v3665, %v3686
        %3688 = vdwg.mxu0
        %vm3689 = vcmask 32768
        %3690 = vst.msk [vmem:[%s297] sm:$0x1] %vm3689, %v3687
        %s3691 = sand.u32 %s203, 1
        %s3692 = scalar_lea.sflag [#allocation4], %s3691
        %s3693 = sand.u32 %s203, 1
        %s3694 = scalar_lea.vmem [#allocation3], %s3693
        // Predicated region
        $region53: #{hubert_classify.1} parent=51 // pred_check
          %p3695 = pneg %p213
        $region54: #{hubert_classify.1} parent=51 // pred_check_branch
          %3697 = sbr.rel (%p3695) target = $region56
        $region55: #{hubert_classify.1} parent=51 // pred_region
          %3699 = vsyncadd %s3692, 0
          %s3700 = scalar_lea.hbm %s8, %s22
          %s3702 = sshll.u32 %s3694, 4
          %s3703 = int_to_ptr.vmem [resolvable:$true] %s3702
          %s3704 = sshll.u32 %s3700, 4
          %s3705 = int_to_ptr.hbm [resolvable:$true] %s3704
          %3707 = dma.vmem_to_hbm [thread:$0]  %s3703, 16, %s3705, %s3692
        $region56: #{hubert_classify.1} parent=51 // pred_fallthru
          _
      $region52: #{hubert_classify.1} parent=5 // pred_fallthru
        _
      %p3708 = scmp.le.s32.totalorder 2, %s17
      // Predicated region
      $region57: #{hubert_classify.1} parent=5 // pred_check
        %p3709 = pneg %p3708
      $region58: #{hubert_classify.1} parent=5 // pred_check_branch
        %3711 = sbr.rel (%p3709) target = $region60
      $region59: #{hubert_classify.1} parent=5 // pred_region
        %s3712 = ssub.s32 %s17, 2
        // Predicated region
        $region61: #{hubert_classify.1} parent=59 // pred_check
          %p3713 = pneg %p219
        $region62: #{hubert_classify.1} parent=59 // pred_check_branch
          %3715 = sbr.rel (%p3713) target = $region64
        $region63: #{hubert_classify.1} parent=59 // pred_region
          %s3716 = sand.u32 %s204, 1
          %s3717 = scalar_lea.sflag [#allocation4], %s3716
          %s3718 = sand.u32 %s204, 1
          %s3719 = scalar_lea.vmem [#allocation3], %s3718
          %3721 = dma.done %s3717, 16
        $region64: #{hubert_classify.1} parent=59 // pred_fallthru
          _
      $region60: #{hubert_classify.1} parent=5 // pred_fallthru
        _
    $region6: #{hubert_classify.1} parent=1 // loop_footer
      %s21 = sadd.s32 1, %s17
    $region7: #{hubert_classify.1} parent=1 // loop_footer_branch
      %16 = sbr.rel target = $region3
    $region8: #{hubert_classify.1} parent=1 // loop_exit
      _
    %3722 = vsyncpa [#allocation4], 1
    %s3723 = scalar_lea.sflag [#allocation4], 1
    %3724 = vsyncpa %s3723, 1

</llo_original>
